<compile_context>
chip_gen: v7x
topology: tpu7x:2x2x1
jax: 0.10.0
libtpu: 0.0.40
codegen_flags: <defaults>
</compile_context>

<pallas_src>
import functools
import math

import jax
import jax.numpy as jnp
from jax import lax
from jax.experimental import pallas as pl
from jax.experimental.pallas import tpu as pltpu


# ------------------- layer math (setup / reference only) --------------------
# PyTorch layouts: Conv2d weight (Cout, Cin, kh, kw), ConvTranspose2d weight
# (Cin, Cout, kh, kw), activations NCHW.

def conv2d_nchw(x, w, b):
    y = lax.conv_general_dilated(
        x, w, window_strides=(1, 1), padding="SAME",
        dimension_numbers=("NCHW", "OIHW", "NCHW"))
    return y + b[None, :, None, None]


def conv_transpose_2x2_s2(x, w, b):
    # out[b, n, 2h+p, 2w+q] = sum_c x[b, c, h, w] * w[c, n, p, q] + b[n]
    bsz, _, h, wd = x.shape
    n = w.shape[1]
    y = jnp.einsum("bchw,cnpq->bnhpwq", x, w).reshape(bsz, n, 2 * h, 2 * wd)
    return y + b[None, :, None, None]


# ------------------------------ raw parameters -------------------------------

def init_raw_params(key, c_in, n_outputs, n_inter, n_blocks, n_convs,
                    pre_fuse_relu=True):
    params = {"decoder": [], "fuse": []}

    def nxt():
        nonlocal key
        key, sub = jax.random.split(key)
        return sub

    # decoder: (n_blocks+1) blocks of convs, transposed upsample between them
    for i in range(n_blocks + 1):
        for j in range(n_convs):
            ksz = 1 if i == 0 else 3
            cin = c_in if (i == 0 and j == 0) else n_inter
            cout = n_inter if (i < n_blocks or j < n_convs - 1) else n_outputs
            w = 0.1 * jax.random.normal(nxt(), (cout, cin, ksz, ksz), jnp.float32)
            b = 0.05 * jax.random.normal(nxt(), (cout,), jnp.float32)
            relu = pre_fuse_relu or not (i == n_blocks and j == n_convs - 1)
            params["decoder"].append(("conv", w, b, relu))
        if i < n_blocks:
            w = 0.1 * jax.random.normal(nxt(), (n_inter, n_inter, 2, 2), jnp.float32)
            b = 0.05 * jax.random.normal(nxt(), (n_inter,), jnp.float32)
            params["decoder"].append(("convT", w, b, False))
    # fuse block: two 1x1 convs (n_outputs -> n_outputs), each followed by ReLU
    for _ in range(2):
        w = 0.1 * jax.random.normal(nxt(), (n_outputs, n_outputs, 1, 1), jnp.float32)
        b = 0.05 * jax.random.normal(nxt(), (n_outputs,), jnp.float32)
        params["fuse"].append((w, b))
    return params


# --------------------------- weight folding (setup) --------------------------

def _fold_affine(fn, in_shape):
    """Fold an affine map on (C,H,W) tensors into  y_flat = x_flat @ M + bias.

    Flattening is plain NCHW `reshape(-1)` per sample on both sides, so the
    wrapper-side reshapes of feats / output are free (no transpose)."""
    k = math.prod(in_shape)
    basis = jnp.eye(k, dtype=jnp.float32).reshape((k,) + tuple(in_shape))
    bias_img = fn(jnp.zeros((1,) + tuple(in_shape), jnp.float32))
    out_shape = bias_img.shape[1:]
    mat = fn(basis).reshape(k, -1) - bias_img.reshape(1, -1)
    return mat, bias_img.reshape(1, -1), out_shape


def fold_params(raw, c_in):
    """Fold decoder + fuse-block into chains of (matrix, bias_row, relu)
    stages (all f32), composing consecutive affine layers with no ReLU
    between them (transposed upsample -> next block's conv)."""
    shape = (c_in, 1, 1)                       # x[..., None, None]
    dec_stages, pend = [], None
    for kind, w, b, relu in raw["decoder"]:
        fn = (functools.partial(conv2d_nchw, w=w, b=b) if kind == "conv"
              else functools.partial(conv_transpose_2x2_s2, w=w, b=b))
        mat, bias, shape = _fold_affine(fn, shape)
        if pend is not None:
            pm, pb = pend
            bias = pb @ mat + bias
            mat = pm @ mat
        if relu:
            dec_stages.append((mat, bias, True))
            pend = None
        else:
            pend = (mat, bias)
    if pend is not None:
        dec_stages.append((pend[0], pend[1], False))
    dec_out_shape = tuple(int(d) for d in shape)

    fuse_stages = []
    for w, b in raw["fuse"]:
        mat, bias, shape = _fold_affine(
            functools.partial(conv2d_nchw, w=w, b=b), shape)
        fuse_stages.append((mat, bias, True))  # each fuse conv followed by ReLU
    return dec_stages, fuse_stages, dec_out_shape


def pack_for_kernel(dec_stages, fuse_stages, dec_out_shape, c_in,
                    wdtype=jnp.bfloat16):
    """Lane-pad the folded stages, fold biases via a homogeneous column where
    it is free, pack the remaining biases into one f32 buffer, cast weights to
    bf16.  Returns everything the kernel wrapper needs."""
    def padw(n):
        return ((n + 127) // 128) * 128

    mats, bias_rows, dec_meta, fuse_meta = [], [], [], []

    # Input row layout: [x (c_in) | 1 (homogeneous) | zeros ...], width padded
    # to a multiple of 128.
    x_hom = c_in
    x_width = padw(c_in + 1)

    in_real, in_pad, hom = c_in, x_width, x_hom
    n_dec = len(dec_stages)
    for s, (mat, bias, relu) in enumerate(dec_stages):
        kin, kout = mat.shape
        assert kin == in_real
        last = s == n_dec - 1
        out_pad = kout if last else padw(kout)      # last stage: exact fdim
        m = jnp.zeros((in_pad, out_pad), jnp.float32)
        m = m.at[:kin, :kout].set(mat)
        if hom is not None:                          # fold bias: input carries a 1
            m = m.at[hom, :kout].set(bias[0])
            bias_row, bias_w = -1, 0
        else:                                        # bias from the shared buffer
            bias_row, bias_w = len(bias_rows), kout
            bias_rows.append((bias[0], kout))
        new_hom = None
        if (not last) and (hom is not None) and (out_pad > kout):
            m = m.at[hom, kout].set(1.0)             # carry the 1 forward for free
            new_hom = kout
        mats.append(m.astype(wdtype))
        dec_meta.append((bias_row, bias_w, bool(relu)))
        in_real, in_pad, hom = kout, out_pad, new_hom

    for mat, bias, relu in fuse_stages:
        kin, kout = mat.shape
        assert kin == in_real
        bias_row, bias_w = len(bias_rows), kout
        bias_rows.append((bias[0], kout))
        mats.append(mat.astype(wdtype))
        fuse_meta.append((bias_row, bias_w, bool(relu)))
        in_real = kout

    # One lane-dense f32 bias buffer (sublane-padded to 8 rows).
    buf_w = padw(max([w for _, w in bias_rows] + [1]))
    buf_r = max(8, len(bias_rows))
    bias_buf = jnp.zeros((buf_r, buf_w), jnp.float32)
    for r, (b, w) in enumerate(bias_rows):
        bias_buf = bias_buf.at[r, :w].set(b)

    return dict(mats=mats, bias=bias_buf, dec_meta=tuple(dec_meta),
                fuse_meta=tuple(fuse_meta), c_in=c_in, x_width=x_width,
                x_hom=x_hom, dec_out_shape=dec_out_shape, wdtype=wdtype)


# ------------------------------- fused kernel --------------------------------

def _fused_kernel(x_ref, feats_ref, bias_ref, *rest, dec_meta, fuse_meta, wdtype):
    o_ref = rest[-1]
    mrefs = rest[:-1]

    def stage(h, m_ref, meta):
        bias_row, bias_w, relu = meta
        y = jnp.dot(h.astype(wdtype), m_ref[...],
                    preferred_element_type=jnp.float32)
        if bias_row >= 0:                       # bias not folded into the matrix
            y = y + bias_ref[bias_row:bias_row + 1, :bias_w]
        if relu:
            y = jnp.maximum(y, 0.0)
        return y

    h = x_ref[...]
    k = 0
    for meta in dec_meta:                       # decoder convs + upsamples (folded)
        h = stage(h, mrefs[k], meta)
        k += 1
    h = h.astype(jnp.float32) + feats_ref[...]  # fuse_method='add'
    for meta in fuse_meta:                      # fuse block 1x1 convs
        h = stage(h, mrefs[k], meta)
        k += 1
    o_ref[...] = h.astype(o_ref.dtype)


def _pick_row_tile(b):
    # Small / ragged batches: one full-batch block (no padding, grid=(1,)).
    if b <= 128:
        return b
    # Large batches: biggest multiple-of-8 divisor tile in [64, 128] so every
    # MXU push is near-full-height and the grid has >= 2 "parallel" steps for
    # v7x's two TensorCores; never shrink below 64 rows.
    for bm in range(128, 63, -8):
        if b % bm == 0:
            return bm
    return b


def data_injection_forward(packed, x, feats):
    """x: (B, C_in) data vector; feats: (B, n_outputs, H, W) in NCHW."""
    mats, bias_buf = packed["mats"], packed["bias"]
    dec_meta, fuse_meta = packed["dec_meta"], packed["fuse_meta"]
    wdtype = packed["wdtype"]

    bsz, c_in = x.shape
    assert c_in == packed["c_in"]
    n_out, hh, ww = feats.shape[1:]
    if packed["dec_out_shape"] != (n_out, hh, ww):
        # TODO(synk): bilinear resize of data_feats to feats' spatial size.
        raise NotImplementedError("decoder output must match feats spatial size")
    fdim = n_out * hh * ww

    # Lane-padded bf16 input row: [x | 1 | 0...]; the 1 feeds folded bias rows.
    x_width, x_hom = packed["x_width"], packed["x_hom"]
    x_pad = (jnp.zeros((bsz, x_width), wdtype)
             .at[:, :c_in].set(x.astype(wdtype))
             .at[:, x_hom].set(1.0))
    feats_flat = feats.reshape(bsz, fdim)          # free reshape (NCHW order)

    bm = _pick_row_tile(bsz)
    grid = (bsz // bm,)

    flops = 2 * bsz * sum(int(m.shape[0]) * int(m.shape[1]) for m in mats)
    weight_bytes = (sum(int(m.size) * m.dtype.itemsize for m in mats)
                    + int(bias_buf.size) * bias_buf.dtype.itemsize)
    act_bytes = bsz * (x_width * x_pad.dtype.itemsize
                       + 2 * fdim * feats.dtype.itemsize)
    cost = pl.CostEstimate(flops=flops, transcendentals=0,
                           bytes_accessed=int(weight_bytes + act_bytes))

    kernel = functools.partial(_fused_kernel, dec_meta=dec_meta,
                               fuse_meta=fuse_meta, wdtype=wdtype)

    def run(single_buffer_weights):
        # Constant (grid-invariant) operands: single-buffer them so weight
        # VMEM is not doubled for nothing.
        const_kw = ({"pipeline_mode": pl.Buffered(buffer_count=1)}
                    if single_buffer_weights else {})
        in_specs = [
            pl.BlockSpec((bm, x_width), lambda i: (i, 0)),
            pl.BlockSpec((bm, fdim), lambda i: (i, 0)),
            pl.BlockSpec(bias_buf.shape, lambda i: (0, 0), **const_kw),
        ]
        in_specs += [pl.BlockSpec(m.shape, lambda i: (0, 0), **const_kw)
                     for m in mats]
        buf_mult = 1 if single_buffer_weights else 2
        vmem_bytes = (buf_mult * weight_bytes
                      + 4 * bm * (x_width + 2 * fdim) * 4 + (4 << 20))
        vmem_limit = int(min(32 << 20, max(16 << 20, vmem_bytes)))
        return pl.pallas_call(
            kernel,
            out_shape=jax.ShapeDtypeStruct((bsz, fdim), feats.dtype),
            grid=grid,
            in_specs=in_specs,
            out_specs=pl.BlockSpec((bm, fdim), lambda i: (i, 0)),
            compiler_params=pltpu.CompilerParams(
                dimension_semantics=("parallel",),
                vmem_limit_bytes=vmem_limit),
            cost_estimate=cost,
        )(x_pad, feats_flat, bias_buf, *mats)

    try:
        out_flat = run(True)
    except Exception:
        # Fallback for Pallas builds without BlockSpec(pipeline_mode=...):
        # identical kernel, default (double-buffered) constant operands.
        out_flat = run(False)
    return out_flat.reshape(bsz, n_out, hh, ww)    # free reshape back to NCHW


# ----------------------------- pure-JAX reference ----------------------------

def reference_forward(raw, x, feats):
    h = x[:, :, None, None]
    for kind, w, b, relu in raw["decoder"]:
        if kind == "conv":
            h = conv2d_nchw(h, w, b)
            if relu:
                h = jnp.maximum(h, 0.0)
        else:
            h = conv_transpose_2x2_s2(h, w, b)
    y = feats + h                                  # fuse_method='add'
    for w, b in raw["fuse"]:
        y = jnp.maximum(conv2d_nchw(y, w, b), 0.0)
    return y


# ----------------------------------- main -------------------------------------

if __name__ == "__main__":
    key = jax.random.PRNGKey(0)
    B, C_IN = 2, 8
    N_OUTPUTS, N_BLOCKS, N_CONVS = 8, 3, 1
    H = W = 2 ** N_BLOCKS                          # decoder upsamples 1x1 -> 8x8

    k_x, k_f, k_p = jax.random.split(key, 3)
    x = jax.random.normal(k_x, (B, C_IN), jnp.float32)
    feats = jax.random.normal(k_f, (B, N_OUTPUTS, H, W), jnp.float32)

    raw = init_raw_params(k_p, C_IN, N_OUTPUTS, N_OUTPUTS, N_BLOCKS, N_CONVS)
    dec_stages, fuse_stages, dec_out_shape = fold_params(raw, C_IN)
    packed = pack_for_kernel(dec_stages, fuse_stages, dec_out_shape, C_IN,
                             wdtype=jnp.bfloat16)  # one-time weight preprocessing

    out = data_injection_forward(packed, x, feats)
    out = jax.block_until_ready(out)

    assert out.shape == (B, N_OUTPUTS, H, W), out.shape
    assert bool(jnp.all(jnp.isfinite(out)))
    ref = reference_forward(raw, x, feats)
    err = float(jnp.max(jnp.abs(out - ref)))
    # bf16 weights/activations inside the kernel -> loosened tolerance vs the
    # f32 reference (per perf review).
    assert bool(jnp.allclose(out, ref, rtol=3e-2, atol=3e-2)), err
    print("KERNEL_OK")
</pallas_src>

<mosaic_0001>
module attributes {stable_mosaic.version = 11 : i64} {
  func.func @_fused_kernel(%arg0: i32, %arg1: memref<2x128xbf16, #tpu.memory_space<vmem>>, %arg2: memref<2x512xf32, #tpu.memory_space<vmem>>, %arg3: memref<8x512xf32, #tpu.memory_space<vmem>>, %arg4: memref<128x128xbf16, #tpu.memory_space<vmem>>, %arg5: memref<128x128xbf16, #tpu.memory_space<vmem>>, %arg6: memref<128x128xbf16, #tpu.memory_space<vmem>>, %arg7: memref<128x512xbf16, #tpu.memory_space<vmem>>, %arg8: memref<512x512xbf16, #tpu.memory_space<vmem>>, %arg9: memref<512x512xbf16, #tpu.memory_space<vmem>>, %arg10: memref<2x512xf32, #tpu.memory_space<vmem>>) attributes {dimension_semantics = [#tpu.dimension_semantics<parallel>], iteration_bounds = array<i64: 1>, scalar_prefetch = 0 : i64, scratch_operands = 0 : i64, tpu.core_type = #tpu.core_type<tc>, window_params = [{transform_indices = @transform_0, window_bounds = array<i64: 2, 128>}, {transform_indices = @transform_1, window_bounds = array<i64: 2, 512>}, {pipeline_mode = #tpu.pipeline_mode<synchronous>, transform_indices = @transform_2, window_bounds = array<i64: 8, 512>}, {pipeline_mode = #tpu.pipeline_mode<synchronous>, transform_indices = @transform_3, window_bounds = array<i64: 128, 128>}, {pipeline_mode = #tpu.pipeline_mode<synchronous>, transform_indices = @transform_4, window_bounds = array<i64: 128, 128>}, {pipeline_mode = #tpu.pipeline_mode<synchronous>, transform_indices = @transform_5, window_bounds = array<i64: 128, 128>}, {pipeline_mode = #tpu.pipeline_mode<synchronous>, transform_indices = @transform_6, window_bounds = array<i64: 128, 512>}, {pipeline_mode = #tpu.pipeline_mode<synchronous>, transform_indices = @transform_7, window_bounds = array<i64: 512, 512>}, {pipeline_mode = #tpu.pipeline_mode<synchronous>, transform_indices = @transform_8, window_bounds = array<i64: 512, 512>}, {transform_indices = @transform_9, window_bounds = array<i64: 2, 512>}]} {
    %c0 = arith.constant 0 : index
    %c0_0 = arith.constant 0 : index
    %0 = vector.load %arg1[%c0, %c0_0] : memref<2x128xbf16, #tpu.memory_space<vmem>>, vector<2x128xbf16>
    %c0_1 = arith.constant 0 : index
    %c0_2 = arith.constant 0 : index
    %1 = vector.load %arg4[%c0_1, %c0_2] : memref<128x128xbf16, #tpu.memory_space<vmem>>, vector<128x128xbf16>
    %cst = arith.constant dense<0.000000e+00> : vector<2x128xf32>
    %2 = tpu.matmul %0, %1, %cst {dimension_numbers = #tpu.dot_dimension_numbers<[1], [0], [0], [1], [0, 0, 1, 1], [], []>} : vector<2x128xbf16>, vector<128x128xbf16>, vector<2x128xf32> -> vector<2x128xf32>
    %cst_3 = arith.constant 0.000000e+00 : f32
    %3 = vector.broadcast %cst_3 : f32 to vector<2x128xf32>
    %4 = arith.maximumf %2, %3 : vector<2x128xf32>
    %5 = arith.truncf %4 : vector<2x128xf32> to vector<2x128xbf16>
    %c0_4 = arith.constant 0 : index
    %c0_5 = arith.constant 0 : index
    %6 = vector.load %arg5[%c0_4, %c0_5] : memref<128x128xbf16, #tpu.memory_space<vmem>>, vector<128x128xbf16>
    %cst_6 = arith.constant dense<0.000000e+00> : vector<2x128xf32>
    %7 = tpu.matmul %5, %6, %cst_6 {dimension_numbers = #tpu.dot_dimension_numbers<[1], [0], [0], [1], [0, 0, 1, 1], [], []>} : vector<2x128xbf16>, vector<128x128xbf16>, vector<2x128xf32> -> vector<2x128xf32>
    %cst_7 = arith.constant 0.000000e+00 : f32
    %8 = vector.broadcast %cst_7 : f32 to vector<2x128xf32>
    %9 = arith.maximumf %7, %8 : vector<2x128xf32>
    %10 = arith.truncf %9 : vector<2x128xf32> to vector<2x128xbf16>
    %c0_8 = arith.constant 0 : index
    %c0_9 = arith.constant 0 : index
    %11 = vector.load %arg6[%c0_8, %c0_9] : memref<128x128xbf16, #tpu.memory_space<vmem>>, vector<128x128xbf16>
    %cst_10 = arith.constant dense<0.000000e+00> : vector<2x128xf32>
    %12 = tpu.matmul %10, %11, %cst_10 {dimension_numbers = #tpu.dot_dimension_numbers<[1], [0], [0], [1], [0, 0, 1, 1], [], []>} : vector<2x128xbf16>, vector<128x128xbf16>, vector<2x128xf32> -> vector<2x128xf32>
    %cst_11 = arith.constant 0.000000e+00 : f32
    %13 = vector.broadcast %cst_11 : f32 to vector<2x128xf32>
    %14 = arith.maximumf %12, %13 : vector<2x128xf32>
    %15 = arith.truncf %14 : vector<2x128xf32> to vector<2x128xbf16>
    %c0_12 = arith.constant 0 : index
    %c0_13 = arith.constant 0 : index
    %16 = vector.load %arg7[%c0_12, %c0_13] : memref<128x512xbf16, #tpu.memory_space<vmem>>, vector<128x512xbf16>
    %cst_14 = arith.constant dense<0.000000e+00> : vector<2x512xf32>
    %17 = tpu.matmul %15, %16, %cst_14 {dimension_numbers = #tpu.dot_dimension_numbers<[1], [0], [0], [1], [0, 0, 1, 1], [], []>} : vector<2x128xbf16>, vector<128x512xbf16>, vector<2x512xf32> -> vector<2x512xf32>
    %c0_15 = arith.constant 0 : index
    %c0_16 = arith.constant 0 : index
    %18 = vector.load %arg3[%c0_15, %c0_16] : memref<8x512xf32, #tpu.memory_space<vmem>>, vector<1x512xf32>
    %19 = vector.broadcast %18 : vector<1x512xf32> to vector<2x512xf32>
    %20 = arith.addf %17, %19 : vector<2x512xf32>
    %cst_17 = arith.constant 0.000000e+00 : f32
    %21 = vector.broadcast %cst_17 : f32 to vector<2x512xf32>
    %22 = arith.maximumf %20, %21 : vector<2x512xf32>
    %c0_18 = arith.constant 0 : index
    %c0_19 = arith.constant 0 : index
    %23 = vector.load %arg2[%c0_18, %c0_19] : memref<2x512xf32, #tpu.memory_space<vmem>>, vector<2x512xf32>
    %24 = arith.addf %22, %23 : vector<2x512xf32>
    %25 = arith.truncf %24 : vector<2x512xf32> to vector<2x512xbf16>
    %c0_20 = arith.constant 0 : index
    %c0_21 = arith.constant 0 : index
    %26 = vector.load %arg8[%c0_20, %c0_21] : memref<512x512xbf16, #tpu.memory_space<vmem>>, vector<512x512xbf16>
    %cst_22 = arith.constant dense<0.000000e+00> : vector<2x512xf32>
    %27 = tpu.matmul %25, %26, %cst_22 {dimension_numbers = #tpu.dot_dimension_numbers<[1], [0], [0], [1], [0, 0, 1, 1], [], []>} : vector<2x512xbf16>, vector<512x512xbf16>, vector<2x512xf32> -> vector<2x512xf32>
    %c1 = arith.constant 1 : index
    %c0_23 = arith.constant 0 : index
    %28 = vector.load %arg3[%c1, %c0_23] : memref<8x512xf32, #tpu.memory_space<vmem>>, vector<1x512xf32>
    %29 = vector.broadcast %28 : vector<1x512xf32> to vector<2x512xf32>
    %30 = arith.addf %27, %29 : vector<2x512xf32>
    %cst_24 = arith.constant 0.000000e+00 : f32
    %31 = vector.broadcast %cst_24 : f32 to vector<2x512xf32>
    %32 = arith.maximumf %30, %31 : vector<2x512xf32>
    %33 = arith.truncf %32 : vector<2x512xf32> to vector<2x512xbf16>
    %c0_25 = arith.constant 0 : index
    %c0_26 = arith.constant 0 : index
    %34 = vector.load %arg9[%c0_25, %c0_26] : memref<512x512xbf16, #tpu.memory_space<vmem>>, vector<512x512xbf16>
    %cst_27 = arith.constant dense<0.000000e+00> : vector<2x512xf32>
    %35 = tpu.matmul %33, %34, %cst_27 {dimension_numbers = #tpu.dot_dimension_numbers<[1], [0], [0], [1], [0, 0, 1, 1], [], []>} : vector<2x512xbf16>, vector<512x512xbf16>, vector<2x512xf32> -> vector<2x512xf32>
    %c2 = arith.constant 2 : index
    %c0_28 = arith.constant 0 : index
    %36 = vector.load %arg3[%c2, %c0_28] : memref<8x512xf32, #tpu.memory_space<vmem>>, vector<1x512xf32>
    %37 = vector.broadcast %36 : vector<1x512xf32> to vector<2x512xf32>
    %38 = arith.addf %35, %37 : vector<2x512xf32>
    %cst_29 = arith.constant 0.000000e+00 : f32
    %39 = vector.broadcast %cst_29 : f32 to vector<2x512xf32>
    %40 = arith.maximumf %38, %39 : vector<2x512xf32>
    %c0_30 = arith.constant 0 : index
    %c0_31 = arith.constant 0 : index
    %41 = vector.load %arg10[%c0_30, %c0_31] : memref<2x512xf32, #tpu.memory_space<vmem>>, vector<2x512xf32>
    tpu.vector_store %arg10[%c0_30, %c0_31], %40 {strides = array<i32>} : memref<2x512xf32, #tpu.memory_space<vmem>>, vector<2x512xf32>,
    return
  }
  func.func @transform_0(%arg0: i32) -> (i32, i32) {
    %c0_i32 = arith.constant 0 : i32
    %c0_i32_0 = arith.constant 0 : i32
    return %arg0, %c0_i32 : i32, i32
  }
  func.func @transform_1(%arg0: i32) -> (i32, i32) {
    %c0_i32 = arith.constant 0 : i32
    %c0_i32_0 = arith.constant 0 : i32
    return %arg0, %c0_i32 : i32, i32
  }
  func.func @transform_2(%arg0: i32) -> (i32, i32) {
    %c0_i32 = arith.constant 0 : i32
    %c0_i32_0 = arith.constant 0 : i32
    %c0_i32_1 = arith.constant 0 : i32
    return %c0_i32, %c0_i32_0 : i32, i32
  }
  func.func @transform_3(%arg0: i32) -> (i32, i32) {
    %c0_i32 = arith.constant 0 : i32
    %c0_i32_0 = arith.constant 0 : i32
    %c0_i32_1 = arith.constant 0 : i32
    return %c0_i32, %c0_i32_0 : i32, i32
  }
  func.func @transform_4(%arg0: i32) -> (i32, i32) {
    %c0_i32 = arith.constant 0 : i32
    %c0_i32_0 = arith.constant 0 : i32
    %c0_i32_1 = arith.constant 0 : i32
    return %c0_i32, %c0_i32_0 : i32, i32
  }
  func.func @transform_5(%arg0: i32) -> (i32, i32) {
    %c0_i32 = arith.constant 0 : i32
    %c0_i32_0 = arith.constant 0 : i32
    %c0_i32_1 = arith.constant 0 : i32
    return %c0_i32, %c0_i32_0 : i32, i32
  }
  func.func @transform_6(%arg0: i32) -> (i32, i32) {
    %c0_i32 = arith.constant 0 : i32
    %c0_i32_0 = arith.constant 0 : i32
    %c0_i32_1 = arith.constant 0 : i32
    return %c0_i32, %c0_i32_0 : i32, i32
  }
  func.func @transform_7(%arg0: i32) -> (i32, i32) {
    %c0_i32 = arith.constant 0 : i32
    %c0_i32_0 = arith.constant 0 : i32
    %c0_i32_1 = arith.constant 0 : i32
    return %c0_i32, %c0_i32_0 : i32, i32
  }
  func.func @transform_8(%arg0: i32) -> (i32, i32) {
    %c0_i32 = arith.constant 0 : i32
    %c0_i32_0 = arith.constant 0 : i32
    %c0_i32_1 = arith.constant 0 : i32
    return %c0_i32, %c0_i32_0 : i32, i32
  }
  func.func @transform_9(%arg0: i32) -> (i32, i32) {
    %c0_i32 = arith.constant 0 : i32
    %c0_i32_0 = arith.constant 0 : i32
    return %arg0, %c0_i32 : i32, i32
  }
}

module attributes {stable_mosaic.version = 11 : i64} {
  func.func @_fused_kernel(%arg0: i32, %arg1: memref<2x128xbf16, #tpu.memory_space<vmem>>, %arg2: memref<2x512xf32, #tpu.memory_space<vmem>>, %arg3: memref<8x512xf32, #tpu.memory_space<vmem>>, %arg4: memref<128x128xbf16, #tpu.memory_space<vmem>>, %arg5: memref<128x128xbf16, #tpu.memory_space<vmem>>, %arg6: memref<128x128xbf16, #tpu.memory_space<vmem>>, %arg7: memref<128x512xbf16, #tpu.memory_space<vmem>>, %arg8: memref<512x512xbf16, #tpu.memory_space<vmem>>, %arg9: memref<512x512xbf16, #tpu.memory_space<vmem>>, %arg10: memref<2x512xf32, #tpu.memory_space<vmem>>) attributes {dimension_semantics = [#tpu.dimension_semantics<parallel>], iteration_bounds = array<i64: 1>, scalar_prefetch = 0 : i64, scratch_operands = 0 : i64, tpu.core_type = #tpu.core_type<tc>, window_params = [{transform_indices = @transform_0, window_bounds = array<i64: 2, 128>}, {transform_indices = @transform_1, window_bounds = array<i64: 2, 512>}, {pipeline_mode = #tpu.pipeline_mode<synchronous>, transform_indices = @transform_2, window_bounds = array<i64: 8, 512>}, {pipeline_mode = #tpu.pipeline_mode<synchronous>, transform_indices = @transform_3, window_bounds = array<i64: 128, 128>}, {pipeline_mode = #tpu.pipeline_mode<synchronous>, transform_indices = @transform_4, window_bounds = array<i64: 128, 128>}, {pipeline_mode = #tpu.pipeline_mode<synchronous>, transform_indices = @transform_5, window_bounds = array<i64: 128, 128>}, {pipeline_mode = #tpu.pipeline_mode<synchronous>, transform_indices = @transform_6, window_bounds = array<i64: 128, 512>}, {pipeline_mode = #tpu.pipeline_mode<synchronous>, transform_indices = @transform_7, window_bounds = array<i64: 512, 512>}, {pipeline_mode = #tpu.pipeline_mode<synchronous>, transform_indices = @transform_8, window_bounds = array<i64: 512, 512>}, {transform_indices = @transform_9, window_bounds = array<i64: 2, 512>}]} {
    %c0 = arith.constant 0 : index
    %c0_0 = arith.constant 0 : index
    %0 = vector.load %arg1[%c0, %c0_0] : memref<2x128xbf16, #tpu.memory_space<vmem>>, vector<2x128xbf16>
    %c0_1 = arith.constant 0 : index
    %c0_2 = arith.constant 0 : index
    %1 = vector.load %arg4[%c0_1, %c0_2] : memref<128x128xbf16, #tpu.memory_space<vmem>>, vector<128x128xbf16>
    %cst = arith.constant dense<0.000000e+00> : vector<2x128xf32>
    %2 = tpu.matmul %0, %1, %cst {dimension_numbers = #tpu.dot_dimension_numbers<[1], [0], [0], [1], [0, 0, 1, 1], [], []>} : vector<2x128xbf16>, vector<128x128xbf16>, vector<2x128xf32> -> vector<2x128xf32>
    %cst_3 = arith.constant 0.000000e+00 : f32
    %3 = vector.broadcast %cst_3 : f32 to vector<2x128xf32>
    %4 = arith.maximumf %2, %3 : vector<2x128xf32>
    %5 = arith.truncf %4 : vector<2x128xf32> to vector<2x128xbf16>
    %c0_4 = arith.constant 0 : index
    %c0_5 = arith.constant 0 : index
    %6 = vector.load %arg5[%c0_4, %c0_5] : memref<128x128xbf16, #tpu.memory_space<vmem>>, vector<128x128xbf16>
    %cst_6 = arith.constant dense<0.000000e+00> : vector<2x128xf32>
    %7 = tpu.matmul %5, %6, %cst_6 {dimension_numbers = #tpu.dot_dimension_numbers<[1], [0], [0], [1], [0, 0, 1, 1], [], []>} : vector<2x128xbf16>, vector<128x128xbf16>, vector<2x128xf32> -> vector<2x128xf32>
    %cst_7 = arith.constant 0.000000e+00 : f32
    %8 = vector.broadcast %cst_7 : f32 to vector<2x128xf32>
    %9 = arith.maximumf %7, %8 : vector<2x128xf32>
    %10 = arith.truncf %9 : vector<2x128xf32> to vector<2x128xbf16>
    %c0_8 = arith.constant 0 : index
    %c0_9 = arith.constant 0 : index
    %11 = vector.load %arg6[%c0_8, %c0_9] : memref<128x128xbf16, #tpu.memory_space<vmem>>, vector<128x128xbf16>
    %cst_10 = arith.constant dense<0.000000e+00> : vector<2x128xf32>
    %12 = tpu.matmul %10, %11, %cst_10 {dimension_numbers = #tpu.dot_dimension_numbers<[1], [0], [0], [1], [0, 0, 1, 1], [], []>} : vector<2x128xbf16>, vector<128x128xbf16>, vector<2x128xf32> -> vector<2x128xf32>
    %cst_11 = arith.constant 0.000000e+00 : f32
    %13 = vector.broadcast %cst_11 : f32 to vector<2x128xf32>
    %14 = arith.maximumf %12, %13 : vector<2x128xf32>
    %15 = arith.truncf %14 : vector<2x128xf32> to vector<2x128xbf16>
    %c0_12 = arith.constant 0 : index
    %c0_13 = arith.constant 0 : index
    %16 = vector.load %arg7[%c0_12, %c0_13] : memref<128x512xbf16, #tpu.memory_space<vmem>>, vector<128x512xbf16>
    %cst_14 = arith.constant dense<0.000000e+00> : vector<2x512xf32>
    %17 = tpu.matmul %15, %16, %cst_14 {dimension_numbers = #tpu.dot_dimension_numbers<[1], [0], [0], [1], [0, 0, 1, 1], [], []>} : vector<2x128xbf16>, vector<128x512xbf16>, vector<2x512xf32> -> vector<2x512xf32>
    %c0_15 = arith.constant 0 : index
    %c0_16 = arith.constant 0 : index
    %18 = vector.load %arg3[%c0_15, %c0_16] : memref<8x512xf32, #tpu.memory_space<vmem>>, vector<1x512xf32>
    %19 = vector.broadcast %18 : vector<1x512xf32> to vector<2x512xf32>
    %20 = arith.addf %17, %19 : vector<2x512xf32>
    %cst_17 = arith.constant 0.000000e+00 : f32
    %21 = vector.broadcast %cst_17 : f32 to vector<2x512xf32>
    %22 = arith.maximumf %20, %21 : vector<2x512xf32>
    %c0_18 = arith.constant 0 : index
    %c0_19 = arith.constant 0 : index
    %23 = vector.load %arg2[%c0_18, %c0_19] : memref<2x512xf32, #tpu.memory_space<vmem>>, vector<2x512xf32>
    %24 = arith.addf %22, %23 : vector<2x512xf32>
    %25 = arith.truncf %24 : vector<2x512xf32> to vector<2x512xbf16>
    %c0_20 = arith.constant 0 : index
    %c0_21 = arith.constant 0 : index
    %26 = vector.load %arg8[%c0_20, %c0_21] : memref<512x512xbf16, #tpu.memory_space<vmem>>, vector<512x512xbf16>
    %cst_22 = arith.constant dense<0.000000e+00> : vector<2x512xf32>
    %27 = tpu.matmul %25, %26, %cst_22 {dimension_numbers = #tpu.dot_dimension_numbers<[1], [0], [0], [1], [0, 0, 1, 1], [], []>} : vector<2x512xbf16>, vector<512x512xbf16>, vector<2x512xf32> -> vector<2x512xf32>
    %c1 = arith.constant 1 : index
    %c0_23 = arith.constant 0 : index
    %28 = vector.load %arg3[%c1, %c0_23] : memref<8x512xf32, #tpu.memory_space<vmem>>, vector<1x512xf32>
    %29 = vector.broadcast %28 : vector<1x512xf32> to vector<2x512xf32>
    %30 = arith.addf %27, %29 : vector<2x512xf32>
    %cst_24 = arith.constant 0.000000e+00 : f32
    %31 = vector.broadcast %cst_24 : f32 to vector<2x512xf32>
    %32 = arith.maximumf %30, %31 : vector<2x512xf32>
    %33 = arith.truncf %32 : vector<2x512xf32> to vector<2x512xbf16>
    %c0_25 = arith.constant 0 : index
    %c0_26 = arith.constant 0 : index
    %34 = vector.load %arg9[%c0_25, %c0_26] : memref<512x512xbf16, #tpu.memory_space<vmem>>, vector<512x512xbf16>
    %cst_27 = arith.constant dense<0.000000e+00> : vector<2x512xf32>
    %35 = tpu.matmul %33, %34, %cst_27 {dimension_numbers = #tpu.dot_dimension_numbers<[1], [0], [0], [1], [0, 0, 1, 1], [], []>} : vector<2x512xbf16>, vector<512x512xbf16>, vector<2x512xf32> -> vector<2x512xf32>
    %c2 = arith.constant 2 : index
    %c0_28 = arith.constant 0 : index
    %36 = vector.load %arg3[%c2, %c0_28] : memref<8x512xf32, #tpu.memory_space<vmem>>, vector<1x512xf32>
    %37 = vector.broadcast %36 : vector<1x512xf32> to vector<2x512xf32>
    %38 = arith.addf %35, %37 : vector<2x512xf32>
    %cst_29 = arith.constant 0.000000e+00 : f32
    %39 = vector.broadcast %cst_29 : f32 to vector<2x512xf32>
    %40 = arith.maximumf %38, %39 : vector<2x512xf32>
    %c0_30 = arith.constant 0 : index
    %c0_31 = arith.constant 0 : index
    %41 = vector.load %arg10[%c0_30, %c0_31] : memref<2x512xf32, #tpu.memory_space<vmem>>, vector<2x512xf32>
    tpu.vector_store %arg10[%c0_30, %c0_31], %40 {strides = array<i32>} : memref<2x512xf32, #tpu.memory_space<vmem>>, vector<2x512xf32>,
    return
  }
  func.func @transform_0(%arg0: i32) -> (i32, i32) {
    %c0_i32 = arith.constant 0 : i32
    %c0_i32_0 = arith.constant 0 : i32
    return %arg0, %c0_i32 : i32, i32
  }
  func.func @transform_1(%arg0: i32) -> (i32, i32) {
    %c0_i32 = arith.constant 0 : i32
    %c0_i32_0 = arith.constant 0 : i32
    return %arg0, %c0_i32 : i32, i32
  }
  func.func @transform_2(%arg0: i32) -> (i32, i32) {
    %c0_i32 = arith.constant 0 : i32
    %c0_i32_0 = arith.constant 0 : i32
    %c0_i32_1 = arith.constant 0 : i32
    return %c0_i32, %c0_i32_0 : i32, i32
  }
  func.func @transform_3(%arg0: i32) -> (i32, i32) {
    %c0_i32 = arith.constant 0 : i32
    %c0_i32_0 = arith.constant 0 : i32
    %c0_i32_1 = arith.constant 0 : i32
    return %c0_i32, %c0_i32_0 : i32, i32
  }
  func.func @transform_4(%arg0: i32) -> (i32, i32) {
    %c0_i32 = arith.constant 0 : i32
    %c0_i32_0 = arith.constant 0 : i32
    %c0_i32_1 = arith.constant 0 : i32
    return %c0_i32, %c0_i32_0 : i32, i32
  }
  func.func @transform_5(%arg0: i32) -> (i32, i32) {
    %c0_i32 = arith.constant 0 : i32
    %c0_i32_0 = arith.constant 0 : i32
    %c0_i32_1 = arith.constant 0 : i32
    return %c0_i32, %c0_i32_0 : i32, i32
  }
  func.func @transform_6(%arg0: i32) -> (i32, i32) {
    %c0_i32 = arith.constant 0 : i32
    %c0_i32_0 = arith.constant 0 : i32
    %c0_i32_1 = arith.constant 0 : i32
    return %c0_i32, %c0_i32_0 : i32, i32
  }
  func.func @transform_7(%arg0: i32) -> (i32, i32) {
    %c0_i32 = arith.constant 0 : i32
    %c0_i32_0 = arith.constant 0 : i32
    %c0_i32_1 = arith.constant 0 : i32
    return %c0_i32, %c0_i32_0 : i32, i32
  }
  func.func @transform_8(%arg0: i32) -> (i32, i32) {
    %c0_i32 = arith.constant 0 : i32
    %c0_i32_0 = arith.constant 0 : i32
    %c0_i32_1 = arith.constant 0 : i32
    return %c0_i32, %c0_i32_0 : i32, i32
  }
  func.func @transform_9(%arg0: i32) -> (i32, i32) {
    %c0_i32 = arith.constant 0 : i32
    %c0_i32_0 = arith.constant 0 : i32
    return %arg0, %c0_i32 : i32, i32
  }
}

</mosaic_0001>

<llo_original>
// kernel: tpu_custom_call.1
$region0: #{tpu_custom_call.1}
  #allocation0 [shape = 'u32[]', space=smem, size = 0x4, offset = 0x4, fixed_abs, tag = 'smem constant byte address 0x4 - core index']
  #allocation1 [shape = 'u32[144,128]{1,0:T(1,128)}', space=vmem, size = 0x12000, scoped, tag = 'internal scratch']
  %s0 = inlined_call_operand.hbm [shape: bf16[2,128], index: 0, kind: input, shape index: {}]
  %s1 = inlined_call_operand.hbm [shape: f32[2,512], index: 1, kind: input, shape index: {}]
  %s2 = inlined_call_operand.hbm [shape: f32[8,512], index: 2, kind: input, shape index: {}]
  %s3 = inlined_call_operand.hbm [shape: bf16[128,128], index: 3, kind: input, shape index: {}]
  %s4 = inlined_call_operand.hbm [shape: bf16[128,128], index: 4, kind: input, shape index: {}]
  %s5 = inlined_call_operand.hbm [shape: bf16[128,128], index: 5, kind: input, shape index: {}]
  %s6 = inlined_call_operand.hbm [shape: bf16[128,512], index: 6, kind: input, shape index: {}]
  %s7 = inlined_call_operand.hbm [shape: bf16[512,512], index: 7, kind: input, shape index: {}]
  %s8 = inlined_call_operand.hbm [shape: bf16[512,512], index: 8, kind: input, shape index: {}]
  %s9 = inlined_call_operand.hbm [shape: f32[2,512], index: 9, kind: output, shape index: {}]
  %s10 = sld [smem:[#allocation0]]
  $region82: #{tpu_custom_call.1} parent=0
    _
  %s12 = ssub.s32 1, %s10
  %s13 = scalar_select 0, %s12, %s10
  $region1: #{tpu_custom_call.1} parent=0
    #allocation2 [shape = 'u8[512]{0}', space=vmem, size = 0x400, scoped, tag = 'input window, operand 0, single buffered']
    #allocation3 [shape = 's32[1]{0}', space=sflag, size = 0x4, scoped, tag = 'scoped memory for tpu_custom_call.1']
    #allocation4 [shape = 's32[1]{0}', space=sflag, size = 0x4, scoped, tag = 'scoped memory for tpu_custom_call.1']
    #allocation5 [shape = 'u8[4096]{0}', space=vmem, size = 0x1000, scoped, tag = 'input window, operand 1, single buffered']
    #allocation6 [shape = 's32[1]{0}', space=sflag, size = 0x4, scoped, tag = 'scoped memory for tpu_custom_call.1']
    #allocation7 [shape = 'u8[16384]{0}', space=vmem, size = 0x4000, scoped, tag = 'input window, operand 2, single buffered']
    #allocation8 [shape = 'u8[32768]{0}', space=vmem, size = 0x8000, scoped, tag = 'input window, operand 3, single buffered']
    #allocation9 [shape = 's32[1]{0}', space=sflag, size = 0x4, scoped, tag = 'scoped memory for tpu_custom_call.1']
    #allocation10 [shape = 'u8[32768]{0}', space=vmem, size = 0x8000, scoped, tag = 'input window, operand 4, single buffered']
    #allocation11 [shape = 'u8[32768]{0}', space=vmem, size = 0x8000, scoped, tag = 'input window, operand 5, single buffered']
    #allocation12 [shape = 's32[1]{0}', space=sflag, size = 0x4, scoped, tag = 'scoped memory for tpu_custom_call.1']
    #allocation13 [shape = 'u8[131072]{0}', space=vmem, size = 0x20000, scoped, tag = 'input window, operand 6, single buffered']
    #allocation14 [shape = 'u8[524288]{0}', space=vmem, size = 0x80000, scoped, tag = 'input window, operand 7, single buffered']
    #allocation15 [shape = 's32[1]{0}', space=sflag, size = 0x4, scoped, tag = 'scoped memory for tpu_custom_call.1']
    #allocation16 [shape = 'u8[524288]{0}', space=vmem, size = 0x80000, scoped, tag = 'input window, operand 8, single buffered']
    #allocation17 [shape = 'u8[4096]{0}', space=vmem, size = 0x1000, scoped, tag = 'output window, operand 0, single buffered']
    %14 = vsyncpa [#allocation3], 0
    %15 = vsyncpa [#allocation6], 0
    %16 = vsyncpa [#allocation9], 0
    %17 = vsyncpa [#allocation12], 0
    %18 = vsyncpa [#allocation15], 0
    %19 = vsyncpa [#allocation4], 0
    // Predicated region
    $region2: #{tpu_custom_call.1} parent=1 // pred_check
      _
    $region3: #{tpu_custom_call.1} parent=1 // pred_check_branch
      %21 = sbr.rel (0) target = $region5
    $region4: #{tpu_custom_call.1} parent=1 // pred_region
      %s23 = ssub.s32 16, 16
      %24 = vsyncadd [#allocation3], %s23
      %s26 = sshll.u32 [#allocation2], 4
      %s27 = int_to_ptr.vmem [resolvable:$true] %s26
      %29 = dma.hbm_to_vmem [thread:$0]  %s0, 16, %s27, [#allocation3]
    $region5: #{tpu_custom_call.1} parent=1 // pred_fallthru
      _
    // Predicated region
    $region6: #{tpu_custom_call.1} parent=1 // pred_check
      _
    $region7: #{tpu_custom_call.1} parent=1 // pred_check_branch
      %31 = sbr.rel (0) target = $region9
    $region8: #{tpu_custom_call.1} parent=1 // pred_region
      %s33 = ssub.s32 128, 128
      %34 = vsyncadd [#allocation6], %s33
      %s36 = sshll.u32 [#allocation5], 4
      %s37 = int_to_ptr.vmem [resolvable:$true] %s36
      %39 = dma.hbm_to_vmem [thread:$0]  %s1, 128, %s37, [#allocation6]
    $region9: #{tpu_custom_call.1} parent=1 // pred_fallthru
      _
    // Predicated region
    $region10: #{tpu_custom_call.1} parent=1 // pred_check
      _
    $region11: #{tpu_custom_call.1} parent=1 // pred_check_branch
      %41 = sbr.rel (0) target = $region13
    $region12: #{tpu_custom_call.1} parent=1 // pred_region
      %s43 = ssub.s32 512, 512
      %44 = vsyncadd [#allocation6], %s43
      %s46 = sshll.u32 [#allocation7], 4
      %s47 = int_to_ptr.vmem [resolvable:$true] %s46
      %49 = dma.hbm_to_vmem [thread:$0]  %s2, 512, %s47, [#allocation6]
    $region13: #{tpu_custom_call.1} parent=1 // pred_fallthru
      _
    // Predicated region
    $region14: #{tpu_custom_call.1} parent=1 // pred_check
      _
    $region15: #{tpu_custom_call.1} parent=1 // pred_check_branch
      %51 = sbr.rel (0) target = $region17
    $region16: #{tpu_custom_call.1} parent=1 // pred_region
      %s53 = ssub.s32 1024, 1024
      %54 = vsyncadd [#allocation9], %s53
      %s55 = sshll.u32 [#allocation8], 4
      %s56 = int_to_ptr.vmem [resolvable:$true] %s55
      %61 = dma.hbm_to_vmem [thread:$0]  %s3, 1024, %s56, [#allocation9], 64, 64, 4
    $region17: #{tpu_custom_call.1} parent=1 // pred_fallthru
      _
    // Predicated region
    $region18: #{tpu_custom_call.1} parent=1 // pred_check
      _
    $region19: #{tpu_custom_call.1} parent=1 // pred_check_branch
      %63 = sbr.rel (0) target = $region21
    $region20: #{tpu_custom_call.1} parent=1 // pred_region
      %s65 = ssub.s32 1024, 1024
      %66 = vsyncadd [#allocation9], %s65
      %s67 = sshll.u32 [#allocation10], 4
      %s68 = int_to_ptr.vmem [resolvable:$true] %s67
      %73 = dma.hbm_to_vmem [thread:$0]  %s4, 1024, %s68, [#allocation9], 64, 64, 4
    $region21: #{tpu_custom_call.1} parent=1 // pred_fallthru
      _
    // Predicated region
    $region22: #{tpu_custom_call.1} parent=1 // pred_check
      _
    $region23: #{tpu_custom_call.1} parent=1 // pred_check_branch
      %75 = sbr.rel (0) target = $region25
    $region24: #{tpu_custom_call.1} parent=1 // pred_region
      %s77 = ssub.s32 1024, 1024
      %78 = vsyncadd [#allocation12], %s77
      %s79 = sshll.u32 [#allocation11], 4
      %s80 = int_to_ptr.vmem [resolvable:$true] %s79
      %85 = dma.hbm_to_vmem [thread:$0]  %s5, 1024, %s80, [#allocation12], 64, 64, 4
    $region25: #{tpu_custom_call.1} parent=1 // pred_fallthru
      _
    // Predicated region
    $region26: #{tpu_custom_call.1} parent=1 // pred_check
      _
    $region27: #{tpu_custom_call.1} parent=1 // pred_check_branch
      %87 = sbr.rel (0) target = $region29
    $region28: #{tpu_custom_call.1} parent=1 // pred_region
      %s89 = ssub.s32 4096, 4096
      %90 = vsyncadd [#allocation12], %s89
      %s91 = sshll.u32 [#allocation13], 4
      %s92 = int_to_ptr.vmem [resolvable:$true] %s91
      %97 = dma.hbm_to_vmem [thread:$0]  %s6, 4096, %s92, [#allocation12], 256, 256, 16
    $region29: #{tpu_custom_call.1} parent=1 // pred_fallthru
      _
    // Predicated region
    $region30: #{tpu_custom_call.1} parent=1 // pred_check
      _
    $region31: #{tpu_custom_call.1} parent=1 // pred_check_branch
      %99 = sbr.rel (0) target = $region33
    $region32: #{tpu_custom_call.1} parent=1 // pred_region
      %s101 = ssub.s32 16384, 16384
      %102 = vsyncadd [#allocation15], %s101
      %s103 = sshll.u32 [#allocation14], 4
      %s104 = int_to_ptr.vmem [resolvable:$true] %s103
      %109 = dma.hbm_to_vmem [thread:$0]  %s7, 16384, %s104, [#allocation15], 256, 256, 16
    $region33: #{tpu_custom_call.1} parent=1 // pred_fallthru
      _
    // Predicated region
    $region34: #{tpu_custom_call.1} parent=1 // pred_check
      _
    $region35: #{tpu_custom_call.1} parent=1 // pred_check_branch
      %111 = sbr.rel (0) target = $region37
    $region36: #{tpu_custom_call.1} parent=1 // pred_region
      %s113 = ssub.s32 16384, 16384
      %114 = vsyncadd [#allocation15], %s113
      %s115 = sshll.u32 [#allocation16], 4
      %s116 = int_to_ptr.vmem [resolvable:$true] %s115
      %121 = dma.hbm_to_vmem [thread:$0]  %s8, 16384, %s116, [#allocation15], 256, 256, 16
    $region37: #{tpu_custom_call.1} parent=1 // pred_fallthru
      _
    // Predicated region
    $region38: #{tpu_custom_call.1} parent=1 // pred_check
      _
    $region39: #{tpu_custom_call.1} parent=1 // pred_check_branch
      %123 = sbr.rel (0) target = $region41
    $region40: #{tpu_custom_call.1} parent=1 // pred_region
      %124 = dma.done [#allocation3], 16
    $region41: #{tpu_custom_call.1} parent=1 // pred_fallthru
      _
    // Predicated region
    $region42: #{tpu_custom_call.1} parent=1 // pred_check
      _
    $region43: #{tpu_custom_call.1} parent=1 // pred_check_branch
      %126 = sbr.rel (0) target = $region45
    $region44: #{tpu_custom_call.1} parent=1 // pred_region
      %127 = dma.done [#allocation6], 128
    $region45: #{tpu_custom_call.1} parent=1 // pred_fallthru
      _
    // Predicated region
    $region46: #{tpu_custom_call.1} parent=1 // pred_check
      _
    $region47: #{tpu_custom_call.1} parent=1 // pred_check_branch
      %129 = sbr.rel (0) target = $region49
    $region48: #{tpu_custom_call.1} parent=1 // pred_region
      %130 = dma.done [#allocation6], 512
    $region49: #{tpu_custom_call.1} parent=1 // pred_fallthru
      _
    // Predicated region
    $region50: #{tpu_custom_call.1} parent=1 // pred_check
      _
    $region51: #{tpu_custom_call.1} parent=1 // pred_check_branch
      %132 = sbr.rel (0) target = $region53
    $region52: #{tpu_custom_call.1} parent=1 // pred_region
      %133 = dma.done [#allocation9], 1024
    $region53: #{tpu_custom_call.1} parent=1 // pred_fallthru
      _
    // Predicated region
    $region54: #{tpu_custom_call.1} parent=1 // pred_check
      _
    $region55: #{tpu_custom_call.1} parent=1 // pred_check_branch
      %135 = sbr.rel (0) target = $region57
    $region56: #{tpu_custom_call.1} parent=1 // pred_region
      %136 = dma.done [#allocation9], 1024
    $region57: #{tpu_custom_call.1} parent=1 // pred_fallthru
      _
    // Predicated region
    $region58: #{tpu_custom_call.1} parent=1 // pred_check
      _
    $region59: #{tpu_custom_call.1} parent=1 // pred_check_branch
      %138 = sbr.rel (0) target = $region61
    $region60: #{tpu_custom_call.1} parent=1 // pred_region
      %139 = dma.done [#allocation12], 1024
    $region61: #{tpu_custom_call.1} parent=1 // pred_fallthru
      _
    // Predicated region
    $region62: #{tpu_custom_call.1} parent=1 // pred_check
      _
    $region63: #{tpu_custom_call.1} parent=1 // pred_check_branch
      %141 = sbr.rel (0) target = $region65
    $region64: #{tpu_custom_call.1} parent=1 // pred_region
      %142 = dma.done [#allocation12], 4096
    $region65: #{tpu_custom_call.1} parent=1 // pred_fallthru
      _
    // Predicated region
    $region66: #{tpu_custom_call.1} parent=1 // pred_check
      _
    $region67: #{tpu_custom_call.1} parent=1 // pred_check_branch
      %144 = sbr.rel (0) target = $region69
    $region68: #{tpu_custom_call.1} parent=1 // pred_region
      %145 = dma.done [#allocation15], 16384
    $region69: #{tpu_custom_call.1} parent=1 // pred_fallthru
      _
    // Predicated region
    $region70: #{tpu_custom_call.1} parent=1 // pred_check
      _
    $region71: #{tpu_custom_call.1} parent=1 // pred_check_branch
      %147 = sbr.rel (0) target = $region73
    $region72: #{tpu_custom_call.1} parent=1 // pred_region
      %148 = dma.done [#allocation15], 16384
    $region73: #{tpu_custom_call.1} parent=1 // pred_fallthru
      _
    %v150 = vld [vmem:[#allocation2] sm:$0x1]
    %v151 = vld [vmem:[#allocation8] sm:$0xf]
    %v152 = vld [vmem:[#allocation8 + $0x4] sm:$0xf]
    %v153 = vld [vmem:[#allocation8 + $0x8] sm:$0xf]
    %v154 = vld [vmem:[#allocation8 + $0xc] sm:$0xf]
    %v155 = vld [vmem:[#allocation8 + $0x10] sm:$0xf]
    %v156 = vld [vmem:[#allocation8 + $0x14] sm:$0xf]
    %v157 = vld [vmem:[#allocation8 + $0x18] sm:$0xf]
    %v158 = vld [vmem:[#allocation8 + $0x1c] sm:$0xf]
    %v159 = vld [vmem:[#allocation8 + $0x20] sm:$0xf]
    %v160 = vld [vmem:[#allocation8 + $0x24] sm:$0xf]
    %v161 = vld [vmem:[#allocation8 + $0x28] sm:$0xf]
    %v162 = vld [vmem:[#allocation8 + $0x2c] sm:$0xf]
    %v163 = vld [vmem:[#allocation8 + $0x30] sm:$0xf]
    %v164 = vld [vmem:[#allocation8 + $0x34] sm:$0xf]
    %v165 = vld [vmem:[#allocation8 + $0x38] sm:$0xf]
    %v166 = vld [vmem:[#allocation8 + $0x3c] sm:$0xf]
    %v183 = vunpack.c.l.b16 %v151
    %v184 = vunpack.c.l.b16 %v152
    %v185 = vunpack.c.l.b16 %v153
    %v186 = vunpack.c.l.b16 %v154
    %v187 = vunpack.c.l.b16 %v155
    %v188 = vunpack.c.l.b16 %v156
    %v189 = vunpack.c.l.b16 %v157
    %v190 = vunpack.c.l.b16 %v158
    %v191 = vunpack.c.l.b16 %v159
    %v192 = vunpack.c.l.b16 %v160
    %v193 = vunpack.c.l.b16 %v161
    %v194 = vunpack.c.l.b16 %v162
    %v195 = vunpack.c.l.b16 %v163
    %v196 = vunpack.c.l.b16 %v164
    %v197 = vunpack.c.l.b16 %v165
    %v198 = vunpack.c.l.b16 %v166
    %v199 = vpack.c.b16 %v184, %v183
    %v200 = vpack.c.b16 %v186, %v185
    %v201 = vpack.c.b16 %v188, %v187
    %v202 = vpack.c.b16 %v190, %v189
    %v203 = vpack.c.b16 %v192, %v191
    %v204 = vpack.c.b16 %v194, %v193
    %v205 = vpack.c.b16 %v196, %v195
    %v206 = vpack.c.b16 %v198, %v197
    %215 = vmatprep.subr.bf16.mxu0 0
    %216 = vmatpush1.bf16.msra.mxu0 %v199
    %217 = vmatprep.subr.bf16.mxu0 0
    %218 = vmatpush1.bf16.msra.mxu0 %v200
    %219 = vmatprep.subr.bf16.mxu0 0
    %220 = vmatpush1.bf16.msra.mxu0 %v201
    %221 = vmatprep.subr.bf16.mxu0 0
    %222 = vmatpush1.bf16.msra.mxu0 %v202
    %223 = vmatprep.subr.bf16.mxu0 0
    %224 = vmatpush1.bf16.msra.mxu0 %v203
    %225 = vmatprep.subr.bf16.mxu0 0
    %226 = vmatpush1.bf16.msra.mxu0 %v204
    %227 = vmatprep.subr.bf16.mxu0 0
    %228 = vmatpush1.bf16.msra.mxu0 %v205
    %229 = vmatprep.subr.bf16.mxu0 0
    %230 = vmatpush1.bf16.msra.mxu0 %v206
    %231 = vmatprep.subr.bf16.mxu0 0
    %232 = vmatpush1.bf16.msra.mxu0 0
    %233 = vmatprep.subr.bf16.mxu0 0
    %234 = vmatpush1.bf16.msra.mxu0 0
    %235 = vmatprep.subr.bf16.mxu0 0
    %236 = vmatpush1.bf16.msra.mxu0 0
    %237 = vmatprep.subr.bf16.mxu0 0
    %238 = vmatpush1.bf16.msra.mxu0 0
    %239 = vmatprep.subr.bf16.mxu0 0
    %240 = vmatpush1.bf16.msra.mxu0 0
    %241 = vmatprep.subr.bf16.mxu0 0
    %242 = vmatpush1.bf16.msra.mxu0 0
    %243 = vmatprep.subr.bf16.mxu0 0
    %244 = vmatpush1.bf16.msra.mxu0 0
    %245 = vmatprep.subr.bf16.mxu0 0
    %246 = vmatpush1.bf16.msra.mxu0 0
    %247 = vmatprep.mubr.bf16.mxu0 0
    %248 = vmatmul.mubr.bf16.gmra.mrb[0].mxu0 %v150
    %v249 = vpop.f32.mrb[0].mxu0
    %v250 = vadd.f32 0.0, %v249
    %v251 = vpop.f32.mrb[0].mxu0
    %v252 = vpop.f32.mrb[0].mxu0
    %v253 = vpop.f32.mrb[0].mxu0
    %254 = vdwg.mxu0
    %v255 = vmax.f32 %v250, 0.0
    %v256 = vpack.c.bf16 %v255, %v255
    %v257 = vld [vmem:[#allocation10] sm:$0xf]
    %v258 = vld [vmem:[#allocation10 + $0x4] sm:$0xf]
    %v259 = vld [vmem:[#allocation10 + $0x8] sm:$0xf]
    %v260 = vld [vmem:[#allocation10 + $0xc] sm:$0xf]
    %v261 = vld [vmem:[#allocation10 + $0x10] sm:$0xf]
    %v262 = vld [vmem:[#allocation10 + $0x14] sm:$0xf]
    %v263 = vld [vmem:[#allocation10 + $0x18] sm:$0xf]
    %v264 = vld [vmem:[#allocation10 + $0x1c] sm:$0xf]
    %v265 = vld [vmem:[#allocation10 + $0x20] sm:$0xf]
    %v266 = vld [vmem:[#allocation10 + $0x24] sm:$0xf]
    %v267 = vld [vmem:[#allocation10 + $0x28] sm:$0xf]
    %v268 = vld [vmem:[#allocation10 + $0x2c] sm:$0xf]
    %v269 = vld [vmem:[#allocation10 + $0x30] sm:$0xf]
    %v270 = vld [vmem:[#allocation10 + $0x34] sm:$0xf]
    %v271 = vld [vmem:[#allocation10 + $0x38] sm:$0xf]
    %v272 = vld [vmem:[#allocation10 + $0x3c] sm:$0xf]
    %v289 = vunpack.c.l.b16 %v257
    %v290 = vunpack.c.l.b16 %v258
    %v291 = vunpack.c.l.b16 %v259
    %v292 = vunpack.c.l.b16 %v260
    %v293 = vunpack.c.l.b16 %v261
    %v294 = vunpack.c.l.b16 %v262
    %v295 = vunpack.c.l.b16 %v263
    %v296 = vunpack.c.l.b16 %v264
    %v297 = vunpack.c.l.b16 %v265
    %v298 = vunpack.c.l.b16 %v266
    %v299 = vunpack.c.l.b16 %v267
    %v300 = vunpack.c.l.b16 %v268
    %v301 = vunpack.c.l.b16 %v269
    %v302 = vunpack.c.l.b16 %v270
    %v303 = vunpack.c.l.b16 %v271
    %v304 = vunpack.c.l.b16 %v272
    %v305 = vpack.c.b16 %v290, %v289
    %v306 = vpack.c.b16 %v292, %v291
    %v307 = vpack.c.b16 %v294, %v293
    %v308 = vpack.c.b16 %v296, %v295
    %v309 = vpack.c.b16 %v298, %v297
    %v310 = vpack.c.b16 %v300, %v299
    %v311 = vpack.c.b16 %v302, %v301
    %v312 = vpack.c.b16 %v304, %v303
    %321 = vmatprep.subr.bf16.mxu0 0
    %322 = vmatpush1.bf16.msra.mxu0 %v305
    %323 = vmatprep.subr.bf16.mxu0 0
    %324 = vmatpush1.bf16.msra.mxu0 %v306
    %325 = vmatprep.subr.bf16.mxu0 0
    %326 = vmatpush1.bf16.msra.mxu0 %v307
    %327 = vmatprep.subr.bf16.mxu0 0
    %328 = vmatpush1.bf16.msra.mxu0 %v308
    %329 = vmatprep.subr.bf16.mxu0 0
    %330 = vmatpush1.bf16.msra.mxu0 %v309
    %331 = vmatprep.subr.bf16.mxu0 0
    %332 = vmatpush1.bf16.msra.mxu0 %v310
    %333 = vmatprep.subr.bf16.mxu0 0
    %334 = vmatpush1.bf16.msra.mxu0 %v311
    %335 = vmatprep.subr.bf16.mxu0 0
    %336 = vmatpush1.bf16.msra.mxu0 %v312
    %337 = vmatprep.subr.bf16.mxu0 0
    %338 = vmatpush1.bf16.msra.mxu0 0
    %339 = vmatprep.subr.bf16.mxu0 0
    %340 = vmatpush1.bf16.msra.mxu0 0
    %341 = vmatprep.subr.bf16.mxu0 0
    %342 = vmatpush1.bf16.msra.mxu0 0
    %343 = vmatprep.subr.bf16.mxu0 0
    %344 = vmatpush1.bf16.msra.mxu0 0
    %345 = vmatprep.subr.bf16.mxu0 0
    %346 = vmatpush1.bf16.msra.mxu0 0
    %347 = vmatprep.subr.bf16.mxu0 0
    %348 = vmatpush1.bf16.msra.mxu0 0
    %349 = vmatprep.subr.bf16.mxu0 0
    %350 = vmatpush1.bf16.msra.mxu0 0
    %351 = vmatprep.subr.bf16.mxu0 0
    %352 = vmatpush1.bf16.msra.mxu0 0
    %353 = vmatprep.mubr.bf16.mxu0 0
    %354 = vmatmul.mubr.bf16.gmra.mrb[0].mxu0 %v256
    %v355 = vpop.f32.mrb[0].mxu0
    %v356 = vadd.f32 0.0, %v355
    %v357 = vpop.f32.mrb[0].mxu0
    %v358 = vpop.f32.mrb[0].mxu0
    %v359 = vpop.f32.mrb[0].mxu0
    %360 = vdwg.mxu0
    %v361 = vmax.f32 %v356, 0.0
    %v362 = vpack.c.bf16 %v361, %v361
    %v363 = vld [vmem:[#allocation11] sm:$0xf]
    %v364 = vld [vmem:[#allocation11 + $0x4] sm:$0xf]
    %v365 = vld [vmem:[#allocation11 + $0x8] sm:$0xf]
    %v366 = vld [vmem:[#allocation11 + $0xc] sm:$0xf]
    %v367 = vld [vmem:[#allocation11 + $0x10] sm:$0xf]
    %v368 = vld [vmem:[#allocation11 + $0x14] sm:$0xf]
    %v369 = vld [vmem:[#allocation11 + $0x18] sm:$0xf]
    %v370 = vld [vmem:[#allocation11 + $0x1c] sm:$0xf]
    %v371 = vld [vmem:[#allocation11 + $0x20] sm:$0xf]
    %v372 = vld [vmem:[#allocation11 + $0x24] sm:$0xf]
    %v373 = vld [vmem:[#allocation11 + $0x28] sm:$0xf]
    %v374 = vld [vmem:[#allocation11 + $0x2c] sm:$0xf]
    %v375 = vld [vmem:[#allocation11 + $0x30] sm:$0xf]
    %v376 = vld [vmem:[#allocation11 + $0x34] sm:$0xf]
    %v377 = vld [vmem:[#allocation11 + $0x38] sm:$0xf]
    %v378 = vld [vmem:[#allocation11 + $0x3c] sm:$0xf]
    %v395 = vunpack.c.l.b16 %v363
    %v396 = vunpack.c.l.b16 %v364
    %v397 = vunpack.c.l.b16 %v365
    %v398 = vunpack.c.l.b16 %v366
    %v399 = vunpack.c.l.b16 %v367
    %v400 = vunpack.c.l.b16 %v368
    %v401 = vunpack.c.l.b16 %v369
    %v402 = vunpack.c.l.b16 %v370
    %v403 = vunpack.c.l.b16 %v371
    %v404 = vunpack.c.l.b16 %v372
    %v405 = vunpack.c.l.b16 %v373
    %v406 = vunpack.c.l.b16 %v374
    %v407 = vunpack.c.l.b16 %v375
    %v408 = vunpack.c.l.b16 %v376
    %v409 = vunpack.c.l.b16 %v377
    %v410 = vunpack.c.l.b16 %v378
    %v411 = vpack.c.b16 %v396, %v395
    %v412 = vpack.c.b16 %v398, %v397
    %v413 = vpack.c.b16 %v400, %v399
    %v414 = vpack.c.b16 %v402, %v401
    %v415 = vpack.c.b16 %v404, %v403
    %v416 = vpack.c.b16 %v406, %v405
    %v417 = vpack.c.b16 %v408, %v407
    %v418 = vpack.c.b16 %v410, %v409
    %427 = vmatprep.subr.bf16.mxu0 0
    %428 = vmatpush1.bf16.msra.mxu0 %v411
    %429 = vmatprep.subr.bf16.mxu0 0
    %430 = vmatpush1.bf16.msra.mxu0 %v412
    %431 = vmatprep.subr.bf16.mxu0 0
    %432 = vmatpush1.bf16.msra.mxu0 %v413
    %433 = vmatprep.subr.bf16.mxu0 0
    %434 = vmatpush1.bf16.msra.mxu0 %v414
    %435 = vmatprep.subr.bf16.mxu0 0
    %436 = vmatpush1.bf16.msra.mxu0 %v415
    %437 = vmatprep.subr.bf16.mxu0 0
    %438 = vmatpush1.bf16.msra.mxu0 %v416
    %439 = vmatprep.subr.bf16.mxu0 0
    %440 = vmatpush1.bf16.msra.mxu0 %v417
    %441 = vmatprep.subr.bf16.mxu0 0
    %442 = vmatpush1.bf16.msra.mxu0 %v418
    %443 = vmatprep.subr.bf16.mxu0 0
    %444 = vmatpush1.bf16.msra.mxu0 0
    %445 = vmatprep.subr.bf16.mxu0 0
    %446 = vmatpush1.bf16.msra.mxu0 0
    %447 = vmatprep.subr.bf16.mxu0 0
    %448 = vmatpush1.bf16.msra.mxu0 0
    %449 = vmatprep.subr.bf16.mxu0 0
    %450 = vmatpush1.bf16.msra.mxu0 0
    %451 = vmatprep.subr.bf16.mxu0 0
    %452 = vmatpush1.bf16.msra.mxu0 0
    %453 = vmatprep.subr.bf16.mxu0 0
    %454 = vmatpush1.bf16.msra.mxu0 0
    %455 = vmatprep.subr.bf16.mxu0 0
    %456 = vmatpush1.bf16.msra.mxu0 0
    %457 = vmatprep.subr.bf16.mxu0 0
    %458 = vmatpush1.bf16.msra.mxu0 0
    %459 = vmatprep.mubr.bf16.mxu0 0
    %460 = vmatmul.mubr.bf16.gmra.mrb[0].mxu0 %v362
    %v461 = vpop.f32.mrb[0].mxu0
    %v462 = vadd.f32 0.0, %v461
    %v463 = vpop.f32.mrb[0].mxu0
    %v464 = vpop.f32.mrb[0].mxu0
    %v465 = vpop.f32.mrb[0].mxu0
    %466 = vdwg.mxu0
    %v467 = vmax.f32 %v462, 0.0
    %v468 = vpack.c.bf16 %v467, %v467
    %v469 = vld [vmem:[#allocation13] sm:$0xff]
    %v470 = vld [vmem:[#allocation13 + $0x8] sm:$0xff]
    %v471 = vld [vmem:[#allocation13 + $0x10] sm:$0xff]
    %v472 = vld [vmem:[#allocation13 + $0x18] sm:$0xff]
    %v473 = vld [vmem:[#allocation13 + $0x20] sm:$0xff]
    %v474 = vld [vmem:[#allocation13 + $0x28] sm:$0xff]
    %v475 = vld [vmem:[#allocation13 + $0x30] sm:$0xff]
    %v476 = vld [vmem:[#allocation13 + $0x38] sm:$0xff]
    %v477 = vld [vmem:[#allocation13 + $0x40] sm:$0xff]
    %v478 = vld [vmem:[#allocation13 + $0x48] sm:$0xff]
    %v479 = vld [vmem:[#allocation13 + $0x50] sm:$0xff]
    %v480 = vld [vmem:[#allocation13 + $0x58] sm:$0xff]
    %v481 = vld [vmem:[#allocation13 + $0x60] sm:$0xff]
    %v482 = vld [vmem:[#allocation13 + $0x68] sm:$0xff]
    %v483 = vld [vmem:[#allocation13 + $0x70] sm:$0xff]
    %v484 = vld [vmem:[#allocation13 + $0x78] sm:$0xff]
    %v485 = vld [vmem:[#allocation13 + $0x80] sm:$0xff]
    %v486 = vld [vmem:[#allocation13 + $0x88] sm:$0xff]
    %v487 = vld [vmem:[#allocation13 + $0x90] sm:$0xff]
    %v488 = vld [vmem:[#allocation13 + $0x98] sm:$0xff]
    %v489 = vld [vmem:[#allocation13 + $0xa0] sm:$0xff]
    %v490 = vld [vmem:[#allocation13 + $0xa8] sm:$0xff]
    %v491 = vld [vmem:[#allocation13 + $0xb0] sm:$0xff]
    %v492 = vld [vmem:[#allocation13 + $0xb8] sm:$0xff]
    %v493 = vld [vmem:[#allocation13 + $0xc0] sm:$0xff]
    %v494 = vld [vmem:[#allocation13 + $0xc8] sm:$0xff]
    %v495 = vld [vmem:[#allocation13 + $0xd0] sm:$0xff]
    %v496 = vld [vmem:[#allocation13 + $0xd8] sm:$0xff]
    %v497 = vld [vmem:[#allocation13 + $0xe0] sm:$0xff]
    %v498 = vld [vmem:[#allocation13 + $0xe8] sm:$0xff]
    %v499 = vld [vmem:[#allocation13 + $0xf0] sm:$0xff]
    %v500 = vld [vmem:[#allocation13 + $0xf8] sm:$0xff]
    %v501 = vld [vmem:[#allocation7] ss:$8 sm:$0xf]
    %v503 = vlaneseq
    %v504 = vshrl.u32 %v503, 7
    %v505 = vsub.s32 0, %v504
    %v506 = vrot.slane %v501, %v505
    %v507 = vlaneseq
    %v508 = vshrl.u32 %v507, 7
    %v509 = vsub.s32 1, %v508
    %v510 = vrot.slane %v501, %v509
    %v511 = vlaneseq
    %v512 = vshrl.u32 %v511, 7
    %v513 = vsub.s32 2, %v512
    %v514 = vrot.slane %v501, %v513
    %v515 = vlaneseq
    %v516 = vshrl.u32 %v515, 7
    %v517 = vsub.s32 3, %v516
    %v518 = vrot.slane %v501, %v517
    %v555 = vunpack.c.l.b16 %v469
    %v556 = vunpack.c.h.b16 %v469
    %v557 = vunpack.c.l.b16 %v470
    %v558 = vunpack.c.h.b16 %v470
    %v559 = vunpack.c.l.b16 %v471
    %v560 = vunpack.c.h.b16 %v471
    %v561 = vunpack.c.l.b16 %v472
    %v562 = vunpack.c.h.b16 %v472
    %v563 = vunpack.c.l.b16 %v473
    %v564 = vunpack.c.h.b16 %v473
    %v565 = vunpack.c.l.b16 %v474
    %v566 = vunpack.c.h.b16 %v474
    %v567 = vunpack.c.l.b16 %v475
    %v568 = vunpack.c.h.b16 %v475
    %v569 = vunpack.c.l.b16 %v476
    %v570 = vunpack.c.h.b16 %v476
    %v571 = vunpack.c.l.b16 %v477
    %v572 = vunpack.c.h.b16 %v477
    %v573 = vunpack.c.l.b16 %v478
    %v574 = vunpack.c.h.b16 %v478
    %v575 = vunpack.c.l.b16 %v479
    %v576 = vunpack.c.h.b16 %v479
    %v577 = vunpack.c.l.b16 %v480
    %v578 = vunpack.c.h.b16 %v480
    %v579 = vunpack.c.l.b16 %v481
    %v580 = vunpack.c.h.b16 %v481
    %v581 = vunpack.c.l.b16 %v482
    %v582 = vunpack.c.h.b16 %v482
    %v583 = vunpack.c.l.b16 %v483
    %v584 = vunpack.c.h.b16 %v483
    %v585 = vunpack.c.l.b16 %v484
    %v586 = vunpack.c.h.b16 %v484
    %v587 = vunpack.c.l.b16 %v485
    %v588 = vunpack.c.h.b16 %v485
    %v589 = vunpack.c.l.b16 %v486
    %v590 = vunpack.c.h.b16 %v486
    %v591 = vunpack.c.l.b16 %v487
    %v592 = vunpack.c.h.b16 %v487
    %v593 = vunpack.c.l.b16 %v488
    %v594 = vunpack.c.h.b16 %v488
    %v595 = vunpack.c.l.b16 %v489
    %v596 = vunpack.c.h.b16 %v489
    %v597 = vunpack.c.l.b16 %v490
    %v598 = vunpack.c.h.b16 %v490
    %v599 = vunpack.c.l.b16 %v491
    %v600 = vunpack.c.h.b16 %v491
    %v601 = vunpack.c.l.b16 %v492
    %v602 = vunpack.c.h.b16 %v492
    %v603 = vunpack.c.l.b16 %v493
    %v604 = vunpack.c.h.b16 %v493
    %v605 = vunpack.c.l.b16 %v494
    %v606 = vunpack.c.h.b16 %v494
    %v607 = vunpack.c.l.b16 %v495
    %v608 = vunpack.c.h.b16 %v495
    %v609 = vunpack.c.l.b16 %v496
    %v610 = vunpack.c.h.b16 %v496
    %v611 = vunpack.c.l.b16 %v497
    %v612 = vunpack.c.h.b16 %v497
    %v613 = vunpack.c.l.b16 %v498
    %v614 = vunpack.c.h.b16 %v498
    %v615 = vunpack.c.l.b16 %v499
    %v616 = vunpack.c.h.b16 %v499
    %v617 = vunpack.c.l.b16 %v500
    %v618 = vunpack.c.h.b16 %v500
    %v619 = vpack.c.b16 %v559, %v555
    %v620 = vpack.c.b16 %v560, %v556
    %v621 = vpack.c.b16 %v561, %v557
    %v622 = vpack.c.b16 %v562, %v558
    %v623 = vpack.c.b16 %v567, %v563
    %v624 = vpack.c.b16 %v568, %v564
    %v625 = vpack.c.b16 %v569, %v565
    %v626 = vpack.c.b16 %v570, %v566
    %v627 = vpack.c.b16 %v575, %v571
    %v628 = vpack.c.b16 %v576, %v572
    %v629 = vpack.c.b16 %v577, %v573
    %v630 = vpack.c.b16 %v578, %v574
    %v631 = vpack.c.b16 %v583, %v579
    %v632 = vpack.c.b16 %v584, %v580
    %v633 = vpack.c.b16 %v585, %v581
    %v634 = vpack.c.b16 %v586, %v582
    %v635 = vpack.c.b16 %v591, %v587
    %v636 = vpack.c.b16 %v592, %v588
    %v637 = vpack.c.b16 %v593, %v589
    %v638 = vpack.c.b16 %v594, %v590
    %v639 = vpack.c.b16 %v599, %v595
    %v640 = vpack.c.b16 %v600, %v596
    %v641 = vpack.c.b16 %v601, %v597
    %v642 = vpack.c.b16 %v602, %v598
    %v643 = vpack.c.b16 %v607, %v603
    %v644 = vpack.c.b16 %v608, %v604
    %v645 = vpack.c.b16 %v609, %v605
    %v646 = vpack.c.b16 %v610, %v606
    %v647 = vpack.c.b16 %v615, %v611
    %v648 = vpack.c.b16 %v616, %v612
    %v649 = vpack.c.b16 %v617, %v613
    %v650 = vpack.c.b16 %v618, %v614
    %683 = vmatprep.subr.bf16.mxu0 %v620
    %684 = vmatpush1.bf16.msra.mxu0 %v619
    %685 = vmatprep.subr.bf16.mxu0 %v624
    %686 = vmatpush1.bf16.msra.mxu0 %v623
    %687 = vmatprep.subr.bf16.mxu0 %v628
    %688 = vmatpush1.bf16.msra.mxu0 %v627
    %689 = vmatprep.subr.bf16.mxu0 %v632
    %690 = vmatpush1.bf16.msra.mxu0 %v631
    %691 = vmatprep.subr.bf16.mxu0 %v636
    %692 = vmatpush1.bf16.msra.mxu0 %v635
    %693 = vmatprep.subr.bf16.mxu0 %v640
    %694 = vmatpush1.bf16.msra.mxu0 %v639
    %695 = vmatprep.subr.bf16.mxu0 %v644
    %696 = vmatpush1.bf16.msra.mxu0 %v643
    %697 = vmatprep.subr.bf16.mxu0 %v648
    %698 = vmatpush1.bf16.msra.mxu0 %v647
    %699 = vmatprep.subr.bf16.mxu0 0
    %700 = vmatpush1.bf16.msra.mxu0 0
    %701 = vmatprep.subr.bf16.mxu0 0
    %702 = vmatpush1.bf16.msra.mxu0 0
    %703 = vmatprep.subr.bf16.mxu0 0
    %704 = vmatpush1.bf16.msra.mxu0 0
    %705 = vmatprep.subr.bf16.mxu0 0
    %706 = vmatpush1.bf16.msra.mxu0 0
    %707 = vmatprep.subr.bf16.mxu0 0
    %708 = vmatpush1.bf16.msra.mxu0 0
    %709 = vmatprep.subr.bf16.mxu0 0
    %710 = vmatpush1.bf16.msra.mxu0 0
    %711 = vmatprep.subr.bf16.mxu0 0
    %712 = vmatpush1.bf16.msra.mxu0 0
    %713 = vmatprep.subr.bf16.mxu0 0
    %714 = vmatpush1.bf16.msra.mxu0 0
    %715 = vmatprep.mubr.bf16.mxu0 0
    %716 = vmatmul.mubr.bf16.gmra.mrb[0].mxu0 %v468
    %v717 = vpop.f32.mrb[0].mxu0
    %v718 = vadd.f32 %v506, %v717
    %v719 = vpop.f32.mrb[0].mxu0
    %v720 = vadd.f32 %v510, %v719
    %v721 = vpop.f32.mrb[0].mxu0
    %v722 = vpop.f32.mrb[0].mxu0
    %723 = vdwg.mxu0
    %724 = vmatprep.subr.bf16.mxu0 %v622
    %725 = vmatpush1.bf16.msra.mxu0 %v621
    %726 = vmatprep.subr.bf16.mxu0 %v626
    %727 = vmatpush1.bf16.msra.mxu0 %v625
    %728 = vmatprep.subr.bf16.mxu0 %v630
    %729 = vmatpush1.bf16.msra.mxu0 %v629
    %730 = vmatprep.subr.bf16.mxu0 %v634
    %731 = vmatpush1.bf16.msra.mxu0 %v633
    %732 = vmatprep.subr.bf16.mxu0 %v638
    %733 = vmatpush1.bf16.msra.mxu0 %v637
    %734 = vmatprep.subr.bf16.mxu0 %v642
    %735 = vmatpush1.bf16.msra.mxu0 %v641
    %736 = vmatprep.subr.bf16.mxu0 %v646
    %737 = vmatpush1.bf16.msra.mxu0 %v645
    %738 = vmatprep.subr.bf16.mxu0 %v650
    %739 = vmatpush1.bf16.msra.mxu0 %v649
    %740 = vmatprep.subr.bf16.mxu0 0
    %741 = vmatpush1.bf16.msra.mxu0 0
    %742 = vmatprep.subr.bf16.mxu0 0
    %743 = vmatpush1.bf16.msra.mxu0 0
    %744 = vmatprep.subr.bf16.mxu0 0
    %745 = vmatpush1.bf16.msra.mxu0 0
    %746 = vmatprep.subr.bf16.mxu0 0
    %747 = vmatpush1.bf16.msra.mxu0 0
    %748 = vmatprep.subr.bf16.mxu0 0
    %749 = vmatpush1.bf16.msra.mxu0 0
    %750 = vmatprep.subr.bf16.mxu0 0
    %751 = vmatpush1.bf16.msra.mxu0 0
    %752 = vmatprep.subr.bf16.mxu0 0
    %753 = vmatpush1.bf16.msra.mxu0 0
    %754 = vmatprep.subr.bf16.mxu0 0
    %755 = vmatpush1.bf16.msra.mxu0 0
    %756 = vmatprep.mubr.bf16.mxu0 0
    %757 = vmatmul.mubr.bf16.gmra.mrb[0].mxu0 %v468
    %v758 = vpop.f32.mrb[0].mxu0
    %v759 = vadd.f32 %v514, %v758
    %v760 = vpop.f32.mrb[0].mxu0
    %v761 = vadd.f32 %v518, %v760
    %v762 = vpop.f32.mrb[0].mxu0
    %v763 = vpop.f32.mrb[0].mxu0
    %764 = vdwg.mxu0
    %v765 = vmax.f32 %v718, 0.0
    %v766 = vmax.f32 %v720, 0.0
    %v767 = vmax.f32 %v759, 0.0
    %v768 = vmax.f32 %v761, 0.0
    %v769 = vld [vmem:[#allocation5] sm:$0xff]
    %v771 = vcombine.high %v769, %v769
    %v773 = vunpack.c.l.s4 1983009808
    %v774 = vunpack.c.0.s8 %v773
    %v775 = vlaneseq
    %v776 = vshrl.u32 %v775, 7
    %v777 = vsub.s32 %v774, %v776
    %v778 = vrot.slane %v769, %v777
    %v780 = vunpack.c.l.s4 1983009808
    %v781 = vunpack.c.0.s8 %v780
    %v782 = vlaneseq
    %v783 = vshrl.u32 %v782, 7
    %v784 = vsub.s32 %v781, %v783
    %v785 = vrot.slane %v771, %v784
    %v786 = vcombine.high %v778, %v778
    %v787 = vcombine.high %v785, %v785
    %v792 = vadd.f32 %v765, %v778
    %v793 = vadd.f32 %v766, %v786
    %v794 = vadd.f32 %v767, %v785
    %v795 = vadd.f32 %v768, %v787
    %v796 = vpack.c.bf16 %v792, %v792
    %v797 = vpack.c.bf16 %v793, %v793
    %v798 = vpack.c.bf16 %v794, %v794
    %v799 = vpack.c.bf16 %v795, %v795
    %v800 = vld [vmem:[#allocation14] sm:$0xff]
    %v801 = vld [vmem:[#allocation14 + $0x8] sm:$0xff]
    %v802 = vld [vmem:[#allocation14 + $0x10] sm:$0xff]
    %v803 = vld [vmem:[#allocation14 + $0x18] sm:$0xff]
    %v804 = vld [vmem:[#allocation14 + $0x20] sm:$0xff]
    %v805 = vld [vmem:[#allocation14 + $0x28] sm:$0xff]
    %v806 = vld [vmem:[#allocation14 + $0x30] sm:$0xff]
    %v807 = vld [vmem:[#allocation14 + $0x38] sm:$0xff]
    %v808 = vld [vmem:[#allocation14 + $0x40] sm:$0xff]
    %v809 = vld [vmem:[#allocation14 + $0x48] sm:$0xff]
    %v810 = vld [vmem:[#allocation14 + $0x50] sm:$0xff]
    %v811 = vld [vmem:[#allocation14 + $0x58] sm:$0xff]
    %v812 = vld [vmem:[#allocation14 + $0x60] sm:$0xff]
    %v813 = vld [vmem:[#allocation14 + $0x68] sm:$0xff]
    %v814 = vld [vmem:[#allocation14 + $0x70] sm:$0xff]
    %v815 = vld [vmem:[#allocation14 + $0x78] sm:$0xff]
    %v816 = vld [vmem:[#allocation14 + $0x80] sm:$0xff]
    %v817 = vld [vmem:[#allocation14 + $0x88] sm:$0xff]
    %v818 = vld [vmem:[#allocation14 + $0x90] sm:$0xff]
    %v819 = vld [vmem:[#allocation14 + $0x98] sm:$0xff]
    %v820 = vld [vmem:[#allocation14 + $0xa0] sm:$0xff]
    %v821 = vld [vmem:[#allocation14 + $0xa8] sm:$0xff]
    %v822 = vld [vmem:[#allocation14 + $0xb0] sm:$0xff]
    %v823 = vld [vmem:[#allocation14 + $0xb8] sm:$0xff]
    %v824 = vld [vmem:[#allocation14 + $0xc0] sm:$0xff]
    %v825 = vld [vmem:[#allocation14 + $0xc8] sm:$0xff]
    %v826 = vld [vmem:[#allocation14 + $0xd0] sm:$0xff]
    %v827 = vld [vmem:[#allocation14 + $0xd8] sm:$0xff]
    %v828 = vld [vmem:[#allocation14 + $0xe0] sm:$0xff]
    %v829 = vld [vmem:[#allocation14 + $0xe8] sm:$0xff]
    %v830 = vld [vmem:[#allocation14 + $0xf0] sm:$0xff]
    %v831 = vld [vmem:[#allocation14 + $0xf8] sm:$0xff]
    %v832 = vld [vmem:[#allocation14 + $0x100] sm:$0xff]
    %v833 = vld [vmem:[#allocation14 + $0x108] sm:$0xff]
    %v834 = vld [vmem:[#allocation14 + $0x110] sm:$0xff]
    %v835 = vld [vmem:[#allocation14 + $0x118] sm:$0xff]
    %v836 = vld [vmem:[#allocation14 + $0x120] sm:$0xff]
    %v837 = vld [vmem:[#allocation14 + $0x128] sm:$0xff]
    %v838 = vld [vmem:[#allocation14 + $0x130] sm:$0xff]
    %v839 = vld [vmem:[#allocation14 + $0x138] sm:$0xff]
    %v840 = vld [vmem:[#allocation14 + $0x140] sm:$0xff]
    %v841 = vld [vmem:[#allocation14 + $0x148] sm:$0xff]
    %v842 = vld [vmem:[#allocation14 + $0x150] sm:$0xff]
    %v843 = vld [vmem:[#allocation14 + $0x158] sm:$0xff]
    %v844 = vld [vmem:[#allocation14 + $0x160] sm:$0xff]
    %v845 = vld [vmem:[#allocation14 + $0x168] sm:$0xff]
    %v846 = vld [vmem:[#allocation14 + $0x170] sm:$0xff]
    %v847 = vld [vmem:[#allocation14 + $0x178] sm:$0xff]
    %v848 = vld [vmem:[#allocation14 + $0x180] sm:$0xff]
    %v849 = vld [vmem:[#allocation14 + $0x188] sm:$0xff]
    %v850 = vld [vmem:[#allocation14 + $0x190] sm:$0xff]
    %v851 = vld [vmem:[#allocation14 + $0x198] sm:$0xff]
    %v852 = vld [vmem:[#allocation14 + $0x1a0] sm:$0xff]
    %v853 = vld [vmem:[#allocation14 + $0x1a8] sm:$0xff]
    %v854 = vld [vmem:[#allocation14 + $0x1b0] sm:$0xff]
    %v855 = vld [vmem:[#allocation14 + $0x1b8] sm:$0xff]
    %v856 = vld [vmem:[#allocation14 + $0x1c0] sm:$0xff]
    %v857 = vld [vmem:[#allocation14 + $0x1c8] sm:$0xff]
    %v858 = vld [vmem:[#allocation14 + $0x1d0] sm:$0xff]
    %v859 = vld [vmem:[#allocation14 + $0x1d8] sm:$0xff]
    %v860 = vld [vmem:[#allocation14 + $0x1e0] sm:$0xff]
    %v861 = vld [vmem:[#allocation14 + $0x1e8] sm:$0xff]
    %v862 = vld [vmem:[#allocation14 + $0x1f0] sm:$0xff]
    %v863 = vld [vmem:[#allocation14 + $0x1f8] sm:$0xff]
    %v864 = vld [vmem:[#allocation14 + $0x200] sm:$0xff]
    %v865 = vld [vmem:[#allocation14 + $0x208] sm:$0xff]
    %v866 = vld [vmem:[#allocation14 + $0x210] sm:$0xff]
    %v867 = vld [vmem:[#allocation14 + $0x218] sm:$0xff]
    %v868 = vld [vmem:[#allocation14 + $0x220] sm:$0xff]
    %v869 = vld [vmem:[#allocation14 + $0x228] sm:$0xff]
    %v870 = vld [vmem:[#allocation14 + $0x230] sm:$0xff]
    %v871 = vld [vmem:[#allocation14 + $0x238] sm:$0xff]
    %v872 = vld [vmem:[#allocation14 + $0x240] sm:$0xff]
    %v873 = vld [vmem:[#allocation14 + $0x248] sm:$0xff]
    %v874 = vld [vmem:[#allocation14 + $0x250] sm:$0xff]
    %v875 = vld [vmem:[#allocation14 + $0x258] sm:$0xff]
    %v876 = vld [vmem:[#allocation14 + $0x260] sm:$0xff]
    %v877 = vld [vmem:[#allocation14 + $0x268] sm:$0xff]
    %v878 = vld [vmem:[#allocation14 + $0x270] sm:$0xff]
    %v879 = vld [vmem:[#allocation14 + $0x278] sm:$0xff]
    %v880 = vld [vmem:[#allocation14 + $0x280] sm:$0xff]
    %v881 = vld [vmem:[#allocation14 + $0x288] sm:$0xff]
    %v882 = vld [vmem:[#allocation14 + $0x290] sm:$0xff]
    %v883 = vld [vmem:[#allocation14 + $0x298] sm:$0xff]
    %v884 = vld [vmem:[#allocation14 + $0x2a0] sm:$0xff]
    %v885 = vld [vmem:[#allocation14 + $0x2a8] sm:$0xff]
    %v886 = vld [vmem:[#allocation14 + $0x2b0] sm:$0xff]
    %v887 = vld [vmem:[#allocation14 + $0x2b8] sm:$0xff]
    %v888 = vld [vmem:[#allocation14 + $0x2c0] sm:$0xff]
    %v889 = vld [vmem:[#allocation14 + $0x2c8] sm:$0xff]
    %v890 = vld [vmem:[#allocation14 + $0x2d0] sm:$0xff]
    %v891 = vld [vmem:[#allocation14 + $0x2d8] sm:$0xff]
    %v892 = vld [vmem:[#allocation14 + $0x2e0] sm:$0xff]
    %v893 = vld [vmem:[#allocation14 + $0x2e8] sm:$0xff]
    %v894 = vld [vmem:[#allocation14 + $0x2f0] sm:$0xff]
    %v895 = vld [vmem:[#allocation14 + $0x2f8] sm:$0xff]
    %v896 = vld [vmem:[#allocation14 + $0x300] sm:$0xff]
    %v897 = vld [vmem:[#allocation14 + $0x308] sm:$0xff]
    %v898 = vld [vmem:[#allocation14 + $0x310] sm:$0xff]
    %v899 = vld [vmem:[#allocation14 + $0x318] sm:$0xff]
    %v900 = vld [vmem:[#allocation14 + $0x320] sm:$0xff]
    %v901 = vld [vmem:[#allocation14 + $0x328] sm:$0xff]
    %v902 = vld [vmem:[#allocation14 + $0x330] sm:$0xff]
    %v903 = vld [vmem:[#allocation14 + $0x338] sm:$0xff]
    %v904 = vld [vmem:[#allocation14 + $0x340] sm:$0xff]
    %v905 = vld [vmem:[#allocation14 + $0x348] sm:$0xff]
    %v906 = vld [vmem:[#allocation14 + $0x350] sm:$0xff]
    %v907 = vld [vmem:[#allocation14 + $0x358] sm:$0xff]
    %v908 = vld [vmem:[#allocation14 + $0x360] sm:$0xff]
    %v909 = vld [vmem:[#allocation14 + $0x368] sm:$0xff]
    %v910 = vld [vmem:[#allocation14 + $0x370] sm:$0xff]
    %v911 = vld [vmem:[#allocation14 + $0x378] sm:$0xff]
    %v912 = vld [vmem:[#allocation14 + $0x380] sm:$0xff]
    %v913 = vld [vmem:[#allocation14 + $0x388] sm:$0xff]
    %v914 = vld [vmem:[#allocation14 + $0x390] sm:$0xff]
    %v915 = vld [vmem:[#allocation14 + $0x398] sm:$0xff]
    %v916 = vld [vmem:[#allocation14 + $0x3a0] sm:$0xff]
    %v917 = vld [vmem:[#allocation14 + $0x3a8] sm:$0xff]
    %v918 = vld [vmem:[#allocation14 + $0x3b0] sm:$0xff]
    %v919 = vld [vmem:[#allocation14 + $0x3b8] sm:$0xff]
    %v920 = vld [vmem:[#allocation14 + $0x3c0] sm:$0xff]
    %v921 = vld [vmem:[#allocation14 + $0x3c8] sm:$0xff]
    %v922 = vld [vmem:[#allocation14 + $0x3d0] sm:$0xff]
    %v923 = vld [vmem:[#allocation14 + $0x3d8] sm:$0xff]
    %v924 = vld [vmem:[#allocation14 + $0x3e0] sm:$0xff]
    %v925 = vld [vmem:[#allocation14 + $0x3e8] sm:$0xff]
    %v926 = vld [vmem:[#allocation14 + $0x3f0] sm:$0xff]
    %v927 = vld [vmem:[#allocation14 + $0x3f8] sm:$0xff]
    %s928 = scalar_lea.vmem [#allocation7], 1
    %v929 = vld [vmem:[%s928] ss:$8 sm:$0xf]
    %v931 = vlaneseq
    %v932 = vshrl.u32 %v931, 7
    %v933 = vsub.s32 0, %v932
    %v934 = vrot.slane %v929, %v933
    %v935 = vlaneseq
    %v936 = vshrl.u32 %v935, 7
    %v937 = vsub.s32 1, %v936
    %v938 = vrot.slane %v929, %v937
    %v939 = vlaneseq
    %v940 = vshrl.u32 %v939, 7
    %v941 = vsub.s32 2, %v940
    %v942 = vrot.slane %v929, %v941
    %v943 = vlaneseq
    %v944 = vshrl.u32 %v943, 7
    %v945 = vsub.s32 3, %v944
    %v946 = vrot.slane %v929, %v945
    %v1079 = vunpack.c.l.b16 %v800
    %v1080 = vunpack.c.h.b16 %v800
    %v1081 = vunpack.c.l.b16 %v801
    %v1082 = vunpack.c.h.b16 %v801
    %v1083 = vunpack.c.l.b16 %v802
    %v1084 = vunpack.c.h.b16 %v802
    %v1085 = vunpack.c.l.b16 %v803
    %v1086 = vunpack.c.h.b16 %v803
    %v1087 = vunpack.c.l.b16 %v804
    %v1088 = vunpack.c.h.b16 %v804
    %v1089 = vunpack.c.l.b16 %v805
    %v1090 = vunpack.c.h.b16 %v805
    %v1091 = vunpack.c.l.b16 %v806
    %v1092 = vunpack.c.h.b16 %v806
    %v1093 = vunpack.c.l.b16 %v807
    %v1094 = vunpack.c.h.b16 %v807
    %v1095 = vunpack.c.l.b16 %v808
    %v1096 = vunpack.c.h.b16 %v808
    %v1097 = vunpack.c.l.b16 %v809
    %v1098 = vunpack.c.h.b16 %v809
    %v1099 = vunpack.c.l.b16 %v810
    %v1100 = vunpack.c.h.b16 %v810
    %v1101 = vunpack.c.l.b16 %v811
    %v1102 = vunpack.c.h.b16 %v811
    %v1103 = vunpack.c.l.b16 %v812
    %v1104 = vunpack.c.h.b16 %v812
    %v1105 = vunpack.c.l.b16 %v813
    %v1106 = vunpack.c.h.b16 %v813
    %v1107 = vunpack.c.l.b16 %v814
    %v1108 = vunpack.c.h.b16 %v814
    %v1109 = vunpack.c.l.b16 %v815
    %v1110 = vunpack.c.h.b16 %v815
    %v1111 = vunpack.c.l.b16 %v816
    %v1112 = vunpack.c.h.b16 %v816
    %v1113 = vunpack.c.l.b16 %v817
    %v1114 = vunpack.c.h.b16 %v817
    %v1115 = vunpack.c.l.b16 %v818
    %v1116 = vunpack.c.h.b16 %v818
    %v1117 = vunpack.c.l.b16 %v819
    %v1118 = vunpack.c.h.b16 %v819
    %v1119 = vunpack.c.l.b16 %v820
    %v1120 = vunpack.c.h.b16 %v820
    %v1121 = vunpack.c.l.b16 %v821
    %v1122 = vunpack.c.h.b16 %v821
    %v1123 = vunpack.c.l.b16 %v822
    %v1124 = vunpack.c.h.b16 %v822
    %v1125 = vunpack.c.l.b16 %v823
    %v1126 = vunpack.c.h.b16 %v823
    %v1127 = vunpack.c.l.b16 %v824
    %v1128 = vunpack.c.h.b16 %v824
    %v1129 = vunpack.c.l.b16 %v825
    %v1130 = vunpack.c.h.b16 %v825
    %v1131 = vunpack.c.l.b16 %v826
    %v1132 = vunpack.c.h.b16 %v826
    %v1133 = vunpack.c.l.b16 %v827
    %v1134 = vunpack.c.h.b16 %v827
    %v1135 = vunpack.c.l.b16 %v828
    %v1136 = vunpack.c.h.b16 %v828
    %v1137 = vunpack.c.l.b16 %v829
    %v1138 = vunpack.c.h.b16 %v829
    %v1139 = vunpack.c.l.b16 %v830
    %v1140 = vunpack.c.h.b16 %v830
    %v1141 = vunpack.c.l.b16 %v831
    %v1142 = vunpack.c.h.b16 %v831
    %v1143 = vunpack.c.l.b16 %v832
    %v1144 = vunpack.c.h.b16 %v832
    %v1145 = vunpack.c.l.b16 %v833
    %v1146 = vunpack.c.h.b16 %v833
    %v1147 = vunpack.c.l.b16 %v834
    %v1148 = vunpack.c.h.b16 %v834
    %v1149 = vunpack.c.l.b16 %v835
    %v1150 = vunpack.c.h.b16 %v835
    %v1151 = vunpack.c.l.b16 %v836
    %v1152 = vunpack.c.h.b16 %v836
    %v1153 = vunpack.c.l.b16 %v837
    %v1154 = vunpack.c.h.b16 %v837
    %v1155 = vunpack.c.l.b16 %v838
    %v1156 = vunpack.c.h.b16 %v838
    %v1157 = vunpack.c.l.b16 %v839
    %v1158 = vunpack.c.h.b16 %v839
    %v1159 = vunpack.c.l.b16 %v840
    %v1160 = vunpack.c.h.b16 %v840
    %v1161 = vunpack.c.l.b16 %v841
    %v1162 = vunpack.c.h.b16 %v841
    %v1163 = vunpack.c.l.b16 %v842
    %v1164 = vunpack.c.h.b16 %v842
    %v1165 = vunpack.c.l.b16 %v843
    %v1166 = vunpack.c.h.b16 %v843
    %v1167 = vunpack.c.l.b16 %v844
    %v1168 = vunpack.c.h.b16 %v844
    %v1169 = vunpack.c.l.b16 %v845
    %v1170 = vunpack.c.h.b16 %v845
    %v1171 = vunpack.c.l.b16 %v846
    %v1172 = vunpack.c.h.b16 %v846
    %v1173 = vunpack.c.l.b16 %v847
    %v1174 = vunpack.c.h.b16 %v847
    %v1175 = vunpack.c.l.b16 %v848
    %v1176 = vunpack.c.h.b16 %v848
    %v1177 = vunpack.c.l.b16 %v849
    %v1178 = vunpack.c.h.b16 %v849
    %v1179 = vunpack.c.l.b16 %v850
    %v1180 = vunpack.c.h.b16 %v850
    %v1181 = vunpack.c.l.b16 %v851
    %v1182 = vunpack.c.h.b16 %v851
    %v1183 = vunpack.c.l.b16 %v852
    %v1184 = vunpack.c.h.b16 %v852
    %v1185 = vunpack.c.l.b16 %v853
    %v1186 = vunpack.c.h.b16 %v853
    %v1187 = vunpack.c.l.b16 %v854
    %v1188 = vunpack.c.h.b16 %v854
    %v1189 = vunpack.c.l.b16 %v855
    %v1190 = vunpack.c.h.b16 %v855
    %v1191 = vunpack.c.l.b16 %v856
    %v1192 = vunpack.c.h.b16 %v856
    %v1193 = vunpack.c.l.b16 %v857
    %v1194 = vunpack.c.h.b16 %v857
    %v1195 = vunpack.c.l.b16 %v858
    %v1196 = vunpack.c.h.b16 %v858
    %v1197 = vunpack.c.l.b16 %v859
    %v1198 = vunpack.c.h.b16 %v859
    %v1199 = vunpack.c.l.b16 %v860
    %v1200 = vunpack.c.h.b16 %v860
    %v1201 = vunpack.c.l.b16 %v861
    %v1202 = vunpack.c.h.b16 %v861
    %v1203 = vunpack.c.l.b16 %v862
    %v1204 = vunpack.c.h.b16 %v862
    %v1205 = vunpack.c.l.b16 %v863
    %v1206 = vunpack.c.h.b16 %v863
    %v1207 = vunpack.c.l.b16 %v864
    %v1208 = vunpack.c.h.b16 %v864
    %v1209 = vunpack.c.l.b16 %v865
    %v1210 = vunpack.c.h.b16 %v865
    %v1211 = vunpack.c.l.b16 %v866
    %v1212 = vunpack.c.h.b16 %v866
    %v1213 = vunpack.c.l.b16 %v867
    %v1214 = vunpack.c.h.b16 %v867
    %v1215 = vunpack.c.l.b16 %v868
    %v1216 = vunpack.c.h.b16 %v868
    %v1217 = vunpack.c.l.b16 %v869
    %v1218 = vunpack.c.h.b16 %v869
    %v1219 = vunpack.c.l.b16 %v870
    %v1220 = vunpack.c.h.b16 %v870
    %v1221 = vunpack.c.l.b16 %v871
    %v1222 = vunpack.c.h.b16 %v871
    %v1223 = vunpack.c.l.b16 %v872
    %v1224 = vunpack.c.h.b16 %v872
    %v1225 = vunpack.c.l.b16 %v873
    %v1226 = vunpack.c.h.b16 %v873
    %v1227 = vunpack.c.l.b16 %v874
    %v1228 = vunpack.c.h.b16 %v874
    %v1229 = vunpack.c.l.b16 %v875
    %v1230 = vunpack.c.h.b16 %v875
    %v1231 = vunpack.c.l.b16 %v876
    %v1232 = vunpack.c.h.b16 %v876
    %v1233 = vunpack.c.l.b16 %v877
    %v1234 = vunpack.c.h.b16 %v877
    %v1235 = vunpack.c.l.b16 %v878
    %v1236 = vunpack.c.h.b16 %v878
    %v1237 = vunpack.c.l.b16 %v879
    %v1238 = vunpack.c.h.b16 %v879
    %v1239 = vunpack.c.l.b16 %v880
    %v1240 = vunpack.c.h.b16 %v880
    %v1241 = vunpack.c.l.b16 %v881
    %v1242 = vunpack.c.h.b16 %v881
    %v1243 = vunpack.c.l.b16 %v882
    %v1244 = vunpack.c.h.b16 %v882
    %v1245 = vunpack.c.l.b16 %v883
    %v1246 = vunpack.c.h.b16 %v883
    %v1247 = vunpack.c.l.b16 %v884
    %v1248 = vunpack.c.h.b16 %v884
    %v1249 = vunpack.c.l.b16 %v885
    %v1250 = vunpack.c.h.b16 %v885
    %v1251 = vunpack.c.l.b16 %v886
    %v1252 = vunpack.c.h.b16 %v886
    %v1253 = vunpack.c.l.b16 %v887
    %v1254 = vunpack.c.h.b16 %v887
    %v1255 = vunpack.c.l.b16 %v888
    %v1256 = vunpack.c.h.b16 %v888
    %v1257 = vunpack.c.l.b16 %v889
    %v1258 = vunpack.c.h.b16 %v889
    %v1259 = vunpack.c.l.b16 %v890
    %v1260 = vunpack.c.h.b16 %v890
    %v1261 = vunpack.c.l.b16 %v891
    %v1262 = vunpack.c.h.b16 %v891
    %v1263 = vunpack.c.l.b16 %v892
    %v1264 = vunpack.c.h.b16 %v892
    %v1265 = vunpack.c.l.b16 %v893
    %v1266 = vunpack.c.h.b16 %v893
    %v1267 = vunpack.c.l.b16 %v894
    %v1268 = vunpack.c.h.b16 %v894
    %v1269 = vunpack.c.l.b16 %v895
    %v1270 = vunpack.c.h.b16 %v895
    %v1271 = vunpack.c.l.b16 %v896
    %v1272 = vunpack.c.h.b16 %v896
    %v1273 = vunpack.c.l.b16 %v897
    %v1274 = vunpack.c.h.b16 %v897
    %v1275 = vunpack.c.l.b16 %v898
    %v1276 = vunpack.c.h.b16 %v898
    %v1277 = vunpack.c.l.b16 %v899
    %v1278 = vunpack.c.h.b16 %v899
    %v1279 = vunpack.c.l.b16 %v900
    %v1280 = vunpack.c.h.b16 %v900
    %v1281 = vunpack.c.l.b16 %v901
    %v1282 = vunpack.c.h.b16 %v901
    %v1283 = vunpack.c.l.b16 %v902
    %v1284 = vunpack.c.h.b16 %v902
    %v1285 = vunpack.c.l.b16 %v903
    %v1286 = vunpack.c.h.b16 %v903
    %v1287 = vunpack.c.l.b16 %v904
    %v1288 = vunpack.c.h.b16 %v904
    %v1289 = vunpack.c.l.b16 %v905
    %v1290 = vunpack.c.h.b16 %v905
    %v1291 = vunpack.c.l.b16 %v906
    %v1292 = vunpack.c.h.b16 %v906
    %v1293 = vunpack.c.l.b16 %v907
    %v1294 = vunpack.c.h.b16 %v907
    %v1295 = vunpack.c.l.b16 %v908
    %v1296 = vunpack.c.h.b16 %v908
    %v1297 = vunpack.c.l.b16 %v909
    %v1298 = vunpack.c.h.b16 %v909
    %v1299 = vunpack.c.l.b16 %v910
    %v1300 = vunpack.c.h.b16 %v910
    %v1301 = vunpack.c.l.b16 %v911
    %v1302 = vunpack.c.h.b16 %v911
    %v1303 = vunpack.c.l.b16 %v912
    %v1304 = vunpack.c.h.b16 %v912
    %v1305 = vunpack.c.l.b16 %v913
    %v1306 = vunpack.c.h.b16 %v913
    %v1307 = vunpack.c.l.b16 %v914
    %v1308 = vunpack.c.h.b16 %v914
    %v1309 = vunpack.c.l.b16 %v915
    %v1310 = vunpack.c.h.b16 %v915
    %v1311 = vunpack.c.l.b16 %v916
    %v1312 = vunpack.c.h.b16 %v916
    %v1313 = vunpack.c.l.b16 %v917
    %v1314 = vunpack.c.h.b16 %v917
    %v1315 = vunpack.c.l.b16 %v918
    %v1316 = vunpack.c.h.b16 %v918
    %v1317 = vunpack.c.l.b16 %v919
    %v1318 = vunpack.c.h.b16 %v919
    %v1319 = vunpack.c.l.b16 %v920
    %v1320 = vunpack.c.h.b16 %v920
    %v1321 = vunpack.c.l.b16 %v921
    %v1322 = vunpack.c.h.b16 %v921
    %v1323 = vunpack.c.l.b16 %v922
    %v1324 = vunpack.c.h.b16 %v922
    %v1325 = vunpack.c.l.b16 %v923
    %v1326 = vunpack.c.h.b16 %v923
    %v1327 = vunpack.c.l.b16 %v924
    %v1328 = vunpack.c.h.b16 %v924
    %v1329 = vunpack.c.l.b16 %v925
    %v1330 = vunpack.c.h.b16 %v925
    %v1331 = vunpack.c.l.b16 %v926
    %v1332 = vunpack.c.h.b16 %v926
    %v1333 = vunpack.c.l.b16 %v927
    %v1334 = vunpack.c.h.b16 %v927
    %v1335 = vpack.c.b16 %v1083, %v1079
    %v1336 = vpack.c.b16 %v1084, %v1080
    %v1337 = vpack.c.b16 %v1085, %v1081
    %v1338 = vpack.c.b16 %v1086, %v1082
    %v1339 = vpack.c.b16 %v1091, %v1087
    %v1340 = vpack.c.b16 %v1092, %v1088
    %v1341 = vpack.c.b16 %v1093, %v1089
    %v1342 = vpack.c.b16 %v1094, %v1090
    %v1343 = vpack.c.b16 %v1099, %v1095
    %v1344 = vpack.c.b16 %v1100, %v1096
    %v1345 = vpack.c.b16 %v1101, %v1097
    %v1346 = vpack.c.b16 %v1102, %v1098
    %v1347 = vpack.c.b16 %v1107, %v1103
    %v1348 = vpack.c.b16 %v1108, %v1104
    %v1349 = vpack.c.b16 %v1109, %v1105
    %v1350 = vpack.c.b16 %v1110, %v1106
    %v1351 = vpack.c.b16 %v1115, %v1111
    %v1352 = vpack.c.b16 %v1116, %v1112
    %v1353 = vpack.c.b16 %v1117, %v1113
    %v1354 = vpack.c.b16 %v1118, %v1114
    %v1355 = vpack.c.b16 %v1123, %v1119
    %v1356 = vpack.c.b16 %v1124, %v1120
    %v1357 = vpack.c.b16 %v1125, %v1121
    %v1358 = vpack.c.b16 %v1126, %v1122
    %v1359 = vpack.c.b16 %v1131, %v1127
    %v1360 = vpack.c.b16 %v1132, %v1128
    %v1361 = vpack.c.b16 %v1133, %v1129
    %v1362 = vpack.c.b16 %v1134, %v1130
    %v1363 = vpack.c.b16 %v1139, %v1135
    %v1364 = vpack.c.b16 %v1140, %v1136
    %v1365 = vpack.c.b16 %v1141, %v1137
    %v1366 = vpack.c.b16 %v1142, %v1138
    %v1367 = vpack.c.b16 %v1147, %v1143
    %v1368 = vpack.c.b16 %v1148, %v1144
    %v1369 = vpack.c.b16 %v1149, %v1145
    %v1370 = vpack.c.b16 %v1150, %v1146
    %v1371 = vpack.c.b16 %v1155, %v1151
    %v1372 = vpack.c.b16 %v1156, %v1152
    %v1373 = vpack.c.b16 %v1157, %v1153
    %v1374 = vpack.c.b16 %v1158, %v1154
    %v1375 = vpack.c.b16 %v1163, %v1159
    %v1376 = vpack.c.b16 %v1164, %v1160
    %v1377 = vpack.c.b16 %v1165, %v1161
    %v1378 = vpack.c.b16 %v1166, %v1162
    %v1379 = vpack.c.b16 %v1171, %v1167
    %v1380 = vpack.c.b16 %v1172, %v1168
    %v1381 = vpack.c.b16 %v1173, %v1169
    %v1382 = vpack.c.b16 %v1174, %v1170
    %v1383 = vpack.c.b16 %v1179, %v1175
    %v1384 = vpack.c.b16 %v1180, %v1176
    %v1385 = vpack.c.b16 %v1181, %v1177
    %v1386 = vpack.c.b16 %v1182, %v1178
    %v1387 = vpack.c.b16 %v1187, %v1183
    %v1388 = vpack.c.b16 %v1188, %v1184
    %v1389 = vpack.c.b16 %v1189, %v1185
    %v1390 = vpack.c.b16 %v1190, %v1186
    %v1391 = vpack.c.b16 %v1195, %v1191
    %v1392 = vpack.c.b16 %v1196, %v1192
    %v1393 = vpack.c.b16 %v1197, %v1193
    %v1394 = vpack.c.b16 %v1198, %v1194
    %v1395 = vpack.c.b16 %v1203, %v1199
    %v1396 = vpack.c.b16 %v1204, %v1200
    %v1397 = vpack.c.b16 %v1205, %v1201
    %v1398 = vpack.c.b16 %v1206, %v1202
    %v1399 = vpack.c.b16 %v1211, %v1207
    %v1400 = vpack.c.b16 %v1212, %v1208
    %v1401 = vpack.c.b16 %v1213, %v1209
    %v1402 = vpack.c.b16 %v1214, %v1210
    %v1403 = vpack.c.b16 %v1219, %v1215
    %v1404 = vpack.c.b16 %v1220, %v1216
    %v1405 = vpack.c.b16 %v1221, %v1217
    %v1406 = vpack.c.b16 %v1222, %v1218
    %v1407 = vpack.c.b16 %v1227, %v1223
    %v1408 = vpack.c.b16 %v1228, %v1224
    %v1409 = vpack.c.b16 %v1229, %v1225
    %v1410 = vpack.c.b16 %v1230, %v1226
    %v1411 = vpack.c.b16 %v1235, %v1231
    %v1412 = vpack.c.b16 %v1236, %v1232
    %v1413 = vpack.c.b16 %v1237, %v1233
    %v1414 = vpack.c.b16 %v1238, %v1234
    %v1415 = vpack.c.b16 %v1243, %v1239
    %v1416 = vpack.c.b16 %v1244, %v1240
    %v1417 = vpack.c.b16 %v1245, %v1241
    %v1418 = vpack.c.b16 %v1246, %v1242
    %v1419 = vpack.c.b16 %v1251, %v1247
    %v1420 = vpack.c.b16 %v1252, %v1248
    %v1421 = vpack.c.b16 %v1253, %v1249
    %v1422 = vpack.c.b16 %v1254, %v1250
    %v1423 = vpack.c.b16 %v1259, %v1255
    %v1424 = vpack.c.b16 %v1260, %v1256
    %v1425 = vpack.c.b16 %v1261, %v1257
    %v1426 = vpack.c.b16 %v1262, %v1258
    %v1427 = vpack.c.b16 %v1267, %v1263
    %v1428 = vpack.c.b16 %v1268, %v1264
    %v1429 = vpack.c.b16 %v1269, %v1265
    %v1430 = vpack.c.b16 %v1270, %v1266
    %v1431 = vpack.c.b16 %v1275, %v1271
    %v1432 = vpack.c.b16 %v1276, %v1272
    %v1433 = vpack.c.b16 %v1277, %v1273
    %v1434 = vpack.c.b16 %v1278, %v1274
    %v1435 = vpack.c.b16 %v1283, %v1279
    %v1436 = vpack.c.b16 %v1284, %v1280
    %v1437 = vpack.c.b16 %v1285, %v1281
    %v1438 = vpack.c.b16 %v1286, %v1282
    %v1439 = vpack.c.b16 %v1291, %v1287
    %v1440 = vpack.c.b16 %v1292, %v1288
    %v1441 = vpack.c.b16 %v1293, %v1289
    %v1442 = vpack.c.b16 %v1294, %v1290
    %v1443 = vpack.c.b16 %v1299, %v1295
    %v1444 = vpack.c.b16 %v1300, %v1296
    %v1445 = vpack.c.b16 %v1301, %v1297
    %v1446 = vpack.c.b16 %v1302, %v1298
    %v1447 = vpack.c.b16 %v1307, %v1303
    %v1448 = vpack.c.b16 %v1308, %v1304
    %v1449 = vpack.c.b16 %v1309, %v1305
    %v1450 = vpack.c.b16 %v1310, %v1306
    %v1451 = vpack.c.b16 %v1315, %v1311
    %v1452 = vpack.c.b16 %v1316, %v1312
    %v1453 = vpack.c.b16 %v1317, %v1313
    %v1454 = vpack.c.b16 %v1318, %v1314
    %v1455 = vpack.c.b16 %v1323, %v1319
    %v1456 = vpack.c.b16 %v1324, %v1320
    %v1457 = vpack.c.b16 %v1325, %v1321
    %v1458 = vpack.c.b16 %v1326, %v1322
    %v1459 = vpack.c.b16 %v1331, %v1327
    %v1460 = vpack.c.b16 %v1332, %v1328
    %v1461 = vpack.c.b16 %v1333, %v1329
    %v1462 = vpack.c.b16 %v1334, %v1330
    %1591 = vmatprep.subr.bf16.mxu0 %v1336
    %1592 = vmatpush1.bf16.msra.mxu0 %v1335
    %1593 = vmatprep.subr.bf16.mxu0 %v1340
    %1594 = vmatpush1.bf16.msra.mxu0 %v1339
    %1595 = vmatprep.subr.bf16.mxu0 %v1344
    %1596 = vmatpush1.bf16.msra.mxu0 %v1343
    %1597 = vmatprep.subr.bf16.mxu0 %v1348
    %1598 = vmatpush1.bf16.msra.mxu0 %v1347
    %1599 = vmatprep.subr.bf16.mxu0 %v1352
    %1600 = vmatpush1.bf16.msra.mxu0 %v1351
    %1601 = vmatprep.subr.bf16.mxu0 %v1356
    %1602 = vmatpush1.bf16.msra.mxu0 %v1355
    %1603 = vmatprep.subr.bf16.mxu0 %v1360
    %1604 = vmatpush1.bf16.msra.mxu0 %v1359
    %1605 = vmatprep.subr.bf16.mxu0 %v1364
    %1606 = vmatpush1.bf16.msra.mxu0 %v1363
    %1607 = vmatprep.subr.bf16.mxu0 %v1368
    %1608 = vmatpush1.bf16.msra.mxu0 %v1367
    %1609 = vmatprep.subr.bf16.mxu0 %v1372
    %1610 = vmatpush1.bf16.msra.mxu0 %v1371
    %1611 = vmatprep.subr.bf16.mxu0 %v1376
    %1612 = vmatpush1.bf16.msra.mxu0 %v1375
    %1613 = vmatprep.subr.bf16.mxu0 %v1380
    %1614 = vmatpush1.bf16.msra.mxu0 %v1379
    %1615 = vmatprep.subr.bf16.mxu0 %v1384
    %1616 = vmatpush1.bf16.msra.mxu0 %v1383
    %1617 = vmatprep.subr.bf16.mxu0 %v1388
    %1618 = vmatpush1.bf16.msra.mxu0 %v1387
    %1619 = vmatprep.subr.bf16.mxu0 %v1392
    %1620 = vmatpush1.bf16.msra.mxu0 %v1391
    %1621 = vmatprep.subr.bf16.mxu0 %v1396
    %1622 = vmatpush1.bf16.msra.mxu0 %v1395
    %1623 = vmatprep.mubr.bf16.mxu0 %v797
    %1624 = vmatmul.mubr.bf16.gmra.mrb[0].mxu0 %v796
    %v1625 = vpop.f32.mrb[0].mxu0
    %v1626 = vadd.f32 %v934, %v1625
    %v1627 = vpop.f32.mrb[0].mxu0
    %v1628 = vadd.f32 %v938, %v1627
    %v1629 = vpop.f32.mrb[0].mxu0
    %v1630 = vpop.f32.mrb[0].mxu0
    %1631 = vdwg.mxu0
    %1632 = vmatprep.subr.bf16.mxu0 %v1400
    %1633 = vmatpush1.bf16.msra.mxu0 %v1399
    %1634 = vmatprep.subr.bf16.mxu0 %v1404
    %1635 = vmatpush1.bf16.msra.mxu0 %v1403
    %1636 = vmatprep.subr.bf16.mxu0 %v1408
    %1637 = vmatpush1.bf16.msra.mxu0 %v1407
    %1638 = vmatprep.subr.bf16.mxu0 %v1412
    %1639 = vmatpush1.bf16.msra.mxu0 %v1411
    %1640 = vmatprep.subr.bf16.mxu0 %v1416
    %1641 = vmatpush1.bf16.msra.mxu0 %v1415
    %1642 = vmatprep.subr.bf16.mxu0 %v1420
    %1643 = vmatpush1.bf16.msra.mxu0 %v1419
    %1644 = vmatprep.subr.bf16.mxu0 %v1424
    %1645 = vmatpush1.bf16.msra.mxu0 %v1423
    %1646 = vmatprep.subr.bf16.mxu0 %v1428
    %1647 = vmatpush1.bf16.msra.mxu0 %v1427
    %1648 = vmatprep.subr.bf16.mxu0 %v1432
    %1649 = vmatpush1.bf16.msra.mxu0 %v1431
    %1650 = vmatprep.subr.bf16.mxu0 %v1436
    %1651 = vmatpush1.bf16.msra.mxu0 %v1435
    %1652 = vmatprep.subr.bf16.mxu0 %v1440
    %1653 = vmatpush1.bf16.msra.mxu0 %v1439
    %1654 = vmatprep.subr.bf16.mxu0 %v1444
    %1655 = vmatpush1.bf16.msra.mxu0 %v1443
    %1656 = vmatprep.subr.bf16.mxu0 %v1448
    %1657 = vmatpush1.bf16.msra.mxu0 %v1447
    %1658 = vmatprep.subr.bf16.mxu0 %v1452
    %1659 = vmatpush1.bf16.msra.mxu0 %v1451
    %1660 = vmatprep.subr.bf16.mxu0 %v1456
    %1661 = vmatpush1.bf16.msra.mxu0 %v1455
    %1662 = vmatprep.subr.bf16.mxu0 %v1460
    %1663 = vmatpush1.bf16.msra.mxu0 %v1459
    %1664 = vmatprep.mubr.bf16.mxu0 %v799
    %1665 = vmatmul.mubr.bf16.gmra.mrb[0].mxu0 %v798
    %v1666 = vpop.f32.mrb[0].mxu0
    %v1667 = vadd.f32 %v1626, %v1666
    %v1668 = vpop.f32.mrb[0].mxu0
    %v1669 = vadd.f32 %v1628, %v1668
    %v1670 = vpop.f32.mrb[0].mxu0
    %v1671 = vpop.f32.mrb[0].mxu0
    %1672 = vdwg.mxu0
    %1673 = vmatprep.subr.bf16.mxu0 %v1338
    %1674 = vmatpush1.bf16.msra.mxu0 %v1337
    %1675 = vmatprep.subr.bf16.mxu0 %v1342
    %1676 = vmatpush1.bf16.msra.mxu0 %v1341
    %1677 = vmatprep.subr.bf16.mxu0 %v1346
    %1678 = vmatpush1.bf16.msra.mxu0 %v1345
    %1679 = vmatprep.subr.bf16.mxu0 %v1350
    %1680 = vmatpush1.bf16.msra.mxu0 %v1349
    %1681 = vmatprep.subr.bf16.mxu0 %v1354
    %1682 = vmatpush1.bf16.msra.mxu0 %v1353
    %1683 = vmatprep.subr.bf16.mxu0 %v1358
    %1684 = vmatpush1.bf16.msra.mxu0 %v1357
    %1685 = vmatprep.subr.bf16.mxu0 %v1362
    %1686 = vmatpush1.bf16.msra.mxu0 %v1361
    %1687 = vmatprep.subr.bf16.mxu0 %v1366
    %1688 = vmatpush1.bf16.msra.mxu0 %v1365
    %1689 = vmatprep.subr.bf16.mxu0 %v1370
    %1690 = vmatpush1.bf16.msra.mxu0 %v1369
    %1691 = vmatprep.subr.bf16.mxu0 %v1374
    %1692 = vmatpush1.bf16.msra.mxu0 %v1373
    %1693 = vmatprep.subr.bf16.mxu0 %v1378
    %1694 = vmatpush1.bf16.msra.mxu0 %v1377
    %1695 = vmatprep.subr.bf16.mxu0 %v1382
    %1696 = vmatpush1.bf16.msra.mxu0 %v1381
    %1697 = vmatprep.subr.bf16.mxu0 %v1386
    %1698 = vmatpush1.bf16.msra.mxu0 %v1385
    %1699 = vmatprep.subr.bf16.mxu0 %v1390
    %1700 = vmatpush1.bf16.msra.mxu0 %v1389
    %1701 = vmatprep.subr.bf16.mxu0 %v1394
    %1702 = vmatpush1.bf16.msra.mxu0 %v1393
    %1703 = vmatprep.subr.bf16.mxu0 %v1398
    %1704 = vmatpush1.bf16.msra.mxu0 %v1397
    %1705 = vmatprep.mubr.bf16.mxu0 %v797
    %1706 = vmatmul.mubr.bf16.gmra.mrb[0].mxu0 %v796
    %v1707 = vpop.f32.mrb[0].mxu0
    %v1708 = vadd.f32 %v942, %v1707
    %v1709 = vpop.f32.mrb[0].mxu0
    %v1710 = vadd.f32 %v946, %v1709
    %v1711 = vpop.f32.mrb[0].mxu0
    %v1712 = vpop.f32.mrb[0].mxu0
    %1713 = vdwg.mxu0
    %1714 = vmatprep.subr.bf16.mxu0 %v1402
    %1715 = vmatpush1.bf16.msra.mxu0 %v1401
    %1716 = vmatprep.subr.bf16.mxu0 %v1406
    %1717 = vmatpush1.bf16.msra.mxu0 %v1405
    %1718 = vmatprep.subr.bf16.mxu0 %v1410
    %1719 = vmatpush1.bf16.msra.mxu0 %v1409
    %1720 = vmatprep.subr.bf16.mxu0 %v1414
    %1721 = vmatpush1.bf16.msra.mxu0 %v1413
    %1722 = vmatprep.subr.bf16.mxu0 %v1418
    %1723 = vmatpush1.bf16.msra.mxu0 %v1417
    %1724 = vmatprep.subr.bf16.mxu0 %v1422
    %1725 = vmatpush1.bf16.msra.mxu0 %v1421
    %1726 = vmatprep.subr.bf16.mxu0 %v1426
    %1727 = vmatpush1.bf16.msra.mxu0 %v1425
    %1728 = vmatprep.subr.bf16.mxu0 %v1430
    %1729 = vmatpush1.bf16.msra.mxu0 %v1429
    %1730 = vmatprep.subr.bf16.mxu0 %v1434
    %1731 = vmatpush1.bf16.msra.mxu0 %v1433
    %1732 = vmatprep.subr.bf16.mxu0 %v1438
    %1733 = vmatpush1.bf16.msra.mxu0 %v1437
    %1734 = vmatprep.subr.bf16.mxu0 %v1442
    %1735 = vmatpush1.bf16.msra.mxu0 %v1441
    %1736 = vmatprep.subr.bf16.mxu0 %v1446
    %1737 = vmatpush1.bf16.msra.mxu0 %v1445
    %1738 = vmatprep.subr.bf16.mxu0 %v1450
    %1739 = vmatpush1.bf16.msra.mxu0 %v1449
    %1740 = vmatprep.subr.bf16.mxu0 %v1454
    %1741 = vmatpush1.bf16.msra.mxu0 %v1453
    %1742 = vmatprep.subr.bf16.mxu0 %v1458
    %1743 = vmatpush1.bf16.msra.mxu0 %v1457
    %1744 = vmatprep.subr.bf16.mxu0 %v1462
    %1745 = vmatpush1.bf16.msra.mxu0 %v1461
    %1746 = vmatprep.mubr.bf16.mxu0 %v799
    %1747 = vmatmul.mubr.bf16.gmra.mrb[0].mxu0 %v798
    %v1748 = vpop.f32.mrb[0].mxu0
    %v1749 = vadd.f32 %v1708, %v1748
    %v1750 = vpop.f32.mrb[0].mxu0
    %v1751 = vadd.f32 %v1710, %v1750
    %v1752 = vpop.f32.mrb[0].mxu0
    %v1753 = vpop.f32.mrb[0].mxu0
    %1754 = vdwg.mxu0
    %v1755 = vmax.f32 %v1667, 0.0
    %v1756 = vmax.f32 %v1669, 0.0
    %v1757 = vmax.f32 %v1749, 0.0
    %v1758 = vmax.f32 %v1751, 0.0
    %v1759 = vpack.c.bf16 %v1755, %v1755
    %v1760 = vpack.c.bf16 %v1756, %v1756
    %v1761 = vpack.c.bf16 %v1757, %v1757
    %v1762 = vpack.c.bf16 %v1758, %v1758
    %v1763 = vld [vmem:[#allocation16] sm:$0xff]
    %v1764 = vld [vmem:[#allocation16 + $0x8] sm:$0xff]
    %v1765 = vld [vmem:[#allocation16 + $0x10] sm:$0xff]
    %v1766 = vld [vmem:[#allocation16 + $0x18] sm:$0xff]
    %v1767 = vld [vmem:[#allocation16 + $0x20] sm:$0xff]
    %v1768 = vld [vmem:[#allocation16 + $0x28] sm:$0xff]
    %v1769 = vld [vmem:[#allocation16 + $0x30] sm:$0xff]
    %v1770 = vld [vmem:[#allocation16 + $0x38] sm:$0xff]
    %v1771 = vld [vmem:[#allocation16 + $0x40] sm:$0xff]
    %v1772 = vld [vmem:[#allocation16 + $0x48] sm:$0xff]
    %v1773 = vld [vmem:[#allocation16 + $0x50] sm:$0xff]
    %v1774 = vld [vmem:[#allocation16 + $0x58] sm:$0xff]
    %v1775 = vld [vmem:[#allocation16 + $0x60] sm:$0xff]
    %v1776 = vld [vmem:[#allocation16 + $0x68] sm:$0xff]
    %v1777 = vld [vmem:[#allocation16 + $0x70] sm:$0xff]
    %v1778 = vld [vmem:[#allocation16 + $0x78] sm:$0xff]
    %v1779 = vld [vmem:[#allocation16 + $0x80] sm:$0xff]
    %v1780 = vld [vmem:[#allocation16 + $0x88] sm:$0xff]
    %v1781 = vld [vmem:[#allocation16 + $0x90] sm:$0xff]
    %v1782 = vld [vmem:[#allocation16 + $0x98] sm:$0xff]
    %v1783 = vld [vmem:[#allocation16 + $0xa0] sm:$0xff]
    %v1784 = vld [vmem:[#allocation16 + $0xa8] sm:$0xff]
    %v1785 = vld [vmem:[#allocation16 + $0xb0] sm:$0xff]
    %v1786 = vld [vmem:[#allocation16 + $0xb8] sm:$0xff]
    %v1787 = vld [vmem:[#allocation16 + $0xc0] sm:$0xff]
    %v1788 = vld [vmem:[#allocation16 + $0xc8] sm:$0xff]
    %v1789 = vld [vmem:[#allocation16 + $0xd0] sm:$0xff]
    %v1790 = vld [vmem:[#allocation16 + $0xd8] sm:$0xff]
    %v1791 = vld [vmem:[#allocation16 + $0xe0] sm:$0xff]
    %v1792 = vld [vmem:[#allocation16 + $0xe8] sm:$0xff]
    %v1793 = vld [vmem:[#allocation16 + $0xf0] sm:$0xff]
    %v1794 = vld [vmem:[#allocation16 + $0xf8] sm:$0xff]
    %v1795 = vld [vmem:[#allocation16 + $0x100] sm:$0xff]
    %v1796 = vld [vmem:[#allocation16 + $0x108] sm:$0xff]
    %v1797 = vld [vmem:[#allocation16 + $0x110] sm:$0xff]
    %v1798 = vld [vmem:[#allocation16 + $0x118] sm:$0xff]
    %v1799 = vld [vmem:[#allocation16 + $0x120] sm:$0xff]
    %v1800 = vld [vmem:[#allocation16 + $0x128] sm:$0xff]
    %v1801 = vld [vmem:[#allocation16 + $0x130] sm:$0xff]
    %v1802 = vld [vmem:[#allocation16 + $0x138] sm:$0xff]
    %v1803 = vld [vmem:[#allocation16 + $0x140] sm:$0xff]
    %v1804 = vld [vmem:[#allocation16 + $0x148] sm:$0xff]
    %v1805 = vld [vmem:[#allocation16 + $0x150] sm:$0xff]
    %v1806 = vld [vmem:[#allocation16 + $0x158] sm:$0xff]
    %v1807 = vld [vmem:[#allocation16 + $0x160] sm:$0xff]
    %v1808 = vld [vmem:[#allocation16 + $0x168] sm:$0xff]
    %v1809 = vld [vmem:[#allocation16 + $0x170] sm:$0xff]
    %v1810 = vld [vmem:[#allocation16 + $0x178] sm:$0xff]
    %v1811 = vld [vmem:[#allocation16 + $0x180] sm:$0xff]
    %v1812 = vld [vmem:[#allocation16 + $0x188] sm:$0xff]
    %v1813 = vld [vmem:[#allocation16 + $0x190] sm:$0xff]
    %v1814 = vld [vmem:[#allocation16 + $0x198] sm:$0xff]
    %v1815 = vld [vmem:[#allocation16 + $0x1a0] sm:$0xff]
    %v1816 = vld [vmem:[#allocation16 + $0x1a8] sm:$0xff]
    %v1817 = vld [vmem:[#allocation16 + $0x1b0] sm:$0xff]
    %v1818 = vld [vmem:[#allocation16 + $0x1b8] sm:$0xff]
    %v1819 = vld [vmem:[#allocation16 + $0x1c0] sm:$0xff]
    %v1820 = vld [vmem:[#allocation16 + $0x1c8] sm:$0xff]
    %v1821 = vld [vmem:[#allocation16 + $0x1d0] sm:$0xff]
    %v1822 = vld [vmem:[#allocation16 + $0x1d8] sm:$0xff]
    %v1823 = vld [vmem:[#allocation16 + $0x1e0] sm:$0xff]
    %v1824 = vld [vmem:[#allocation16 + $0x1e8] sm:$0xff]
    %v1825 = vld [vmem:[#allocation16 + $0x1f0] sm:$0xff]
    %v1826 = vld [vmem:[#allocation16 + $0x1f8] sm:$0xff]
    %v1827 = vld [vmem:[#allocation16 + $0x200] sm:$0xff]
    %v1828 = vld [vmem:[#allocation16 + $0x208] sm:$0xff]
    %v1829 = vld [vmem:[#allocation16 + $0x210] sm:$0xff]
    %v1830 = vld [vmem:[#allocation16 + $0x218] sm:$0xff]
    %v1831 = vld [vmem:[#allocation16 + $0x220] sm:$0xff]
    %v1832 = vld [vmem:[#allocation16 + $0x228] sm:$0xff]
    %v1833 = vld [vmem:[#allocation16 + $0x230] sm:$0xff]
    %v1834 = vld [vmem:[#allocation16 + $0x238] sm:$0xff]
    %v1835 = vld [vmem:[#allocation16 + $0x240] sm:$0xff]
    %v1836 = vld [vmem:[#allocation16 + $0x248] sm:$0xff]
    %v1837 = vld [vmem:[#allocation16 + $0x250] sm:$0xff]
    %v1838 = vld [vmem:[#allocation16 + $0x258] sm:$0xff]
    %v1839 = vld [vmem:[#allocation16 + $0x260] sm:$0xff]
    %v1840 = vld [vmem:[#allocation16 + $0x268] sm:$0xff]
    %v1841 = vld [vmem:[#allocation16 + $0x270] sm:$0xff]
    %v1842 = vld [vmem:[#allocation16 + $0x278] sm:$0xff]
    %v1843 = vld [vmem:[#allocation16 + $0x280] sm:$0xff]
    %v1844 = vld [vmem:[#allocation16 + $0x288] sm:$0xff]
    %v1845 = vld [vmem:[#allocation16 + $0x290] sm:$0xff]
    %v1846 = vld [vmem:[#allocation16 + $0x298] sm:$0xff]
    %v1847 = vld [vmem:[#allocation16 + $0x2a0] sm:$0xff]
    %v1848 = vld [vmem:[#allocation16 + $0x2a8] sm:$0xff]
    %v1849 = vld [vmem:[#allocation16 + $0x2b0] sm:$0xff]
    %v1850 = vld [vmem:[#allocation16 + $0x2b8] sm:$0xff]
    %v1851 = vld [vmem:[#allocation16 + $0x2c0] sm:$0xff]
    %v1852 = vld [vmem:[#allocation16 + $0x2c8] sm:$0xff]
    %v1853 = vld [vmem:[#allocation16 + $0x2d0] sm:$0xff]
    %v1854 = vld [vmem:[#allocation16 + $0x2d8] sm:$0xff]
    %v1855 = vld [vmem:[#allocation16 + $0x2e0] sm:$0xff]
    %v1856 = vld [vmem:[#allocation16 + $0x2e8] sm:$0xff]
    %v1857 = vld [vmem:[#allocation16 + $0x2f0] sm:$0xff]
    %v1858 = vld [vmem:[#allocation16 + $0x2f8] sm:$0xff]
    %v1859 = vld [vmem:[#allocation16 + $0x300] sm:$0xff]
    %v1860 = vld [vmem:[#allocation16 + $0x308] sm:$0xff]
    %v1861 = vld [vmem:[#allocation16 + $0x310] sm:$0xff]
    %v1862 = vld [vmem:[#allocation16 + $0x318] sm:$0xff]
    %v1863 = vld [vmem:[#allocation16 + $0x320] sm:$0xff]
    %v1864 = vld [vmem:[#allocation16 + $0x328] sm:$0xff]
    %v1865 = vld [vmem:[#allocation16 + $0x330] sm:$0xff]
    %v1866 = vld [vmem:[#allocation16 + $0x338] sm:$0xff]
    %v1867 = vld [vmem:[#allocation16 + $0x340] sm:$0xff]
    %v1868 = vld [vmem:[#allocation16 + $0x348] sm:$0xff]
    %v1869 = vld [vmem:[#allocation16 + $0x350] sm:$0xff]
    %v1870 = vld [vmem:[#allocation16 + $0x358] sm:$0xff]
    %v1871 = vld [vmem:[#allocation16 + $0x360] sm:$0xff]
    %v1872 = vld [vmem:[#allocation16 + $0x368] sm:$0xff]
    %v1873 = vld [vmem:[#allocation16 + $0x370] sm:$0xff]
    %v1874 = vld [vmem:[#allocation16 + $0x378] sm:$0xff]
    %v1875 = vld [vmem:[#allocation16 + $0x380] sm:$0xff]
    %v1876 = vld [vmem:[#allocation16 + $0x388] sm:$0xff]
    %v1877 = vld [vmem:[#allocation16 + $0x390] sm:$0xff]
    %v1878 = vld [vmem:[#allocation16 + $0x398] sm:$0xff]
    %v1879 = vld [vmem:[#allocation16 + $0x3a0] sm:$0xff]
    %v1880 = vld [vmem:[#allocation16 + $0x3a8] sm:$0xff]
    %v1881 = vld [vmem:[#allocation16 + $0x3b0] sm:$0xff]
    %v1882 = vld [vmem:[#allocation16 + $0x3b8] sm:$0xff]
    %v1883 = vld [vmem:[#allocation16 + $0x3c0] sm:$0xff]
    %v1884 = vld [vmem:[#allocation16 + $0x3c8] sm:$0xff]
    %v1885 = vld [vmem:[#allocation16 + $0x3d0] sm:$0xff]
    %v1886 = vld [vmem:[#allocation16 + $0x3d8] sm:$0xff]
    %v1887 = vld [vmem:[#allocation16 + $0x3e0] sm:$0xff]
    %v1888 = vld [vmem:[#allocation16 + $0x3e8] sm:$0xff]
    %v1889 = vld [vmem:[#allocation16 + $0x3f0] sm:$0xff]
    %v1890 = vld [vmem:[#allocation16 + $0x3f8] sm:$0xff]
    %s1891 = scalar_lea.vmem [#allocation7], 2
    %v1892 = vld [vmem:[%s1891] ss:$8 sm:$0xf]
    %v1894 = vlaneseq
    %v1895 = vshrl.u32 %v1894, 7
    %v1896 = vsub.s32 0, %v1895
    %v1897 = vrot.slane %v1892, %v1896
    %v1898 = vlaneseq
    %v1899 = vshrl.u32 %v1898, 7
    %v1900 = vsub.s32 1, %v1899
    %v1901 = vrot.slane %v1892, %v1900
    %v1902 = vlaneseq
    %v1903 = vshrl.u32 %v1902, 7
    %v1904 = vsub.s32 2, %v1903
    %v1905 = vrot.slane %v1892, %v1904
    %v1906 = vlaneseq
    %v1907 = vshrl.u32 %v1906, 7
    %v1908 = vsub.s32 3, %v1907
    %v1909 = vrot.slane %v1892, %v1908
    %v2042 = vunpack.c.l.b16 %v1763
    %v2043 = vunpack.c.h.b16 %v1763
    %v2044 = vunpack.c.l.b16 %v1764
    %v2045 = vunpack.c.h.b16 %v1764
    %v2046 = vunpack.c.l.b16 %v1765
    %v2047 = vunpack.c.h.b16 %v1765
    %v2048 = vunpack.c.l.b16 %v1766
    %v2049 = vunpack.c.h.b16 %v1766
    %v2050 = vunpack.c.l.b16 %v1767
    %v2051 = vunpack.c.h.b16 %v1767
    %v2052 = vunpack.c.l.b16 %v1768
    %v2053 = vunpack.c.h.b16 %v1768
    %v2054 = vunpack.c.l.b16 %v1769
    %v2055 = vunpack.c.h.b16 %v1769
    %v2056 = vunpack.c.l.b16 %v1770
    %v2057 = vunpack.c.h.b16 %v1770
    %v2058 = vunpack.c.l.b16 %v1771
    %v2059 = vunpack.c.h.b16 %v1771
    %v2060 = vunpack.c.l.b16 %v1772
    %v2061 = vunpack.c.h.b16 %v1772
    %v2062 = vunpack.c.l.b16 %v1773
    %v2063 = vunpack.c.h.b16 %v1773
    %v2064 = vunpack.c.l.b16 %v1774
    %v2065 = vunpack.c.h.b16 %v1774
    %v2066 = vunpack.c.l.b16 %v1775
    %v2067 = vunpack.c.h.b16 %v1775
    %v2068 = vunpack.c.l.b16 %v1776
    %v2069 = vunpack.c.h.b16 %v1776
    %v2070 = vunpack.c.l.b16 %v1777
    %v2071 = vunpack.c.h.b16 %v1777
    %v2072 = vunpack.c.l.b16 %v1778
    %v2073 = vunpack.c.h.b16 %v1778
    %v2074 = vunpack.c.l.b16 %v1779
    %v2075 = vunpack.c.h.b16 %v1779
    %v2076 = vunpack.c.l.b16 %v1780
    %v2077 = vunpack.c.h.b16 %v1780
    %v2078 = vunpack.c.l.b16 %v1781
    %v2079 = vunpack.c.h.b16 %v1781
    %v2080 = vunpack.c.l.b16 %v1782
    %v2081 = vunpack.c.h.b16 %v1782
    %v2082 = vunpack.c.l.b16 %v1783
    %v2083 = vunpack.c.h.b16 %v1783
    %v2084 = vunpack.c.l.b16 %v1784
    %v2085 = vunpack.c.h.b16 %v1784
    %v2086 = vunpack.c.l.b16 %v1785
    %v2087 = vunpack.c.h.b16 %v1785
    %v2088 = vunpack.c.l.b16 %v1786
    %v2089 = vunpack.c.h.b16 %v1786
    %v2090 = vunpack.c.l.b16 %v1787
    %v2091 = vunpack.c.h.b16 %v1787
    %v2092 = vunpack.c.l.b16 %v1788
    %v2093 = vunpack.c.h.b16 %v1788
    %v2094 = vunpack.c.l.b16 %v1789
    %v2095 = vunpack.c.h.b16 %v1789
    %v2096 = vunpack.c.l.b16 %v1790
    %v2097 = vunpack.c.h.b16 %v1790
    %v2098 = vunpack.c.l.b16 %v1791
    %v2099 = vunpack.c.h.b16 %v1791
    %v2100 = vunpack.c.l.b16 %v1792
    %v2101 = vunpack.c.h.b16 %v1792
    %v2102 = vunpack.c.l.b16 %v1793
    %v2103 = vunpack.c.h.b16 %v1793
    %v2104 = vunpack.c.l.b16 %v1794
    %v2105 = vunpack.c.h.b16 %v1794
    %v2106 = vunpack.c.l.b16 %v1795
    %v2107 = vunpack.c.h.b16 %v1795
    %v2108 = vunpack.c.l.b16 %v1796
    %v2109 = vunpack.c.h.b16 %v1796
    %v2110 = vunpack.c.l.b16 %v1797
    %v2111 = vunpack.c.h.b16 %v1797
    %v2112 = vunpack.c.l.b16 %v1798
    %v2113 = vunpack.c.h.b16 %v1798
    %v2114 = vunpack.c.l.b16 %v1799
    %v2115 = vunpack.c.h.b16 %v1799
    %v2116 = vunpack.c.l.b16 %v1800
    %v2117 = vunpack.c.h.b16 %v1800
    %v2118 = vunpack.c.l.b16 %v1801
    %v2119 = vunpack.c.h.b16 %v1801
    %v2120 = vunpack.c.l.b16 %v1802
    %v2121 = vunpack.c.h.b16 %v1802
    %v2122 = vunpack.c.l.b16 %v1803
    %v2123 = vunpack.c.h.b16 %v1803
    %v2124 = vunpack.c.l.b16 %v1804
    %v2125 = vunpack.c.h.b16 %v1804
    %v2126 = vunpack.c.l.b16 %v1805
    %v2127 = vunpack.c.h.b16 %v1805
    %v2128 = vunpack.c.l.b16 %v1806
    %v2129 = vunpack.c.h.b16 %v1806
    %v2130 = vunpack.c.l.b16 %v1807
    %v2131 = vunpack.c.h.b16 %v1807
    %v2132 = vunpack.c.l.b16 %v1808
    %v2133 = vunpack.c.h.b16 %v1808
    %v2134 = vunpack.c.l.b16 %v1809
    %v2135 = vunpack.c.h.b16 %v1809
    %v2136 = vunpack.c.l.b16 %v1810
    %v2137 = vunpack.c.h.b16 %v1810
    %v2138 = vunpack.c.l.b16 %v1811
    %v2139 = vunpack.c.h.b16 %v1811
    %v2140 = vunpack.c.l.b16 %v1812
    %v2141 = vunpack.c.h.b16 %v1812
    %v2142 = vunpack.c.l.b16 %v1813
    %v2143 = vunpack.c.h.b16 %v1813
    %v2144 = vunpack.c.l.b16 %v1814
    %v2145 = vunpack.c.h.b16 %v1814
    %v2146 = vunpack.c.l.b16 %v1815
    %v2147 = vunpack.c.h.b16 %v1815
    %v2148 = vunpack.c.l.b16 %v1816
    %v2149 = vunpack.c.h.b16 %v1816
    %v2150 = vunpack.c.l.b16 %v1817
    %v2151 = vunpack.c.h.b16 %v1817
    %v2152 = vunpack.c.l.b16 %v1818
    %v2153 = vunpack.c.h.b16 %v1818
    %v2154 = vunpack.c.l.b16 %v1819
    %v2155 = vunpack.c.h.b16 %v1819
    %v2156 = vunpack.c.l.b16 %v1820
    %v2157 = vunpack.c.h.b16 %v1820
    %v2158 = vunpack.c.l.b16 %v1821
    %v2159 = vunpack.c.h.b16 %v1821
    %v2160 = vunpack.c.l.b16 %v1822
    %v2161 = vunpack.c.h.b16 %v1822
    %v2162 = vunpack.c.l.b16 %v1823
    %v2163 = vunpack.c.h.b16 %v1823
    %v2164 = vunpack.c.l.b16 %v1824
    %v2165 = vunpack.c.h.b16 %v1824
    %v2166 = vunpack.c.l.b16 %v1825
    %v2167 = vunpack.c.h.b16 %v1825
    %v2168 = vunpack.c.l.b16 %v1826
    %v2169 = vunpack.c.h.b16 %v1826
    %v2170 = vunpack.c.l.b16 %v1827
    %v2171 = vunpack.c.h.b16 %v1827
    %v2172 = vunpack.c.l.b16 %v1828
    %v2173 = vunpack.c.h.b16 %v1828
    %v2174 = vunpack.c.l.b16 %v1829
    %v2175 = vunpack.c.h.b16 %v1829
    %v2176 = vunpack.c.l.b16 %v1830
    %v2177 = vunpack.c.h.b16 %v1830
    %v2178 = vunpack.c.l.b16 %v1831
    %v2179 = vunpack.c.h.b16 %v1831
    %v2180 = vunpack.c.l.b16 %v1832
    %v2181 = vunpack.c.h.b16 %v1832
    %v2182 = vunpack.c.l.b16 %v1833
    %v2183 = vunpack.c.h.b16 %v1833
    %v2184 = vunpack.c.l.b16 %v1834
    %v2185 = vunpack.c.h.b16 %v1834
    %v2186 = vunpack.c.l.b16 %v1835
    %v2187 = vunpack.c.h.b16 %v1835
    %v2188 = vunpack.c.l.b16 %v1836
    %v2189 = vunpack.c.h.b16 %v1836
    %v2190 = vunpack.c.l.b16 %v1837
    %v2191 = vunpack.c.h.b16 %v1837
    %v2192 = vunpack.c.l.b16 %v1838
    %v2193 = vunpack.c.h.b16 %v1838
    %v2194 = vunpack.c.l.b16 %v1839
    %v2195 = vunpack.c.h.b16 %v1839
    %v2196 = vunpack.c.l.b16 %v1840
    %v2197 = vunpack.c.h.b16 %v1840
    %v2198 = vunpack.c.l.b16 %v1841
    %v2199 = vunpack.c.h.b16 %v1841
    %v2200 = vunpack.c.l.b16 %v1842
    %v2201 = vunpack.c.h.b16 %v1842
    %v2202 = vunpack.c.l.b16 %v1843
    %v2203 = vunpack.c.h.b16 %v1843
    %v2204 = vunpack.c.l.b16 %v1844
    %v2205 = vunpack.c.h.b16 %v1844
    %v2206 = vunpack.c.l.b16 %v1845
    %v2207 = vunpack.c.h.b16 %v1845
    %v2208 = vunpack.c.l.b16 %v1846
    %v2209 = vunpack.c.h.b16 %v1846
    %v2210 = vunpack.c.l.b16 %v1847
    %v2211 = vunpack.c.h.b16 %v1847
    %v2212 = vunpack.c.l.b16 %v1848
    %v2213 = vunpack.c.h.b16 %v1848
    %v2214 = vunpack.c.l.b16 %v1849
    %v2215 = vunpack.c.h.b16 %v1849
    %v2216 = vunpack.c.l.b16 %v1850
    %v2217 = vunpack.c.h.b16 %v1850
    %v2218 = vunpack.c.l.b16 %v1851
    %v2219 = vunpack.c.h.b16 %v1851
    %v2220 = vunpack.c.l.b16 %v1852
    %v2221 = vunpack.c.h.b16 %v1852
    %v2222 = vunpack.c.l.b16 %v1853
    %v2223 = vunpack.c.h.b16 %v1853
    %v2224 = vunpack.c.l.b16 %v1854
    %v2225 = vunpack.c.h.b16 %v1854
    %v2226 = vunpack.c.l.b16 %v1855
    %v2227 = vunpack.c.h.b16 %v1855
    %v2228 = vunpack.c.l.b16 %v1856
    %v2229 = vunpack.c.h.b16 %v1856
    %v2230 = vunpack.c.l.b16 %v1857
    %v2231 = vunpack.c.h.b16 %v1857
    %v2232 = vunpack.c.l.b16 %v1858
    %v2233 = vunpack.c.h.b16 %v1858
    %v2234 = vunpack.c.l.b16 %v1859
    %v2235 = vunpack.c.h.b16 %v1859
    %v2236 = vunpack.c.l.b16 %v1860
    %v2237 = vunpack.c.h.b16 %v1860
    %v2238 = vunpack.c.l.b16 %v1861
    %v2239 = vunpack.c.h.b16 %v1861
    %v2240 = vunpack.c.l.b16 %v1862
    %v2241 = vunpack.c.h.b16 %v1862
    %v2242 = vunpack.c.l.b16 %v1863
    %v2243 = vunpack.c.h.b16 %v1863
    %v2244 = vunpack.c.l.b16 %v1864
    %v2245 = vunpack.c.h.b16 %v1864
    %v2246 = vunpack.c.l.b16 %v1865
    %v2247 = vunpack.c.h.b16 %v1865
    %v2248 = vunpack.c.l.b16 %v1866
    %v2249 = vunpack.c.h.b16 %v1866
    %v2250 = vunpack.c.l.b16 %v1867
    %v2251 = vunpack.c.h.b16 %v1867
    %v2252 = vunpack.c.l.b16 %v1868
    %v2253 = vunpack.c.h.b16 %v1868
    %v2254 = vunpack.c.l.b16 %v1869
    %v2255 = vunpack.c.h.b16 %v1869
    %v2256 = vunpack.c.l.b16 %v1870
    %v2257 = vunpack.c.h.b16 %v1870
    %v2258 = vunpack.c.l.b16 %v1871
    %v2259 = vunpack.c.h.b16 %v1871
    %v2260 = vunpack.c.l.b16 %v1872
    %v2261 = vunpack.c.h.b16 %v1872
    %v2262 = vunpack.c.l.b16 %v1873
    %v2263 = vunpack.c.h.b16 %v1873
    %v2264 = vunpack.c.l.b16 %v1874
    %v2265 = vunpack.c.h.b16 %v1874
    %v2266 = vunpack.c.l.b16 %v1875
    %v2267 = vunpack.c.h.b16 %v1875
    %v2268 = vunpack.c.l.b16 %v1876
    %v2269 = vunpack.c.h.b16 %v1876
    %v2270 = vunpack.c.l.b16 %v1877
    %v2271 = vunpack.c.h.b16 %v1877
    %v2272 = vunpack.c.l.b16 %v1878
    %v2273 = vunpack.c.h.b16 %v1878
    %v2274 = vunpack.c.l.b16 %v1879
    %v2275 = vunpack.c.h.b16 %v1879
    %v2276 = vunpack.c.l.b16 %v1880
    %v2277 = vunpack.c.h.b16 %v1880
    %v2278 = vunpack.c.l.b16 %v1881
    %v2279 = vunpack.c.h.b16 %v1881
    %v2280 = vunpack.c.l.b16 %v1882
    %v2281 = vunpack.c.h.b16 %v1882
    %v2282 = vunpack.c.l.b16 %v1883
    %v2283 = vunpack.c.h.b16 %v1883
    %v2284 = vunpack.c.l.b16 %v1884
    %v2285 = vunpack.c.h.b16 %v1884
    %v2286 = vunpack.c.l.b16 %v1885
    %v2287 = vunpack.c.h.b16 %v1885
    %v2288 = vunpack.c.l.b16 %v1886
    %v2289 = vunpack.c.h.b16 %v1886
    %v2290 = vunpack.c.l.b16 %v1887
    %v2291 = vunpack.c.h.b16 %v1887
    %v2292 = vunpack.c.l.b16 %v1888
    %v2293 = vunpack.c.h.b16 %v1888
    %v2294 = vunpack.c.l.b16 %v1889
    %v2295 = vunpack.c.h.b16 %v1889
    %v2296 = vunpack.c.l.b16 %v1890
    %v2297 = vunpack.c.h.b16 %v1890
    %v2298 = vpack.c.b16 %v2046, %v2042
    %v2299 = vpack.c.b16 %v2047, %v2043
    %v2300 = vpack.c.b16 %v2048, %v2044
    %v2301 = vpack.c.b16 %v2049, %v2045
    %v2302 = vpack.c.b16 %v2054, %v2050
    %v2303 = vpack.c.b16 %v2055, %v2051
    %v2304 = vpack.c.b16 %v2056, %v2052
    %v2305 = vpack.c.b16 %v2057, %v2053
    %v2306 = vpack.c.b16 %v2062, %v2058
    %v2307 = vpack.c.b16 %v2063, %v2059
    %v2308 = vpack.c.b16 %v2064, %v2060
    %v2309 = vpack.c.b16 %v2065, %v2061
    %v2310 = vpack.c.b16 %v2070, %v2066
    %v2311 = vpack.c.b16 %v2071, %v2067
    %v2312 = vpack.c.b16 %v2072, %v2068
    %v2313 = vpack.c.b16 %v2073, %v2069
    %v2314 = vpack.c.b16 %v2078, %v2074
    %v2315 = vpack.c.b16 %v2079, %v2075
    %v2316 = vpack.c.b16 %v2080, %v2076
    %v2317 = vpack.c.b16 %v2081, %v2077
    %v2318 = vpack.c.b16 %v2086, %v2082
    %v2319 = vpack.c.b16 %v2087, %v2083
    %v2320 = vpack.c.b16 %v2088, %v2084
    %v2321 = vpack.c.b16 %v2089, %v2085
    %v2322 = vpack.c.b16 %v2094, %v2090
    %v2323 = vpack.c.b16 %v2095, %v2091
    %v2324 = vpack.c.b16 %v2096, %v2092
    %v2325 = vpack.c.b16 %v2097, %v2093
    %v2326 = vpack.c.b16 %v2102, %v2098
    %v2327 = vpack.c.b16 %v2103, %v2099
    %v2328 = vpack.c.b16 %v2104, %v2100
    %v2329 = vpack.c.b16 %v2105, %v2101
    %v2330 = vpack.c.b16 %v2110, %v2106
    %v2331 = vpack.c.b16 %v2111, %v2107
    %v2332 = vpack.c.b16 %v2112, %v2108
    %v2333 = vpack.c.b16 %v2113, %v2109
    %v2334 = vpack.c.b16 %v2118, %v2114
    %v2335 = vpack.c.b16 %v2119, %v2115
    %v2336 = vpack.c.b16 %v2120, %v2116
    %v2337 = vpack.c.b16 %v2121, %v2117
    %v2338 = vpack.c.b16 %v2126, %v2122
    %v2339 = vpack.c.b16 %v2127, %v2123
    %v2340 = vpack.c.b16 %v2128, %v2124
    %v2341 = vpack.c.b16 %v2129, %v2125
    %v2342 = vpack.c.b16 %v2134, %v2130
    %v2343 = vpack.c.b16 %v2135, %v2131
    %v2344 = vpack.c.b16 %v2136, %v2132
    %v2345 = vpack.c.b16 %v2137, %v2133
    %v2346 = vpack.c.b16 %v2142, %v2138
    %v2347 = vpack.c.b16 %v2143, %v2139
    %v2348 = vpack.c.b16 %v2144, %v2140
    %v2349 = vpack.c.b16 %v2145, %v2141
    %v2350 = vpack.c.b16 %v2150, %v2146
    %v2351 = vpack.c.b16 %v2151, %v2147
    %v2352 = vpack.c.b16 %v2152, %v2148
    %v2353 = vpack.c.b16 %v2153, %v2149
    %v2354 = vpack.c.b16 %v2158, %v2154
    %v2355 = vpack.c.b16 %v2159, %v2155
    %v2356 = vpack.c.b16 %v2160, %v2156
    %v2357 = vpack.c.b16 %v2161, %v2157
    %v2358 = vpack.c.b16 %v2166, %v2162
    %v2359 = vpack.c.b16 %v2167, %v2163
    %v2360 = vpack.c.b16 %v2168, %v2164
    %v2361 = vpack.c.b16 %v2169, %v2165
    %v2362 = vpack.c.b16 %v2174, %v2170
    %v2363 = vpack.c.b16 %v2175, %v2171
    %v2364 = vpack.c.b16 %v2176, %v2172
    %v2365 = vpack.c.b16 %v2177, %v2173
    %v2366 = vpack.c.b16 %v2182, %v2178
    %v2367 = vpack.c.b16 %v2183, %v2179
    %v2368 = vpack.c.b16 %v2184, %v2180
    %v2369 = vpack.c.b16 %v2185, %v2181
    %v2370 = vpack.c.b16 %v2190, %v2186
    %v2371 = vpack.c.b16 %v2191, %v2187
    %v2372 = vpack.c.b16 %v2192, %v2188
    %v2373 = vpack.c.b16 %v2193, %v2189
    %v2374 = vpack.c.b16 %v2198, %v2194
    %v2375 = vpack.c.b16 %v2199, %v2195
    %v2376 = vpack.c.b16 %v2200, %v2196
    %v2377 = vpack.c.b16 %v2201, %v2197
    %v2378 = vpack.c.b16 %v2206, %v2202
    %v2379 = vpack.c.b16 %v2207, %v2203
    %v2380 = vpack.c.b16 %v2208, %v2204
    %v2381 = vpack.c.b16 %v2209, %v2205
    %v2382 = vpack.c.b16 %v2214, %v2210
    %v2383 = vpack.c.b16 %v2215, %v2211
    %v2384 = vpack.c.b16 %v2216, %v2212
    %v2385 = vpack.c.b16 %v2217, %v2213
    %v2386 = vpack.c.b16 %v2222, %v2218
    %v2387 = vpack.c.b16 %v2223, %v2219
    %v2388 = vpack.c.b16 %v2224, %v2220
    %v2389 = vpack.c.b16 %v2225, %v2221
    %v2390 = vpack.c.b16 %v2230, %v2226
    %v2391 = vpack.c.b16 %v2231, %v2227
    %v2392 = vpack.c.b16 %v2232, %v2228
    %v2393 = vpack.c.b16 %v2233, %v2229
    %v2394 = vpack.c.b16 %v2238, %v2234
    %v2395 = vpack.c.b16 %v2239, %v2235
    %v2396 = vpack.c.b16 %v2240, %v2236
    %v2397 = vpack.c.b16 %v2241, %v2237
    %v2398 = vpack.c.b16 %v2246, %v2242
    %v2399 = vpack.c.b16 %v2247, %v2243
    %v2400 = vpack.c.b16 %v2248, %v2244
    %v2401 = vpack.c.b16 %v2249, %v2245
    %v2402 = vpack.c.b16 %v2254, %v2250
    %v2403 = vpack.c.b16 %v2255, %v2251
    %v2404 = vpack.c.b16 %v2256, %v2252
    %v2405 = vpack.c.b16 %v2257, %v2253
    %v2406 = vpack.c.b16 %v2262, %v2258
    %v2407 = vpack.c.b16 %v2263, %v2259
    %v2408 = vpack.c.b16 %v2264, %v2260
    %v2409 = vpack.c.b16 %v2265, %v2261
    %v2410 = vpack.c.b16 %v2270, %v2266
    %v2411 = vpack.c.b16 %v2271, %v2267
    %v2412 = vpack.c.b16 %v2272, %v2268
    %v2413 = vpack.c.b16 %v2273, %v2269
    %v2414 = vpack.c.b16 %v2278, %v2274
    %v2415 = vpack.c.b16 %v2279, %v2275
    %v2416 = vpack.c.b16 %v2280, %v2276
    %v2417 = vpack.c.b16 %v2281, %v2277
    %v2418 = vpack.c.b16 %v2286, %v2282
    %v2419 = vpack.c.b16 %v2287, %v2283
    %v2420 = vpack.c.b16 %v2288, %v2284
    %v2421 = vpack.c.b16 %v2289, %v2285
    %v2422 = vpack.c.b16 %v2294, %v2290
    %v2423 = vpack.c.b16 %v2295, %v2291
    %v2424 = vpack.c.b16 %v2296, %v2292
    %v2425 = vpack.c.b16 %v2297, %v2293
    %2554 = vmatprep.subr.bf16.mxu0 %v2299
    %2555 = vmatpush1.bf16.msra.mxu0 %v2298
    %2556 = vmatprep.subr.bf16.mxu0 %v2303
    %2557 = vmatpush1.bf16.msra.mxu0 %v2302
    %2558 = vmatprep.subr.bf16.mxu0 %v2307
    %2559 = vmatpush1.bf16.msra.mxu0 %v2306
    %2560 = vmatprep.subr.bf16.mxu0 %v2311
    %2561 = vmatpush1.bf16.msra.mxu0 %v2310
    %2562 = vmatprep.subr.bf16.mxu0 %v2315
    %2563 = vmatpush1.bf16.msra.mxu0 %v2314
    %2564 = vmatprep.subr.bf16.mxu0 %v2319
    %2565 = vmatpush1.bf16.msra.mxu0 %v2318
    %2566 = vmatprep.subr.bf16.mxu0 %v2323
    %2567 = vmatpush1.bf16.msra.mxu0 %v2322
    %2568 = vmatprep.subr.bf16.mxu0 %v2327
    %2569 = vmatpush1.bf16.msra.mxu0 %v2326
    %2570 = vmatprep.subr.bf16.mxu0 %v2331
    %2571 = vmatpush1.bf16.msra.mxu0 %v2330
    %2572 = vmatprep.subr.bf16.mxu0 %v2335
    %2573 = vmatpush1.bf16.msra.mxu0 %v2334
    %2574 = vmatprep.subr.bf16.mxu0 %v2339
    %2575 = vmatpush1.bf16.msra.mxu0 %v2338
    %2576 = vmatprep.subr.bf16.mxu0 %v2343
    %2577 = vmatpush1.bf16.msra.mxu0 %v2342
    %2578 = vmatprep.subr.bf16.mxu0 %v2347
    %2579 = vmatpush1.bf16.msra.mxu0 %v2346
    %2580 = vmatprep.subr.bf16.mxu0 %v2351
    %2581 = vmatpush1.bf16.msra.mxu0 %v2350
    %2582 = vmatprep.subr.bf16.mxu0 %v2355
    %2583 = vmatpush1.bf16.msra.mxu0 %v2354
    %2584 = vmatprep.subr.bf16.mxu0 %v2359
    %2585 = vmatpush1.bf16.msra.mxu0 %v2358
    %2586 = vmatprep.mubr.bf16.mxu0 %v1760
    %2587 = vmatmul.mubr.bf16.gmra.mrb[0].mxu0 %v1759
    %v2588 = vpop.f32.mrb[0].mxu0
    %v2589 = vadd.f32 %v1897, %v2588
    %v2590 = vpop.f32.mrb[0].mxu0
    %v2591 = vadd.f32 %v1901, %v2590
    %v2592 = vpop.f32.mrb[0].mxu0
    %v2593 = vpop.f32.mrb[0].mxu0
    %2594 = vdwg.mxu0
    %2595 = vmatprep.subr.bf16.mxu0 %v2363
    %2596 = vmatpush1.bf16.msra.mxu0 %v2362
    %2597 = vmatprep.subr.bf16.mxu0 %v2367
    %2598 = vmatpush1.bf16.msra.mxu0 %v2366
    %2599 = vmatprep.subr.bf16.mxu0 %v2371
    %2600 = vmatpush1.bf16.msra.mxu0 %v2370
    %2601 = vmatprep.subr.bf16.mxu0 %v2375
    %2602 = vmatpush1.bf16.msra.mxu0 %v2374
    %2603 = vmatprep.subr.bf16.mxu0 %v2379
    %2604 = vmatpush1.bf16.msra.mxu0 %v2378
    %2605 = vmatprep.subr.bf16.mxu0 %v2383
    %2606 = vmatpush1.bf16.msra.mxu0 %v2382
    %2607 = vmatprep.subr.bf16.mxu0 %v2387
    %2608 = vmatpush1.bf16.msra.mxu0 %v2386
    %2609 = vmatprep.subr.bf16.mxu0 %v2391
    %2610 = vmatpush1.bf16.msra.mxu0 %v2390
    %2611 = vmatprep.subr.bf16.mxu0 %v2395
    %2612 = vmatpush1.bf16.msra.mxu0 %v2394
    %2613 = vmatprep.subr.bf16.mxu0 %v2399
    %2614 = vmatpush1.bf16.msra.mxu0 %v2398
    %2615 = vmatprep.subr.bf16.mxu0 %v2403
    %2616 = vmatpush1.bf16.msra.mxu0 %v2402
    %2617 = vmatprep.subr.bf16.mxu0 %v2407
    %2618 = vmatpush1.bf16.msra.mxu0 %v2406
    %2619 = vmatprep.subr.bf16.mxu0 %v2411
    %2620 = vmatpush1.bf16.msra.mxu0 %v2410
    %2621 = vmatprep.subr.bf16.mxu0 %v2415
    %2622 = vmatpush1.bf16.msra.mxu0 %v2414
    %2623 = vmatprep.subr.bf16.mxu0 %v2419
    %2624 = vmatpush1.bf16.msra.mxu0 %v2418
    %2625 = vmatprep.subr.bf16.mxu0 %v2423
    %2626 = vmatpush1.bf16.msra.mxu0 %v2422
    %2627 = vmatprep.mubr.bf16.mxu0 %v1762
    %2628 = vmatmul.mubr.bf16.gmra.mrb[0].mxu0 %v1761
    %v2629 = vpop.f32.mrb[0].mxu0
    %v2630 = vadd.f32 %v2589, %v2629
    %v2631 = vpop.f32.mrb[0].mxu0
    %v2632 = vadd.f32 %v2591, %v2631
    %v2633 = vpop.f32.mrb[0].mxu0
    %v2634 = vpop.f32.mrb[0].mxu0
    %2635 = vdwg.mxu0
    %2636 = vmatprep.subr.bf16.mxu0 %v2301
    %2637 = vmatpush1.bf16.msra.mxu0 %v2300
    %2638 = vmatprep.subr.bf16.mxu0 %v2305
    %2639 = vmatpush1.bf16.msra.mxu0 %v2304
    %2640 = vmatprep.subr.bf16.mxu0 %v2309
    %2641 = vmatpush1.bf16.msra.mxu0 %v2308
    %2642 = vmatprep.subr.bf16.mxu0 %v2313
    %2643 = vmatpush1.bf16.msra.mxu0 %v2312
    %2644 = vmatprep.subr.bf16.mxu0 %v2317
    %2645 = vmatpush1.bf16.msra.mxu0 %v2316
    %2646 = vmatprep.subr.bf16.mxu0 %v2321
    %2647 = vmatpush1.bf16.msra.mxu0 %v2320
    %2648 = vmatprep.subr.bf16.mxu0 %v2325
    %2649 = vmatpush1.bf16.msra.mxu0 %v2324
    %2650 = vmatprep.subr.bf16.mxu0 %v2329
    %2651 = vmatpush1.bf16.msra.mxu0 %v2328
    %2652 = vmatprep.subr.bf16.mxu0 %v2333
    %2653 = vmatpush1.bf16.msra.mxu0 %v2332
    %2654 = vmatprep.subr.bf16.mxu0 %v2337
    %2655 = vmatpush1.bf16.msra.mxu0 %v2336
    %2656 = vmatprep.subr.bf16.mxu0 %v2341
    %2657 = vmatpush1.bf16.msra.mxu0 %v2340
    %2658 = vmatprep.subr.bf16.mxu0 %v2345
    %2659 = vmatpush1.bf16.msra.mxu0 %v2344
    %2660 = vmatprep.subr.bf16.mxu0 %v2349
    %2661 = vmatpush1.bf16.msra.mxu0 %v2348
    %2662 = vmatprep.subr.bf16.mxu0 %v2353
    %2663 = vmatpush1.bf16.msra.mxu0 %v2352
    %2664 = vmatprep.subr.bf16.mxu0 %v2357
    %2665 = vmatpush1.bf16.msra.mxu0 %v2356
    %2666 = vmatprep.subr.bf16.mxu0 %v2361
    %2667 = vmatpush1.bf16.msra.mxu0 %v2360
    %2668 = vmatprep.mubr.bf16.mxu0 %v1760
    %2669 = vmatmul.mubr.bf16.gmra.mrb[0].mxu0 %v1759
    %v2670 = vpop.f32.mrb[0].mxu0
    %v2671 = vadd.f32 %v1905, %v2670
    %v2672 = vpop.f32.mrb[0].mxu0
    %v2673 = vadd.f32 %v1909, %v2672
    %v2674 = vpop.f32.mrb[0].mxu0
    %v2675 = vpop.f32.mrb[0].mxu0
    %2676 = vdwg.mxu0
    %2677 = vmatprep.subr.bf16.mxu0 %v2365
    %2678 = vmatpush1.bf16.msra.mxu0 %v2364
    %2679 = vmatprep.subr.bf16.mxu0 %v2369
    %2680 = vmatpush1.bf16.msra.mxu0 %v2368
    %2681 = vmatprep.subr.bf16.mxu0 %v2373
    %2682 = vmatpush1.bf16.msra.mxu0 %v2372
    %2683 = vmatprep.subr.bf16.mxu0 %v2377
    %2684 = vmatpush1.bf16.msra.mxu0 %v2376
    %2685 = vmatprep.subr.bf16.mxu0 %v2381
    %2686 = vmatpush1.bf16.msra.mxu0 %v2380
    %2687 = vmatprep.subr.bf16.mxu0 %v2385
    %2688 = vmatpush1.bf16.msra.mxu0 %v2384
    %2689 = vmatprep.subr.bf16.mxu0 %v2389
    %2690 = vmatpush1.bf16.msra.mxu0 %v2388
    %2691 = vmatprep.subr.bf16.mxu0 %v2393
    %2692 = vmatpush1.bf16.msra.mxu0 %v2392
    %2693 = vmatprep.subr.bf16.mxu0 %v2397
    %2694 = vmatpush1.bf16.msra.mxu0 %v2396
    %2695 = vmatprep.subr.bf16.mxu0 %v2401
    %2696 = vmatpush1.bf16.msra.mxu0 %v2400
    %2697 = vmatprep.subr.bf16.mxu0 %v2405
    %2698 = vmatpush1.bf16.msra.mxu0 %v2404
    %2699 = vmatprep.subr.bf16.mxu0 %v2409
    %2700 = vmatpush1.bf16.msra.mxu0 %v2408
    %2701 = vmatprep.subr.bf16.mxu0 %v2413
    %2702 = vmatpush1.bf16.msra.mxu0 %v2412
    %2703 = vmatprep.subr.bf16.mxu0 %v2417
    %2704 = vmatpush1.bf16.msra.mxu0 %v2416
    %2705 = vmatprep.subr.bf16.mxu0 %v2421
    %2706 = vmatpush1.bf16.msra.mxu0 %v2420
    %2707 = vmatprep.subr.bf16.mxu0 %v2425
    %2708 = vmatpush1.bf16.msra.mxu0 %v2424
    %2709 = vmatprep.mubr.bf16.mxu0 %v1762
    %2710 = vmatmul.mubr.bf16.gmra.mrb[0].mxu0 %v1761
    %v2711 = vpop.f32.mrb[0].mxu0
    %v2712 = vadd.f32 %v2671, %v2711
    %v2713 = vpop.f32.mrb[0].mxu0
    %v2714 = vadd.f32 %v2673, %v2713
    %v2715 = vpop.f32.mrb[0].mxu0
    %v2716 = vpop.f32.mrb[0].mxu0
    %2717 = vdwg.mxu0
    %v2718 = vmax.f32 %v2630, 0.0
    %v2719 = vmax.f32 %v2632, 0.0
    %v2720 = vmax.f32 %v2712, 0.0
    %v2721 = vmax.f32 %v2714, 0.0
    %v2726 = vcombine.low %v2718, %v2719
    %v2727 = vcombine.low %v2720, %v2721
    %v2729 = vunpack.c.l.s4 1983009808
    %v2730 = vunpack.c.0.s8 %v2729
    %v2731 = vlaneseq
    %v2732 = vshrl.u32 %v2731, 7
    %v2733 = vsub.s32 %v2730, %v2732
    %v2734 = vrot.slane %v2726, %v2733
    %v2736 = vunpack.c.l.s4 1983009808
    %v2737 = vunpack.c.0.s8 %v2736
    %v2738 = vlaneseq
    %v2739 = vshrl.u32 %v2738, 7
    %v2740 = vsub.s32 %v2737, %v2739
    %v2741 = vrot.slane %v2727, %v2740
    %v2742 = vcombine.low %v2734, %v2741
    %2744 = vst [vmem:[#allocation17] sm:$0xff] %v2742
    // Predicated region
    $region74: #{tpu_custom_call.1} parent=1 // pred_check
      _
    $region75: #{tpu_custom_call.1} parent=1 // pred_check_branch
      %2746 = sbr.rel (0) target = $region77
    $region76: #{tpu_custom_call.1} parent=1 // pred_region
      %s2748 = ssub.s32 128, 128
      %2749 = vsyncadd [#allocation4], %s2748
      %s2751 = sshll.u32 [#allocation17], 4
      %s2752 = int_to_ptr.vmem [resolvable:$true] %s2751
      %2754 = dma.vmem_to_hbm [thread:$0]  %s2752, 128, %s9, [#allocation4]
    $region77: #{tpu_custom_call.1} parent=1 // pred_fallthru
      _
    // Predicated region
    $region78: #{tpu_custom_call.1} parent=1 // pred_check
      _
    $region79: #{tpu_custom_call.1} parent=1 // pred_check_branch
      %2756 = sbr.rel (0) target = $region81
    $region80: #{tpu_custom_call.1} parent=1 // pred_region
      %2757 = dma.done [#allocation4], 128
    $region81: #{tpu_custom_call.1} parent=1 // pred_fallthru
      _
    %2758 = vsyncpa [#allocation3], 1
    %2759 = vsyncpa [#allocation6], 1
    %2760 = vsyncpa [#allocation9], 1
    %2761 = vsyncpa [#allocation12], 1
    %2762 = vsyncpa [#allocation15], 1
    %2763 = vsyncpa [#allocation4], 1

// kernel: tpu_custom_call.1
$region0: #{tpu_custom_call.1}
  #allocation0 [shape = 'u32[]', space=smem, size = 0x4, offset = 0x4, fixed_abs, tag = 'smem constant byte address 0x4 - core index']
  #allocation1 [shape = 'u32[144,128]{1,0:T(1,128)}', space=vmem, size = 0x12000, scoped, tag = 'internal scratch']
  %s0 = inlined_call_operand.hbm [shape: bf16[2,128], index: 0, kind: input, shape index: {}]
  %s1 = inlined_call_operand.hbm [shape: f32[2,512], index: 1, kind: input, shape index: {}]
  %s2 = inlined_call_operand.hbm [shape: f32[8,512], index: 2, kind: input, shape index: {}]
  %s3 = inlined_call_operand.hbm [shape: bf16[128,128], index: 3, kind: input, shape index: {}]
  %s4 = inlined_call_operand.hbm [shape: bf16[128,128], index: 4, kind: input, shape index: {}]
  %s5 = inlined_call_operand.hbm [shape: bf16[128,128], index: 5, kind: input, shape index: {}]
  %s6 = inlined_call_operand.hbm [shape: bf16[128,512], index: 6, kind: input, shape index: {}]
  %s7 = inlined_call_operand.hbm [shape: bf16[512,512], index: 7, kind: input, shape index: {}]
  %s8 = inlined_call_operand.hbm [shape: bf16[512,512], index: 8, kind: input, shape index: {}]
  %s9 = inlined_call_operand.hbm [shape: f32[2,512], index: 9, kind: output, shape index: {}]
  %s10 = sld [smem:[#allocation0]]
  $region82: #{tpu_custom_call.1} parent=0
    _
  %s12 = ssub.s32 1, %s10
  %s13 = scalar_select 0, %s12, %s10
  $region1: #{tpu_custom_call.1} parent=0
    #allocation2 [shape = 'u8[512]{0}', space=vmem, size = 0x400, scoped, tag = 'input window, operand 0, single buffered']
    #allocation3 [shape = 's32[1]{0}', space=sflag, size = 0x4, scoped, tag = 'scoped memory for tpu_custom_call.1']
    #allocation4 [shape = 's32[1]{0}', space=sflag, size = 0x4, scoped, tag = 'scoped memory for tpu_custom_call.1']
    #allocation5 [shape = 'u8[4096]{0}', space=vmem, size = 0x1000, scoped, tag = 'input window, operand 1, single buffered']
    #allocation6 [shape = 's32[1]{0}', space=sflag, size = 0x4, scoped, tag = 'scoped memory for tpu_custom_call.1']
    #allocation7 [shape = 'u8[16384]{0}', space=vmem, size = 0x4000, scoped, tag = 'input window, operand 2, single buffered']
    #allocation8 [shape = 'u8[32768]{0}', space=vmem, size = 0x8000, scoped, tag = 'input window, operand 3, single buffered']
    #allocation9 [shape = 's32[1]{0}', space=sflag, size = 0x4, scoped, tag = 'scoped memory for tpu_custom_call.1']
    #allocation10 [shape = 'u8[32768]{0}', space=vmem, size = 0x8000, scoped, tag = 'input window, operand 4, single buffered']
    #allocation11 [shape = 'u8[32768]{0}', space=vmem, size = 0x8000, scoped, tag = 'input window, operand 5, single buffered']
    #allocation12 [shape = 's32[1]{0}', space=sflag, size = 0x4, scoped, tag = 'scoped memory for tpu_custom_call.1']
    #allocation13 [shape = 'u8[131072]{0}', space=vmem, size = 0x20000, scoped, tag = 'input window, operand 6, single buffered']
    #allocation14 [shape = 'u8[524288]{0}', space=vmem, size = 0x80000, scoped, tag = 'input window, operand 7, single buffered']
    #allocation15 [shape = 's32[1]{0}', space=sflag, size = 0x4, scoped, tag = 'scoped memory for tpu_custom_call.1']
    #allocation16 [shape = 'u8[524288]{0}', space=vmem, size = 0x80000, scoped, tag = 'input window, operand 8, single buffered']
    #allocation17 [shape = 'u8[4096]{0}', space=vmem, size = 0x1000, scoped, tag = 'output window, operand 0, single buffered']
    %14 = vsyncpa [#allocation3], 0
    %15 = vsyncpa [#allocation6], 0
    %16 = vsyncpa [#allocation9], 0
    %17 = vsyncpa [#allocation12], 0
    %18 = vsyncpa [#allocation15], 0
    %19 = vsyncpa [#allocation4], 0
    // Predicated region
    $region2: #{tpu_custom_call.1} parent=1 // pred_check
      _
    $region3: #{tpu_custom_call.1} parent=1 // pred_check_branch
      %21 = sbr.rel (0) target = $region5
    $region4: #{tpu_custom_call.1} parent=1 // pred_region
      %s23 = ssub.s32 16, 16
      %24 = vsyncadd [#allocation3], %s23
      %s26 = sshll.u32 [#allocation2], 4
      %s27 = int_to_ptr.vmem [resolvable:$true] %s26
      %29 = dma.hbm_to_vmem [thread:$0]  %s0, 16, %s27, [#allocation3]
    $region5: #{tpu_custom_call.1} parent=1 // pred_fallthru
      _
    // Predicated region
    $region6: #{tpu_custom_call.1} parent=1 // pred_check
      _
    $region7: #{tpu_custom_call.1} parent=1 // pred_check_branch
      %31 = sbr.rel (0) target = $region9
    $region8: #{tpu_custom_call.1} parent=1 // pred_region
      %s33 = ssub.s32 128, 128
      %34 = vsyncadd [#allocation6], %s33
      %s36 = sshll.u32 [#allocation5], 4
      %s37 = int_to_ptr.vmem [resolvable:$true] %s36
      %39 = dma.hbm_to_vmem [thread:$0]  %s1, 128, %s37, [#allocation6]
    $region9: #{tpu_custom_call.1} parent=1 // pred_fallthru
      _
    // Predicated region
    $region10: #{tpu_custom_call.1} parent=1 // pred_check
      _
    $region11: #{tpu_custom_call.1} parent=1 // pred_check_branch
      %41 = sbr.rel (0) target = $region13
    $region12: #{tpu_custom_call.1} parent=1 // pred_region
      %s43 = ssub.s32 512, 512
      %44 = vsyncadd [#allocation6], %s43
      %s46 = sshll.u32 [#allocation7], 4
      %s47 = int_to_ptr.vmem [resolvable:$true] %s46
      %49 = dma.hbm_to_vmem [thread:$0]  %s2, 512, %s47, [#allocation6]
    $region13: #{tpu_custom_call.1} parent=1 // pred_fallthru
      _
    // Predicated region
    $region14: #{tpu_custom_call.1} parent=1 // pred_check
      _
    $region15: #{tpu_custom_call.1} parent=1 // pred_check_branch
      %51 = sbr.rel (0) target = $region17
    $region16: #{tpu_custom_call.1} parent=1 // pred_region
      %s53 = ssub.s32 1024, 1024
      %54 = vsyncadd [#allocation9], %s53
      %s55 = sshll.u32 [#allocation8], 4
      %s56 = int_to_ptr.vmem [resolvable:$true] %s55
      %61 = dma.hbm_to_vmem [thread:$0]  %s3, 1024, %s56, [#allocation9], 64, 64, 4
    $region17: #{tpu_custom_call.1} parent=1 // pred_fallthru
      _
    // Predicated region
    $region18: #{tpu_custom_call.1} parent=1 // pred_check
      _
    $region19: #{tpu_custom_call.1} parent=1 // pred_check_branch
      %63 = sbr.rel (0) target = $region21
    $region20: #{tpu_custom_call.1} parent=1 // pred_region
      %s65 = ssub.s32 1024, 1024
      %66 = vsyncadd [#allocation9], %s65
      %s67 = sshll.u32 [#allocation10], 4
      %s68 = int_to_ptr.vmem [resolvable:$true] %s67
      %73 = dma.hbm_to_vmem [thread:$0]  %s4, 1024, %s68, [#allocation9], 64, 64, 4
    $region21: #{tpu_custom_call.1} parent=1 // pred_fallthru
      _
    // Predicated region
    $region22: #{tpu_custom_call.1} parent=1 // pred_check
      _
    $region23: #{tpu_custom_call.1} parent=1 // pred_check_branch
      %75 = sbr.rel (0) target = $region25
    $region24: #{tpu_custom_call.1} parent=1 // pred_region
      %s77 = ssub.s32 1024, 1024
      %78 = vsyncadd [#allocation12], %s77
      %s79 = sshll.u32 [#allocation11], 4
      %s80 = int_to_ptr.vmem [resolvable:$true] %s79
      %85 = dma.hbm_to_vmem [thread:$0]  %s5, 1024, %s80, [#allocation12], 64, 64, 4
    $region25: #{tpu_custom_call.1} parent=1 // pred_fallthru
      _
    // Predicated region
    $region26: #{tpu_custom_call.1} parent=1 // pred_check
      _
    $region27: #{tpu_custom_call.1} parent=1 // pred_check_branch
      %87 = sbr.rel (0) target = $region29
    $region28: #{tpu_custom_call.1} parent=1 // pred_region
      %s89 = ssub.s32 4096, 4096
      %90 = vsyncadd [#allocation12], %s89
      %s91 = sshll.u32 [#allocation13], 4
      %s92 = int_to_ptr.vmem [resolvable:$true] %s91
      %97 = dma.hbm_to_vmem [thread:$0]  %s6, 4096, %s92, [#allocation12], 256, 256, 16
    $region29: #{tpu_custom_call.1} parent=1 // pred_fallthru
      _
    // Predicated region
    $region30: #{tpu_custom_call.1} parent=1 // pred_check
      _
    $region31: #{tpu_custom_call.1} parent=1 // pred_check_branch
      %99 = sbr.rel (0) target = $region33
    $region32: #{tpu_custom_call.1} parent=1 // pred_region
      %s101 = ssub.s32 16384, 16384
      %102 = vsyncadd [#allocation15], %s101
      %s103 = sshll.u32 [#allocation14], 4
      %s104 = int_to_ptr.vmem [resolvable:$true] %s103
      %109 = dma.hbm_to_vmem [thread:$0]  %s7, 16384, %s104, [#allocation15], 256, 256, 16
    $region33: #{tpu_custom_call.1} parent=1 // pred_fallthru
      _
    // Predicated region
    $region34: #{tpu_custom_call.1} parent=1 // pred_check
      _
    $region35: #{tpu_custom_call.1} parent=1 // pred_check_branch
      %111 = sbr.rel (0) target = $region37
    $region36: #{tpu_custom_call.1} parent=1 // pred_region
      %s113 = ssub.s32 16384, 16384
      %114 = vsyncadd [#allocation15], %s113
      %s115 = sshll.u32 [#allocation16], 4
      %s116 = int_to_ptr.vmem [resolvable:$true] %s115
      %121 = dma.hbm_to_vmem [thread:$0]  %s8, 16384, %s116, [#allocation15], 256, 256, 16
    $region37: #{tpu_custom_call.1} parent=1 // pred_fallthru
      _
    // Predicated region
    $region38: #{tpu_custom_call.1} parent=1 // pred_check
      _
    $region39: #{tpu_custom_call.1} parent=1 // pred_check_branch
      %123 = sbr.rel (0) target = $region41
    $region40: #{tpu_custom_call.1} parent=1 // pred_region
      %124 = dma.done [#allocation3], 16
    $region41: #{tpu_custom_call.1} parent=1 // pred_fallthru
      _
    // Predicated region
    $region42: #{tpu_custom_call.1} parent=1 // pred_check
      _
    $region43: #{tpu_custom_call.1} parent=1 // pred_check_branch
      %126 = sbr.rel (0) target = $region45
    $region44: #{tpu_custom_call.1} parent=1 // pred_region
      %127 = dma.done [#allocation6], 128
    $region45: #{tpu_custom_call.1} parent=1 // pred_fallthru
      _
    // Predicated region
    $region46: #{tpu_custom_call.1} parent=1 // pred_check
      _
    $region47: #{tpu_custom_call.1} parent=1 // pred_check_branch
      %129 = sbr.rel (0) target = $region49
    $region48: #{tpu_custom_call.1} parent=1 // pred_region
      %130 = dma.done [#allocation6], 512
    $region49: #{tpu_custom_call.1} parent=1 // pred_fallthru
      _
    // Predicated region
    $region50: #{tpu_custom_call.1} parent=1 // pred_check
      _
    $region51: #{tpu_custom_call.1} parent=1 // pred_check_branch
      %132 = sbr.rel (0) target = $region53
    $region52: #{tpu_custom_call.1} parent=1 // pred_region
      %133 = dma.done [#allocation9], 1024
    $region53: #{tpu_custom_call.1} parent=1 // pred_fallthru
      _
    // Predicated region
    $region54: #{tpu_custom_call.1} parent=1 // pred_check
      _
    $region55: #{tpu_custom_call.1} parent=1 // pred_check_branch
      %135 = sbr.rel (0) target = $region57
    $region56: #{tpu_custom_call.1} parent=1 // pred_region
      %136 = dma.done [#allocation9], 1024
    $region57: #{tpu_custom_call.1} parent=1 // pred_fallthru
      _
    // Predicated region
    $region58: #{tpu_custom_call.1} parent=1 // pred_check
      _
    $region59: #{tpu_custom_call.1} parent=1 // pred_check_branch
      %138 = sbr.rel (0) target = $region61
    $region60: #{tpu_custom_call.1} parent=1 // pred_region
      %139 = dma.done [#allocation12], 1024
    $region61: #{tpu_custom_call.1} parent=1 // pred_fallthru
      _
    // Predicated region
    $region62: #{tpu_custom_call.1} parent=1 // pred_check
      _
    $region63: #{tpu_custom_call.1} parent=1 // pred_check_branch
      %141 = sbr.rel (0) target = $region65
    $region64: #{tpu_custom_call.1} parent=1 // pred_region
      %142 = dma.done [#allocation12], 4096
    $region65: #{tpu_custom_call.1} parent=1 // pred_fallthru
      _
    // Predicated region
    $region66: #{tpu_custom_call.1} parent=1 // pred_check
      _
    $region67: #{tpu_custom_call.1} parent=1 // pred_check_branch
      %144 = sbr.rel (0) target = $region69
    $region68: #{tpu_custom_call.1} parent=1 // pred_region
      %145 = dma.done [#allocation15], 16384
    $region69: #{tpu_custom_call.1} parent=1 // pred_fallthru
      _
    // Predicated region
    $region70: #{tpu_custom_call.1} parent=1 // pred_check
      _
    $region71: #{tpu_custom_call.1} parent=1 // pred_check_branch
      %147 = sbr.rel (0) target = $region73
    $region72: #{tpu_custom_call.1} parent=1 // pred_region
      %148 = dma.done [#allocation15], 16384
    $region73: #{tpu_custom_call.1} parent=1 // pred_fallthru
      _
    %v150 = vld [vmem:[#allocation2] sm:$0x1]
    %v151 = vld [vmem:[#allocation8] sm:$0xf]
    %v152 = vld [vmem:[#allocation8 + $0x4] sm:$0xf]
    %v153 = vld [vmem:[#allocation8 + $0x8] sm:$0xf]
    %v154 = vld [vmem:[#allocation8 + $0xc] sm:$0xf]
    %v155 = vld [vmem:[#allocation8 + $0x10] sm:$0xf]
    %v156 = vld [vmem:[#allocation8 + $0x14] sm:$0xf]
    %v157 = vld [vmem:[#allocation8 + $0x18] sm:$0xf]
    %v158 = vld [vmem:[#allocation8 + $0x1c] sm:$0xf]
    %v159 = vld [vmem:[#allocation8 + $0x20] sm:$0xf]
    %v160 = vld [vmem:[#allocation8 + $0x24] sm:$0xf]
    %v161 = vld [vmem:[#allocation8 + $0x28] sm:$0xf]
    %v162 = vld [vmem:[#allocation8 + $0x2c] sm:$0xf]
    %v163 = vld [vmem:[#allocation8 + $0x30] sm:$0xf]
    %v164 = vld [vmem:[#allocation8 + $0x34] sm:$0xf]
    %v165 = vld [vmem:[#allocation8 + $0x38] sm:$0xf]
    %v166 = vld [vmem:[#allocation8 + $0x3c] sm:$0xf]
    %v183 = vunpack.c.l.b16 %v151
    %v184 = vunpack.c.l.b16 %v152
    %v185 = vunpack.c.l.b16 %v153
    %v186 = vunpack.c.l.b16 %v154
    %v187 = vunpack.c.l.b16 %v155
    %v188 = vunpack.c.l.b16 %v156
    %v189 = vunpack.c.l.b16 %v157
    %v190 = vunpack.c.l.b16 %v158
    %v191 = vunpack.c.l.b16 %v159
    %v192 = vunpack.c.l.b16 %v160
    %v193 = vunpack.c.l.b16 %v161
    %v194 = vunpack.c.l.b16 %v162
    %v195 = vunpack.c.l.b16 %v163
    %v196 = vunpack.c.l.b16 %v164
    %v197 = vunpack.c.l.b16 %v165
    %v198 = vunpack.c.l.b16 %v166
    %v199 = vpack.c.b16 %v184, %v183
    %v200 = vpack.c.b16 %v186, %v185
    %v201 = vpack.c.b16 %v188, %v187
    %v202 = vpack.c.b16 %v190, %v189
    %v203 = vpack.c.b16 %v192, %v191
    %v204 = vpack.c.b16 %v194, %v193
    %v205 = vpack.c.b16 %v196, %v195
    %v206 = vpack.c.b16 %v198, %v197
    %215 = vmatprep.subr.bf16.mxu0 0
    %216 = vmatpush1.bf16.msra.mxu0 %v199
    %217 = vmatprep.subr.bf16.mxu0 0
    %218 = vmatpush1.bf16.msra.mxu0 %v200
    %219 = vmatprep.subr.bf16.mxu0 0
    %220 = vmatpush1.bf16.msra.mxu0 %v201
    %221 = vmatprep.subr.bf16.mxu0 0
    %222 = vmatpush1.bf16.msra.mxu0 %v202
    %223 = vmatprep.subr.bf16.mxu0 0
    %224 = vmatpush1.bf16.msra.mxu0 %v203
    %225 = vmatprep.subr.bf16.mxu0 0
    %226 = vmatpush1.bf16.msra.mxu0 %v204
    %227 = vmatprep.subr.bf16.mxu0 0
    %228 = vmatpush1.bf16.msra.mxu0 %v205
    %229 = vmatprep.subr.bf16.mxu0 0
    %230 = vmatpush1.bf16.msra.mxu0 %v206
    %231 = vmatprep.subr.bf16.mxu0 0
    %232 = vmatpush1.bf16.msra.mxu0 0
    %233 = vmatprep.subr.bf16.mxu0 0
    %234 = vmatpush1.bf16.msra.mxu0 0
    %235 = vmatprep.subr.bf16.mxu0 0
    %236 = vmatpush1.bf16.msra.mxu0 0
    %237 = vmatprep.subr.bf16.mxu0 0
    %238 = vmatpush1.bf16.msra.mxu0 0
    %239 = vmatprep.subr.bf16.mxu0 0
    %240 = vmatpush1.bf16.msra.mxu0 0
    %241 = vmatprep.subr.bf16.mxu0 0
    %242 = vmatpush1.bf16.msra.mxu0 0
    %243 = vmatprep.subr.bf16.mxu0 0
    %244 = vmatpush1.bf16.msra.mxu0 0
    %245 = vmatprep.subr.bf16.mxu0 0
    %246 = vmatpush1.bf16.msra.mxu0 0
    %247 = vmatprep.mubr.bf16.mxu0 0
    %248 = vmatmul.mubr.bf16.gmra.mrb[0].mxu0 %v150
    %v249 = vpop.f32.mrb[0].mxu0
    %v250 = vadd.f32 0.0, %v249
    %v251 = vpop.f32.mrb[0].mxu0
    %v252 = vpop.f32.mrb[0].mxu0
    %v253 = vpop.f32.mrb[0].mxu0
    %254 = vdwg.mxu0
    %v255 = vmax.f32 %v250, 0.0
    %v256 = vpack.c.bf16 %v255, %v255
    %v257 = vld [vmem:[#allocation10] sm:$0xf]
    %v258 = vld [vmem:[#allocation10 + $0x4] sm:$0xf]
    %v259 = vld [vmem:[#allocation10 + $0x8] sm:$0xf]
    %v260 = vld [vmem:[#allocation10 + $0xc] sm:$0xf]
    %v261 = vld [vmem:[#allocation10 + $0x10] sm:$0xf]
    %v262 = vld [vmem:[#allocation10 + $0x14] sm:$0xf]
    %v263 = vld [vmem:[#allocation10 + $0x18] sm:$0xf]
    %v264 = vld [vmem:[#allocation10 + $0x1c] sm:$0xf]
    %v265 = vld [vmem:[#allocation10 + $0x20] sm:$0xf]
    %v266 = vld [vmem:[#allocation10 + $0x24] sm:$0xf]
    %v267 = vld [vmem:[#allocation10 + $0x28] sm:$0xf]
    %v268 = vld [vmem:[#allocation10 + $0x2c] sm:$0xf]
    %v269 = vld [vmem:[#allocation10 + $0x30] sm:$0xf]
    %v270 = vld [vmem:[#allocation10 + $0x34] sm:$0xf]
    %v271 = vld [vmem:[#allocation10 + $0x38] sm:$0xf]
    %v272 = vld [vmem:[#allocation10 + $0x3c] sm:$0xf]
    %v289 = vunpack.c.l.b16 %v257
    %v290 = vunpack.c.l.b16 %v258
    %v291 = vunpack.c.l.b16 %v259
    %v292 = vunpack.c.l.b16 %v260
    %v293 = vunpack.c.l.b16 %v261
    %v294 = vunpack.c.l.b16 %v262
    %v295 = vunpack.c.l.b16 %v263
    %v296 = vunpack.c.l.b16 %v264
    %v297 = vunpack.c.l.b16 %v265
    %v298 = vunpack.c.l.b16 %v266
    %v299 = vunpack.c.l.b16 %v267
    %v300 = vunpack.c.l.b16 %v268
    %v301 = vunpack.c.l.b16 %v269
    %v302 = vunpack.c.l.b16 %v270
    %v303 = vunpack.c.l.b16 %v271
    %v304 = vunpack.c.l.b16 %v272
    %v305 = vpack.c.b16 %v290, %v289
    %v306 = vpack.c.b16 %v292, %v291
    %v307 = vpack.c.b16 %v294, %v293
    %v308 = vpack.c.b16 %v296, %v295
    %v309 = vpack.c.b16 %v298, %v297
    %v310 = vpack.c.b16 %v300, %v299
    %v311 = vpack.c.b16 %v302, %v301
    %v312 = vpack.c.b16 %v304, %v303
    %321 = vmatprep.subr.bf16.mxu0 0
    %322 = vmatpush1.bf16.msra.mxu0 %v305
    %323 = vmatprep.subr.bf16.mxu0 0
    %324 = vmatpush1.bf16.msra.mxu0 %v306
    %325 = vmatprep.subr.bf16.mxu0 0
    %326 = vmatpush1.bf16.msra.mxu0 %v307
    %327 = vmatprep.subr.bf16.mxu0 0
    %328 = vmatpush1.bf16.msra.mxu0 %v308
    %329 = vmatprep.subr.bf16.mxu0 0
    %330 = vmatpush1.bf16.msra.mxu0 %v309
    %331 = vmatprep.subr.bf16.mxu0 0
    %332 = vmatpush1.bf16.msra.mxu0 %v310
    %333 = vmatprep.subr.bf16.mxu0 0
    %334 = vmatpush1.bf16.msra.mxu0 %v311
    %335 = vmatprep.subr.bf16.mxu0 0
    %336 = vmatpush1.bf16.msra.mxu0 %v312
    %337 = vmatprep.subr.bf16.mxu0 0
    %338 = vmatpush1.bf16.msra.mxu0 0
    %339 = vmatprep.subr.bf16.mxu0 0
    %340 = vmatpush1.bf16.msra.mxu0 0
    %341 = vmatprep.subr.bf16.mxu0 0
    %342 = vmatpush1.bf16.msra.mxu0 0
    %343 = vmatprep.subr.bf16.mxu0 0
    %344 = vmatpush1.bf16.msra.mxu0 0
    %345 = vmatprep.subr.bf16.mxu0 0
    %346 = vmatpush1.bf16.msra.mxu0 0
    %347 = vmatprep.subr.bf16.mxu0 0
    %348 = vmatpush1.bf16.msra.mxu0 0
    %349 = vmatprep.subr.bf16.mxu0 0
    %350 = vmatpush1.bf16.msra.mxu0 0
    %351 = vmatprep.subr.bf16.mxu0 0
    %352 = vmatpush1.bf16.msra.mxu0 0
    %353 = vmatprep.mubr.bf16.mxu0 0
    %354 = vmatmul.mubr.bf16.gmra.mrb[0].mxu0 %v256
    %v355 = vpop.f32.mrb[0].mxu0
    %v356 = vadd.f32 0.0, %v355
    %v357 = vpop.f32.mrb[0].mxu0
    %v358 = vpop.f32.mrb[0].mxu0
    %v359 = vpop.f32.mrb[0].mxu0
    %360 = vdwg.mxu0
    %v361 = vmax.f32 %v356, 0.0
    %v362 = vpack.c.bf16 %v361, %v361
    %v363 = vld [vmem:[#allocation11] sm:$0xf]
    %v364 = vld [vmem:[#allocation11 + $0x4] sm:$0xf]
    %v365 = vld [vmem:[#allocation11 + $0x8] sm:$0xf]
    %v366 = vld [vmem:[#allocation11 + $0xc] sm:$0xf]
    %v367 = vld [vmem:[#allocation11 + $0x10] sm:$0xf]
    %v368 = vld [vmem:[#allocation11 + $0x14] sm:$0xf]
    %v369 = vld [vmem:[#allocation11 + $0x18] sm:$0xf]
    %v370 = vld [vmem:[#allocation11 + $0x1c] sm:$0xf]
    %v371 = vld [vmem:[#allocation11 + $0x20] sm:$0xf]
    %v372 = vld [vmem:[#allocation11 + $0x24] sm:$0xf]
    %v373 = vld [vmem:[#allocation11 + $0x28] sm:$0xf]
    %v374 = vld [vmem:[#allocation11 + $0x2c] sm:$0xf]
    %v375 = vld [vmem:[#allocation11 + $0x30] sm:$0xf]
    %v376 = vld [vmem:[#allocation11 + $0x34] sm:$0xf]
    %v377 = vld [vmem:[#allocation11 + $0x38] sm:$0xf]
    %v378 = vld [vmem:[#allocation11 + $0x3c] sm:$0xf]
    %v395 = vunpack.c.l.b16 %v363
    %v396 = vunpack.c.l.b16 %v364
    %v397 = vunpack.c.l.b16 %v365
    %v398 = vunpack.c.l.b16 %v366
    %v399 = vunpack.c.l.b16 %v367
    %v400 = vunpack.c.l.b16 %v368
    %v401 = vunpack.c.l.b16 %v369
    %v402 = vunpack.c.l.b16 %v370
    %v403 = vunpack.c.l.b16 %v371
    %v404 = vunpack.c.l.b16 %v372
    %v405 = vunpack.c.l.b16 %v373
    %v406 = vunpack.c.l.b16 %v374
    %v407 = vunpack.c.l.b16 %v375
    %v408 = vunpack.c.l.b16 %v376
    %v409 = vunpack.c.l.b16 %v377
    %v410 = vunpack.c.l.b16 %v378
    %v411 = vpack.c.b16 %v396, %v395
    %v412 = vpack.c.b16 %v398, %v397
    %v413 = vpack.c.b16 %v400, %v399
    %v414 = vpack.c.b16 %v402, %v401
    %v415 = vpack.c.b16 %v404, %v403
    %v416 = vpack.c.b16 %v406, %v405
    %v417 = vpack.c.b16 %v408, %v407
    %v418 = vpack.c.b16 %v410, %v409
    %427 = vmatprep.subr.bf16.mxu0 0
    %428 = vmatpush1.bf16.msra.mxu0 %v411
    %429 = vmatprep.subr.bf16.mxu0 0
    %430 = vmatpush1.bf16.msra.mxu0 %v412
    %431 = vmatprep.subr.bf16.mxu0 0
    %432 = vmatpush1.bf16.msra.mxu0 %v413
    %433 = vmatprep.subr.bf16.mxu0 0
    %434 = vmatpush1.bf16.msra.mxu0 %v414
    %435 = vmatprep.subr.bf16.mxu0 0
    %436 = vmatpush1.bf16.msra.mxu0 %v415
    %437 = vmatprep.subr.bf16.mxu0 0
    %438 = vmatpush1.bf16.msra.mxu0 %v416
    %439 = vmatprep.subr.bf16.mxu0 0
    %440 = vmatpush1.bf16.msra.mxu0 %v417
    %441 = vmatprep.subr.bf16.mxu0 0
    %442 = vmatpush1.bf16.msra.mxu0 %v418
    %443 = vmatprep.subr.bf16.mxu0 0
    %444 = vmatpush1.bf16.msra.mxu0 0
    %445 = vmatprep.subr.bf16.mxu0 0
    %446 = vmatpush1.bf16.msra.mxu0 0
    %447 = vmatprep.subr.bf16.mxu0 0
    %448 = vmatpush1.bf16.msra.mxu0 0
    %449 = vmatprep.subr.bf16.mxu0 0
    %450 = vmatpush1.bf16.msra.mxu0 0
    %451 = vmatprep.subr.bf16.mxu0 0
    %452 = vmatpush1.bf16.msra.mxu0 0
    %453 = vmatprep.subr.bf16.mxu0 0
    %454 = vmatpush1.bf16.msra.mxu0 0
    %455 = vmatprep.subr.bf16.mxu0 0
    %456 = vmatpush1.bf16.msra.mxu0 0
    %457 = vmatprep.subr.bf16.mxu0 0
    %458 = vmatpush1.bf16.msra.mxu0 0
    %459 = vmatprep.mubr.bf16.mxu0 0
    %460 = vmatmul.mubr.bf16.gmra.mrb[0].mxu0 %v362
    %v461 = vpop.f32.mrb[0].mxu0
    %v462 = vadd.f32 0.0, %v461
    %v463 = vpop.f32.mrb[0].mxu0
    %v464 = vpop.f32.mrb[0].mxu0
    %v465 = vpop.f32.mrb[0].mxu0
    %466 = vdwg.mxu0
    %v467 = vmax.f32 %v462, 0.0
    %v468 = vpack.c.bf16 %v467, %v467
    %v469 = vld [vmem:[#allocation13] sm:$0xff]
    %v470 = vld [vmem:[#allocation13 + $0x8] sm:$0xff]
    %v471 = vld [vmem:[#allocation13 + $0x10] sm:$0xff]
    %v472 = vld [vmem:[#allocation13 + $0x18] sm:$0xff]
    %v473 = vld [vmem:[#allocation13 + $0x20] sm:$0xff]
    %v474 = vld [vmem:[#allocation13 + $0x28] sm:$0xff]
    %v475 = vld [vmem:[#allocation13 + $0x30] sm:$0xff]
    %v476 = vld [vmem:[#allocation13 + $0x38] sm:$0xff]
    %v477 = vld [vmem:[#allocation13 + $0x40] sm:$0xff]
    %v478 = vld [vmem:[#allocation13 + $0x48] sm:$0xff]
    %v479 = vld [vmem:[#allocation13 + $0x50] sm:$0xff]
    %v480 = vld [vmem:[#allocation13 + $0x58] sm:$0xff]
    %v481 = vld [vmem:[#allocation13 + $0x60] sm:$0xff]
    %v482 = vld [vmem:[#allocation13 + $0x68] sm:$0xff]
    %v483 = vld [vmem:[#allocation13 + $0x70] sm:$0xff]
    %v484 = vld [vmem:[#allocation13 + $0x78] sm:$0xff]
    %v485 = vld [vmem:[#allocation13 + $0x80] sm:$0xff]
    %v486 = vld [vmem:[#allocation13 + $0x88] sm:$0xff]
    %v487 = vld [vmem:[#allocation13 + $0x90] sm:$0xff]
    %v488 = vld [vmem:[#allocation13 + $0x98] sm:$0xff]
    %v489 = vld [vmem:[#allocation13 + $0xa0] sm:$0xff]
    %v490 = vld [vmem:[#allocation13 + $0xa8] sm:$0xff]
    %v491 = vld [vmem:[#allocation13 + $0xb0] sm:$0xff]
    %v492 = vld [vmem:[#allocation13 + $0xb8] sm:$0xff]
    %v493 = vld [vmem:[#allocation13 + $0xc0] sm:$0xff]
    %v494 = vld [vmem:[#allocation13 + $0xc8] sm:$0xff]
    %v495 = vld [vmem:[#allocation13 + $0xd0] sm:$0xff]
    %v496 = vld [vmem:[#allocation13 + $0xd8] sm:$0xff]
    %v497 = vld [vmem:[#allocation13 + $0xe0] sm:$0xff]
    %v498 = vld [vmem:[#allocation13 + $0xe8] sm:$0xff]
    %v499 = vld [vmem:[#allocation13 + $0xf0] sm:$0xff]
    %v500 = vld [vmem:[#allocation13 + $0xf8] sm:$0xff]
    %v501 = vld [vmem:[#allocation7] ss:$8 sm:$0xf]
    %v503 = vlaneseq
    %v504 = vshrl.u32 %v503, 7
    %v505 = vsub.s32 0, %v504
    %v506 = vrot.slane %v501, %v505
    %v507 = vlaneseq
    %v508 = vshrl.u32 %v507, 7
    %v509 = vsub.s32 1, %v508
    %v510 = vrot.slane %v501, %v509
    %v511 = vlaneseq
    %v512 = vshrl.u32 %v511, 7
    %v513 = vsub.s32 2, %v512
    %v514 = vrot.slane %v501, %v513
    %v515 = vlaneseq
    %v516 = vshrl.u32 %v515, 7
    %v517 = vsub.s32 3, %v516
    %v518 = vrot.slane %v501, %v517
    %v555 = vunpack.c.l.b16 %v469
    %v556 = vunpack.c.h.b16 %v469
    %v557 = vunpack.c.l.b16 %v470
    %v558 = vunpack.c.h.b16 %v470
    %v559 = vunpack.c.l.b16 %v471
    %v560 = vunpack.c.h.b16 %v471
    %v561 = vunpack.c.l.b16 %v472
    %v562 = vunpack.c.h.b16 %v472
    %v563 = vunpack.c.l.b16 %v473
    %v564 = vunpack.c.h.b16 %v473
    %v565 = vunpack.c.l.b16 %v474
    %v566 = vunpack.c.h.b16 %v474
    %v567 = vunpack.c.l.b16 %v475
    %v568 = vunpack.c.h.b16 %v475
    %v569 = vunpack.c.l.b16 %v476
    %v570 = vunpack.c.h.b16 %v476
    %v571 = vunpack.c.l.b16 %v477
    %v572 = vunpack.c.h.b16 %v477
    %v573 = vunpack.c.l.b16 %v478
    %v574 = vunpack.c.h.b16 %v478
    %v575 = vunpack.c.l.b16 %v479
    %v576 = vunpack.c.h.b16 %v479
    %v577 = vunpack.c.l.b16 %v480
    %v578 = vunpack.c.h.b16 %v480
    %v579 = vunpack.c.l.b16 %v481
    %v580 = vunpack.c.h.b16 %v481
    %v581 = vunpack.c.l.b16 %v482
    %v582 = vunpack.c.h.b16 %v482
    %v583 = vunpack.c.l.b16 %v483
    %v584 = vunpack.c.h.b16 %v483
    %v585 = vunpack.c.l.b16 %v484
    %v586 = vunpack.c.h.b16 %v484
    %v587 = vunpack.c.l.b16 %v485
    %v588 = vunpack.c.h.b16 %v485
    %v589 = vunpack.c.l.b16 %v486
    %v590 = vunpack.c.h.b16 %v486
    %v591 = vunpack.c.l.b16 %v487
    %v592 = vunpack.c.h.b16 %v487
    %v593 = vunpack.c.l.b16 %v488
    %v594 = vunpack.c.h.b16 %v488
    %v595 = vunpack.c.l.b16 %v489
    %v596 = vunpack.c.h.b16 %v489
    %v597 = vunpack.c.l.b16 %v490
    %v598 = vunpack.c.h.b16 %v490
    %v599 = vunpack.c.l.b16 %v491
    %v600 = vunpack.c.h.b16 %v491
    %v601 = vunpack.c.l.b16 %v492
    %v602 = vunpack.c.h.b16 %v492
    %v603 = vunpack.c.l.b16 %v493
    %v604 = vunpack.c.h.b16 %v493
    %v605 = vunpack.c.l.b16 %v494
    %v606 = vunpack.c.h.b16 %v494
    %v607 = vunpack.c.l.b16 %v495
    %v608 = vunpack.c.h.b16 %v495
    %v609 = vunpack.c.l.b16 %v496
    %v610 = vunpack.c.h.b16 %v496
    %v611 = vunpack.c.l.b16 %v497
    %v612 = vunpack.c.h.b16 %v497
    %v613 = vunpack.c.l.b16 %v498
    %v614 = vunpack.c.h.b16 %v498
    %v615 = vunpack.c.l.b16 %v499
    %v616 = vunpack.c.h.b16 %v499
    %v617 = vunpack.c.l.b16 %v500
    %v618 = vunpack.c.h.b16 %v500
    %v619 = vpack.c.b16 %v559, %v555
    %v620 = vpack.c.b16 %v560, %v556
    %v621 = vpack.c.b16 %v561, %v557
    %v622 = vpack.c.b16 %v562, %v558
    %v623 = vpack.c.b16 %v567, %v563
    %v624 = vpack.c.b16 %v568, %v564
    %v625 = vpack.c.b16 %v569, %v565
    %v626 = vpack.c.b16 %v570, %v566
    %v627 = vpack.c.b16 %v575, %v571
    %v628 = vpack.c.b16 %v576, %v572
    %v629 = vpack.c.b16 %v577, %v573
    %v630 = vpack.c.b16 %v578, %v574
    %v631 = vpack.c.b16 %v583, %v579
    %v632 = vpack.c.b16 %v584, %v580
    %v633 = vpack.c.b16 %v585, %v581
    %v634 = vpack.c.b16 %v586, %v582
    %v635 = vpack.c.b16 %v591, %v587
    %v636 = vpack.c.b16 %v592, %v588
    %v637 = vpack.c.b16 %v593, %v589
    %v638 = vpack.c.b16 %v594, %v590
    %v639 = vpack.c.b16 %v599, %v595
    %v640 = vpack.c.b16 %v600, %v596
    %v641 = vpack.c.b16 %v601, %v597
    %v642 = vpack.c.b16 %v602, %v598
    %v643 = vpack.c.b16 %v607, %v603
    %v644 = vpack.c.b16 %v608, %v604
    %v645 = vpack.c.b16 %v609, %v605
    %v646 = vpack.c.b16 %v610, %v606
    %v647 = vpack.c.b16 %v615, %v611
    %v648 = vpack.c.b16 %v616, %v612
    %v649 = vpack.c.b16 %v617, %v613
    %v650 = vpack.c.b16 %v618, %v614
    %683 = vmatprep.subr.bf16.mxu0 %v620
    %684 = vmatpush1.bf16.msra.mxu0 %v619
    %685 = vmatprep.subr.bf16.mxu0 %v624
    %686 = vmatpush1.bf16.msra.mxu0 %v623
    %687 = vmatprep.subr.bf16.mxu0 %v628
    %688 = vmatpush1.bf16.msra.mxu0 %v627
    %689 = vmatprep.subr.bf16.mxu0 %v632
    %690 = vmatpush1.bf16.msra.mxu0 %v631
    %691 = vmatprep.subr.bf16.mxu0 %v636
    %692 = vmatpush1.bf16.msra.mxu0 %v635
    %693 = vmatprep.subr.bf16.mxu0 %v640
    %694 = vmatpush1.bf16.msra.mxu0 %v639
    %695 = vmatprep.subr.bf16.mxu0 %v644
    %696 = vmatpush1.bf16.msra.mxu0 %v643
    %697 = vmatprep.subr.bf16.mxu0 %v648
    %698 = vmatpush1.bf16.msra.mxu0 %v647
    %699 = vmatprep.subr.bf16.mxu0 0
    %700 = vmatpush1.bf16.msra.mxu0 0
    %701 = vmatprep.subr.bf16.mxu0 0
    %702 = vmatpush1.bf16.msra.mxu0 0
    %703 = vmatprep.subr.bf16.mxu0 0
    %704 = vmatpush1.bf16.msra.mxu0 0
    %705 = vmatprep.subr.bf16.mxu0 0
    %706 = vmatpush1.bf16.msra.mxu0 0
    %707 = vmatprep.subr.bf16.mxu0 0
    %708 = vmatpush1.bf16.msra.mxu0 0
    %709 = vmatprep.subr.bf16.mxu0 0
    %710 = vmatpush1.bf16.msra.mxu0 0
    %711 = vmatprep.subr.bf16.mxu0 0
    %712 = vmatpush1.bf16.msra.mxu0 0
    %713 = vmatprep.subr.bf16.mxu0 0
    %714 = vmatpush1.bf16.msra.mxu0 0
    %715 = vmatprep.mubr.bf16.mxu0 0
    %716 = vmatmul.mubr.bf16.gmra.mrb[0].mxu0 %v468
    %v717 = vpop.f32.mrb[0].mxu0
    %v718 = vadd.f32 %v506, %v717
    %v719 = vpop.f32.mrb[0].mxu0
    %v720 = vadd.f32 %v510, %v719
    %v721 = vpop.f32.mrb[0].mxu0
    %v722 = vpop.f32.mrb[0].mxu0
    %723 = vdwg.mxu0
    %724 = vmatprep.subr.bf16.mxu0 %v622
    %725 = vmatpush1.bf16.msra.mxu0 %v621
    %726 = vmatprep.subr.bf16.mxu0 %v626
    %727 = vmatpush1.bf16.msra.mxu0 %v625
    %728 = vmatprep.subr.bf16.mxu0 %v630
    %729 = vmatpush1.bf16.msra.mxu0 %v629
    %730 = vmatprep.subr.bf16.mxu0 %v634
    %731 = vmatpush1.bf16.msra.mxu0 %v633
    %732 = vmatprep.subr.bf16.mxu0 %v638
    %733 = vmatpush1.bf16.msra.mxu0 %v637
    %734 = vmatprep.subr.bf16.mxu0 %v642
    %735 = vmatpush1.bf16.msra.mxu0 %v641
    %736 = vmatprep.subr.bf16.mxu0 %v646
    %737 = vmatpush1.bf16.msra.mxu0 %v645
    %738 = vmatprep.subr.bf16.mxu0 %v650
    %739 = vmatpush1.bf16.msra.mxu0 %v649
    %740 = vmatprep.subr.bf16.mxu0 0
    %741 = vmatpush1.bf16.msra.mxu0 0
    %742 = vmatprep.subr.bf16.mxu0 0
    %743 = vmatpush1.bf16.msra.mxu0 0
    %744 = vmatprep.subr.bf16.mxu0 0
    %745 = vmatpush1.bf16.msra.mxu0 0
    %746 = vmatprep.subr.bf16.mxu0 0
    %747 = vmatpush1.bf16.msra.mxu0 0
    %748 = vmatprep.subr.bf16.mxu0 0
    %749 = vmatpush1.bf16.msra.mxu0 0
    %750 = vmatprep.subr.bf16.mxu0 0
    %751 = vmatpush1.bf16.msra.mxu0 0
    %752 = vmatprep.subr.bf16.mxu0 0
    %753 = vmatpush1.bf16.msra.mxu0 0
    %754 = vmatprep.subr.bf16.mxu0 0
    %755 = vmatpush1.bf16.msra.mxu0 0
    %756 = vmatprep.mubr.bf16.mxu0 0
    %757 = vmatmul.mubr.bf16.gmra.mrb[0].mxu0 %v468
    %v758 = vpop.f32.mrb[0].mxu0
    %v759 = vadd.f32 %v514, %v758
    %v760 = vpop.f32.mrb[0].mxu0
    %v761 = vadd.f32 %v518, %v760
    %v762 = vpop.f32.mrb[0].mxu0
    %v763 = vpop.f32.mrb[0].mxu0
    %764 = vdwg.mxu0
    %v765 = vmax.f32 %v718, 0.0
    %v766 = vmax.f32 %v720, 0.0
    %v767 = vmax.f32 %v759, 0.0
    %v768 = vmax.f32 %v761, 0.0
    %v769 = vld [vmem:[#allocation5] sm:$0xff]
    %v771 = vcombine.high %v769, %v769
    %v773 = vunpack.c.l.s4 1983009808
    %v774 = vunpack.c.0.s8 %v773
    %v775 = vlaneseq
    %v776 = vshrl.u32 %v775, 7
    %v777 = vsub.s32 %v774, %v776
    %v778 = vrot.slane %v769, %v777
    %v780 = vunpack.c.l.s4 1983009808
    %v781 = vunpack.c.0.s8 %v780
    %v782 = vlaneseq
    %v783 = vshrl.u32 %v782, 7
    %v784 = vsub.s32 %v781, %v783
    %v785 = vrot.slane %v771, %v784
    %v786 = vcombine.high %v778, %v778
    %v787 = vcombine.high %v785, %v785
    %v792 = vadd.f32 %v765, %v778
    %v793 = vadd.f32 %v766, %v786
    %v794 = vadd.f32 %v767, %v785
    %v795 = vadd.f32 %v768, %v787
    %v796 = vpack.c.bf16 %v792, %v792
    %v797 = vpack.c.bf16 %v793, %v793
    %v798 = vpack.c.bf16 %v794, %v794
    %v799 = vpack.c.bf16 %v795, %v795
    %v800 = vld [vmem:[#allocation14] sm:$0xff]
    %v801 = vld [vmem:[#allocation14 + $0x8] sm:$0xff]
    %v802 = vld [vmem:[#allocation14 + $0x10] sm:$0xff]
    %v803 = vld [vmem:[#allocation14 + $0x18] sm:$0xff]
    %v804 = vld [vmem:[#allocation14 + $0x20] sm:$0xff]
    %v805 = vld [vmem:[#allocation14 + $0x28] sm:$0xff]
    %v806 = vld [vmem:[#allocation14 + $0x30] sm:$0xff]
    %v807 = vld [vmem:[#allocation14 + $0x38] sm:$0xff]
    %v808 = vld [vmem:[#allocation14 + $0x40] sm:$0xff]
    %v809 = vld [vmem:[#allocation14 + $0x48] sm:$0xff]
    %v810 = vld [vmem:[#allocation14 + $0x50] sm:$0xff]
    %v811 = vld [vmem:[#allocation14 + $0x58] sm:$0xff]
    %v812 = vld [vmem:[#allocation14 + $0x60] sm:$0xff]
    %v813 = vld [vmem:[#allocation14 + $0x68] sm:$0xff]
    %v814 = vld [vmem:[#allocation14 + $0x70] sm:$0xff]
    %v815 = vld [vmem:[#allocation14 + $0x78] sm:$0xff]
    %v816 = vld [vmem:[#allocation14 + $0x80] sm:$0xff]
    %v817 = vld [vmem:[#allocation14 + $0x88] sm:$0xff]
    %v818 = vld [vmem:[#allocation14 + $0x90] sm:$0xff]
    %v819 = vld [vmem:[#allocation14 + $0x98] sm:$0xff]
    %v820 = vld [vmem:[#allocation14 + $0xa0] sm:$0xff]
    %v821 = vld [vmem:[#allocation14 + $0xa8] sm:$0xff]
    %v822 = vld [vmem:[#allocation14 + $0xb0] sm:$0xff]
    %v823 = vld [vmem:[#allocation14 + $0xb8] sm:$0xff]
    %v824 = vld [vmem:[#allocation14 + $0xc0] sm:$0xff]
    %v825 = vld [vmem:[#allocation14 + $0xc8] sm:$0xff]
    %v826 = vld [vmem:[#allocation14 + $0xd0] sm:$0xff]
    %v827 = vld [vmem:[#allocation14 + $0xd8] sm:$0xff]
    %v828 = vld [vmem:[#allocation14 + $0xe0] sm:$0xff]
    %v829 = vld [vmem:[#allocation14 + $0xe8] sm:$0xff]
    %v830 = vld [vmem:[#allocation14 + $0xf0] sm:$0xff]
    %v831 = vld [vmem:[#allocation14 + $0xf8] sm:$0xff]
    %v832 = vld [vmem:[#allocation14 + $0x100] sm:$0xff]
    %v833 = vld [vmem:[#allocation14 + $0x108] sm:$0xff]
    %v834 = vld [vmem:[#allocation14 + $0x110] sm:$0xff]
    %v835 = vld [vmem:[#allocation14 + $0x118] sm:$0xff]
    %v836 = vld [vmem:[#allocation14 + $0x120] sm:$0xff]
    %v837 = vld [vmem:[#allocation14 + $0x128] sm:$0xff]
    %v838 = vld [vmem:[#allocation14 + $0x130] sm:$0xff]
    %v839 = vld [vmem:[#allocation14 + $0x138] sm:$0xff]
    %v840 = vld [vmem:[#allocation14 + $0x140] sm:$0xff]
    %v841 = vld [vmem:[#allocation14 + $0x148] sm:$0xff]
    %v842 = vld [vmem:[#allocation14 + $0x150] sm:$0xff]
    %v843 = vld [vmem:[#allocation14 + $0x158] sm:$0xff]
    %v844 = vld [vmem:[#allocation14 + $0x160] sm:$0xff]
    %v845 = vld [vmem:[#allocation14 + $0x168] sm:$0xff]
    %v846 = vld [vmem:[#allocation14 + $0x170] sm:$0xff]
    %v847 = vld [vmem:[#allocation14 + $0x178] sm:$0xff]
    %v848 = vld [vmem:[#allocation14 + $0x180] sm:$0xff]
    %v849 = vld [vmem:[#allocation14 + $0x188] sm:$0xff]
    %v850 = vld [vmem:[#allocation14 + $0x190] sm:$0xff]
    %v851 = vld [vmem:[#allocation14 + $0x198] sm:$0xff]
    %v852 = vld [vmem:[#allocation14 + $0x1a0] sm:$0xff]
    %v853 = vld [vmem:[#allocation14 + $0x1a8] sm:$0xff]
    %v854 = vld [vmem:[#allocation14 + $0x1b0] sm:$0xff]
    %v855 = vld [vmem:[#allocation14 + $0x1b8] sm:$0xff]
    %v856 = vld [vmem:[#allocation14 + $0x1c0] sm:$0xff]
    %v857 = vld [vmem:[#allocation14 + $0x1c8] sm:$0xff]
    %v858 = vld [vmem:[#allocation14 + $0x1d0] sm:$0xff]
    %v859 = vld [vmem:[#allocation14 + $0x1d8] sm:$0xff]
    %v860 = vld [vmem:[#allocation14 + $0x1e0] sm:$0xff]
    %v861 = vld [vmem:[#allocation14 + $0x1e8] sm:$0xff]
    %v862 = vld [vmem:[#allocation14 + $0x1f0] sm:$0xff]
    %v863 = vld [vmem:[#allocation14 + $0x1f8] sm:$0xff]
    %v864 = vld [vmem:[#allocation14 + $0x200] sm:$0xff]
    %v865 = vld [vmem:[#allocation14 + $0x208] sm:$0xff]
    %v866 = vld [vmem:[#allocation14 + $0x210] sm:$0xff]
    %v867 = vld [vmem:[#allocation14 + $0x218] sm:$0xff]
    %v868 = vld [vmem:[#allocation14 + $0x220] sm:$0xff]
    %v869 = vld [vmem:[#allocation14 + $0x228] sm:$0xff]
    %v870 = vld [vmem:[#allocation14 + $0x230] sm:$0xff]
    %v871 = vld [vmem:[#allocation14 + $0x238] sm:$0xff]
    %v872 = vld [vmem:[#allocation14 + $0x240] sm:$0xff]
    %v873 = vld [vmem:[#allocation14 + $0x248] sm:$0xff]
    %v874 = vld [vmem:[#allocation14 + $0x250] sm:$0xff]
    %v875 = vld [vmem:[#allocation14 + $0x258] sm:$0xff]
    %v876 = vld [vmem:[#allocation14 + $0x260] sm:$0xff]
    %v877 = vld [vmem:[#allocation14 + $0x268] sm:$0xff]
    %v878 = vld [vmem:[#allocation14 + $0x270] sm:$0xff]
    %v879 = vld [vmem:[#allocation14 + $0x278] sm:$0xff]
    %v880 = vld [vmem:[#allocation14 + $0x280] sm:$0xff]
    %v881 = vld [vmem:[#allocation14 + $0x288] sm:$0xff]
    %v882 = vld [vmem:[#allocation14 + $0x290] sm:$0xff]
    %v883 = vld [vmem:[#allocation14 + $0x298] sm:$0xff]
    %v884 = vld [vmem:[#allocation14 + $0x2a0] sm:$0xff]
    %v885 = vld [vmem:[#allocation14 + $0x2a8] sm:$0xff]
    %v886 = vld [vmem:[#allocation14 + $0x2b0] sm:$0xff]
    %v887 = vld [vmem:[#allocation14 + $0x2b8] sm:$0xff]
    %v888 = vld [vmem:[#allocation14 + $0x2c0] sm:$0xff]
    %v889 = vld [vmem:[#allocation14 + $0x2c8] sm:$0xff]
    %v890 = vld [vmem:[#allocation14 + $0x2d0] sm:$0xff]
    %v891 = vld [vmem:[#allocation14 + $0x2d8] sm:$0xff]
    %v892 = vld [vmem:[#allocation14 + $0x2e0] sm:$0xff]
    %v893 = vld [vmem:[#allocation14 + $0x2e8] sm:$0xff]
    %v894 = vld [vmem:[#allocation14 + $0x2f0] sm:$0xff]
    %v895 = vld [vmem:[#allocation14 + $0x2f8] sm:$0xff]
    %v896 = vld [vmem:[#allocation14 + $0x300] sm:$0xff]
    %v897 = vld [vmem:[#allocation14 + $0x308] sm:$0xff]
    %v898 = vld [vmem:[#allocation14 + $0x310] sm:$0xff]
    %v899 = vld [vmem:[#allocation14 + $0x318] sm:$0xff]
    %v900 = vld [vmem:[#allocation14 + $0x320] sm:$0xff]
    %v901 = vld [vmem:[#allocation14 + $0x328] sm:$0xff]
    %v902 = vld [vmem:[#allocation14 + $0x330] sm:$0xff]
    %v903 = vld [vmem:[#allocation14 + $0x338] sm:$0xff]
    %v904 = vld [vmem:[#allocation14 + $0x340] sm:$0xff]
    %v905 = vld [vmem:[#allocation14 + $0x348] sm:$0xff]
    %v906 = vld [vmem:[#allocation14 + $0x350] sm:$0xff]
    %v907 = vld [vmem:[#allocation14 + $0x358] sm:$0xff]
    %v908 = vld [vmem:[#allocation14 + $0x360] sm:$0xff]
    %v909 = vld [vmem:[#allocation14 + $0x368] sm:$0xff]
    %v910 = vld [vmem:[#allocation14 + $0x370] sm:$0xff]
    %v911 = vld [vmem:[#allocation14 + $0x378] sm:$0xff]
    %v912 = vld [vmem:[#allocation14 + $0x380] sm:$0xff]
    %v913 = vld [vmem:[#allocation14 + $0x388] sm:$0xff]
    %v914 = vld [vmem:[#allocation14 + $0x390] sm:$0xff]
    %v915 = vld [vmem:[#allocation14 + $0x398] sm:$0xff]
    %v916 = vld [vmem:[#allocation14 + $0x3a0] sm:$0xff]
    %v917 = vld [vmem:[#allocation14 + $0x3a8] sm:$0xff]
    %v918 = vld [vmem:[#allocation14 + $0x3b0] sm:$0xff]
    %v919 = vld [vmem:[#allocation14 + $0x3b8] sm:$0xff]
    %v920 = vld [vmem:[#allocation14 + $0x3c0] sm:$0xff]
    %v921 = vld [vmem:[#allocation14 + $0x3c8] sm:$0xff]
    %v922 = vld [vmem:[#allocation14 + $0x3d0] sm:$0xff]
    %v923 = vld [vmem:[#allocation14 + $0x3d8] sm:$0xff]
    %v924 = vld [vmem:[#allocation14 + $0x3e0] sm:$0xff]
    %v925 = vld [vmem:[#allocation14 + $0x3e8] sm:$0xff]
    %v926 = vld [vmem:[#allocation14 + $0x3f0] sm:$0xff]
    %v927 = vld [vmem:[#allocation14 + $0x3f8] sm:$0xff]
    %s928 = scalar_lea.vmem [#allocation7], 1
    %v929 = vld [vmem:[%s928] ss:$8 sm:$0xf]
    %v931 = vlaneseq
    %v932 = vshrl.u32 %v931, 7
    %v933 = vsub.s32 0, %v932
    %v934 = vrot.slane %v929, %v933
    %v935 = vlaneseq
    %v936 = vshrl.u32 %v935, 7
    %v937 = vsub.s32 1, %v936
    %v938 = vrot.slane %v929, %v937
    %v939 = vlaneseq
    %v940 = vshrl.u32 %v939, 7
    %v941 = vsub.s32 2, %v940
    %v942 = vrot.slane %v929, %v941
    %v943 = vlaneseq
    %v944 = vshrl.u32 %v943, 7
    %v945 = vsub.s32 3, %v944
    %v946 = vrot.slane %v929, %v945
    %v1079 = vunpack.c.l.b16 %v800
    %v1080 = vunpack.c.h.b16 %v800
    %v1081 = vunpack.c.l.b16 %v801
    %v1082 = vunpack.c.h.b16 %v801
    %v1083 = vunpack.c.l.b16 %v802
    %v1084 = vunpack.c.h.b16 %v802
    %v1085 = vunpack.c.l.b16 %v803
    %v1086 = vunpack.c.h.b16 %v803
    %v1087 = vunpack.c.l.b16 %v804
    %v1088 = vunpack.c.h.b16 %v804
    %v1089 = vunpack.c.l.b16 %v805
    %v1090 = vunpack.c.h.b16 %v805
    %v1091 = vunpack.c.l.b16 %v806
    %v1092 = vunpack.c.h.b16 %v806
    %v1093 = vunpack.c.l.b16 %v807
    %v1094 = vunpack.c.h.b16 %v807
    %v1095 = vunpack.c.l.b16 %v808
    %v1096 = vunpack.c.h.b16 %v808
    %v1097 = vunpack.c.l.b16 %v809
    %v1098 = vunpack.c.h.b16 %v809
    %v1099 = vunpack.c.l.b16 %v810
    %v1100 = vunpack.c.h.b16 %v810
    %v1101 = vunpack.c.l.b16 %v811
    %v1102 = vunpack.c.h.b16 %v811
    %v1103 = vunpack.c.l.b16 %v812
    %v1104 = vunpack.c.h.b16 %v812
    %v1105 = vunpack.c.l.b16 %v813
    %v1106 = vunpack.c.h.b16 %v813
    %v1107 = vunpack.c.l.b16 %v814
    %v1108 = vunpack.c.h.b16 %v814
    %v1109 = vunpack.c.l.b16 %v815
    %v1110 = vunpack.c.h.b16 %v815
    %v1111 = vunpack.c.l.b16 %v816
    %v1112 = vunpack.c.h.b16 %v816
    %v1113 = vunpack.c.l.b16 %v817
    %v1114 = vunpack.c.h.b16 %v817
    %v1115 = vunpack.c.l.b16 %v818
    %v1116 = vunpack.c.h.b16 %v818
    %v1117 = vunpack.c.l.b16 %v819
    %v1118 = vunpack.c.h.b16 %v819
    %v1119 = vunpack.c.l.b16 %v820
    %v1120 = vunpack.c.h.b16 %v820
    %v1121 = vunpack.c.l.b16 %v821
    %v1122 = vunpack.c.h.b16 %v821
    %v1123 = vunpack.c.l.b16 %v822
    %v1124 = vunpack.c.h.b16 %v822
    %v1125 = vunpack.c.l.b16 %v823
    %v1126 = vunpack.c.h.b16 %v823
    %v1127 = vunpack.c.l.b16 %v824
    %v1128 = vunpack.c.h.b16 %v824
    %v1129 = vunpack.c.l.b16 %v825
    %v1130 = vunpack.c.h.b16 %v825
    %v1131 = vunpack.c.l.b16 %v826
    %v1132 = vunpack.c.h.b16 %v826
    %v1133 = vunpack.c.l.b16 %v827
    %v1134 = vunpack.c.h.b16 %v827
    %v1135 = vunpack.c.l.b16 %v828
    %v1136 = vunpack.c.h.b16 %v828
    %v1137 = vunpack.c.l.b16 %v829
    %v1138 = vunpack.c.h.b16 %v829
    %v1139 = vunpack.c.l.b16 %v830
    %v1140 = vunpack.c.h.b16 %v830
    %v1141 = vunpack.c.l.b16 %v831
    %v1142 = vunpack.c.h.b16 %v831
    %v1143 = vunpack.c.l.b16 %v832
    %v1144 = vunpack.c.h.b16 %v832
    %v1145 = vunpack.c.l.b16 %v833
    %v1146 = vunpack.c.h.b16 %v833
    %v1147 = vunpack.c.l.b16 %v834
    %v1148 = vunpack.c.h.b16 %v834
    %v1149 = vunpack.c.l.b16 %v835
    %v1150 = vunpack.c.h.b16 %v835
    %v1151 = vunpack.c.l.b16 %v836
    %v1152 = vunpack.c.h.b16 %v836
    %v1153 = vunpack.c.l.b16 %v837
    %v1154 = vunpack.c.h.b16 %v837
    %v1155 = vunpack.c.l.b16 %v838
    %v1156 = vunpack.c.h.b16 %v838
    %v1157 = vunpack.c.l.b16 %v839
    %v1158 = vunpack.c.h.b16 %v839
    %v1159 = vunpack.c.l.b16 %v840
    %v1160 = vunpack.c.h.b16 %v840
    %v1161 = vunpack.c.l.b16 %v841
    %v1162 = vunpack.c.h.b16 %v841
    %v1163 = vunpack.c.l.b16 %v842
    %v1164 = vunpack.c.h.b16 %v842
    %v1165 = vunpack.c.l.b16 %v843
    %v1166 = vunpack.c.h.b16 %v843
    %v1167 = vunpack.c.l.b16 %v844
    %v1168 = vunpack.c.h.b16 %v844
    %v1169 = vunpack.c.l.b16 %v845
    %v1170 = vunpack.c.h.b16 %v845
    %v1171 = vunpack.c.l.b16 %v846
    %v1172 = vunpack.c.h.b16 %v846
    %v1173 = vunpack.c.l.b16 %v847
    %v1174 = vunpack.c.h.b16 %v847
    %v1175 = vunpack.c.l.b16 %v848
    %v1176 = vunpack.c.h.b16 %v848
    %v1177 = vunpack.c.l.b16 %v849
    %v1178 = vunpack.c.h.b16 %v849
    %v1179 = vunpack.c.l.b16 %v850
    %v1180 = vunpack.c.h.b16 %v850
    %v1181 = vunpack.c.l.b16 %v851
    %v1182 = vunpack.c.h.b16 %v851
    %v1183 = vunpack.c.l.b16 %v852
    %v1184 = vunpack.c.h.b16 %v852
    %v1185 = vunpack.c.l.b16 %v853
    %v1186 = vunpack.c.h.b16 %v853
    %v1187 = vunpack.c.l.b16 %v854
    %v1188 = vunpack.c.h.b16 %v854
    %v1189 = vunpack.c.l.b16 %v855
    %v1190 = vunpack.c.h.b16 %v855
    %v1191 = vunpack.c.l.b16 %v856
    %v1192 = vunpack.c.h.b16 %v856
    %v1193 = vunpack.c.l.b16 %v857
    %v1194 = vunpack.c.h.b16 %v857
    %v1195 = vunpack.c.l.b16 %v858
    %v1196 = vunpack.c.h.b16 %v858
    %v1197 = vunpack.c.l.b16 %v859
    %v1198 = vunpack.c.h.b16 %v859
    %v1199 = vunpack.c.l.b16 %v860
    %v1200 = vunpack.c.h.b16 %v860
    %v1201 = vunpack.c.l.b16 %v861
    %v1202 = vunpack.c.h.b16 %v861
    %v1203 = vunpack.c.l.b16 %v862
    %v1204 = vunpack.c.h.b16 %v862
    %v1205 = vunpack.c.l.b16 %v863
    %v1206 = vunpack.c.h.b16 %v863
    %v1207 = vunpack.c.l.b16 %v864
    %v1208 = vunpack.c.h.b16 %v864
    %v1209 = vunpack.c.l.b16 %v865
    %v1210 = vunpack.c.h.b16 %v865
    %v1211 = vunpack.c.l.b16 %v866
    %v1212 = vunpack.c.h.b16 %v866
    %v1213 = vunpack.c.l.b16 %v867
    %v1214 = vunpack.c.h.b16 %v867
    %v1215 = vunpack.c.l.b16 %v868
    %v1216 = vunpack.c.h.b16 %v868
    %v1217 = vunpack.c.l.b16 %v869
    %v1218 = vunpack.c.h.b16 %v869
    %v1219 = vunpack.c.l.b16 %v870
    %v1220 = vunpack.c.h.b16 %v870
    %v1221 = vunpack.c.l.b16 %v871
    %v1222 = vunpack.c.h.b16 %v871
    %v1223 = vunpack.c.l.b16 %v872
    %v1224 = vunpack.c.h.b16 %v872
    %v1225 = vunpack.c.l.b16 %v873
    %v1226 = vunpack.c.h.b16 %v873
    %v1227 = vunpack.c.l.b16 %v874
    %v1228 = vunpack.c.h.b16 %v874
    %v1229 = vunpack.c.l.b16 %v875
    %v1230 = vunpack.c.h.b16 %v875
    %v1231 = vunpack.c.l.b16 %v876
    %v1232 = vunpack.c.h.b16 %v876
    %v1233 = vunpack.c.l.b16 %v877
    %v1234 = vunpack.c.h.b16 %v877
    %v1235 = vunpack.c.l.b16 %v878
    %v1236 = vunpack.c.h.b16 %v878
    %v1237 = vunpack.c.l.b16 %v879
    %v1238 = vunpack.c.h.b16 %v879
    %v1239 = vunpack.c.l.b16 %v880
    %v1240 = vunpack.c.h.b16 %v880
    %v1241 = vunpack.c.l.b16 %v881
    %v1242 = vunpack.c.h.b16 %v881
    %v1243 = vunpack.c.l.b16 %v882
    %v1244 = vunpack.c.h.b16 %v882
    %v1245 = vunpack.c.l.b16 %v883
    %v1246 = vunpack.c.h.b16 %v883
    %v1247 = vunpack.c.l.b16 %v884
    %v1248 = vunpack.c.h.b16 %v884
    %v1249 = vunpack.c.l.b16 %v885
    %v1250 = vunpack.c.h.b16 %v885
    %v1251 = vunpack.c.l.b16 %v886
    %v1252 = vunpack.c.h.b16 %v886
    %v1253 = vunpack.c.l.b16 %v887
    %v1254 = vunpack.c.h.b16 %v887
    %v1255 = vunpack.c.l.b16 %v888
    %v1256 = vunpack.c.h.b16 %v888
    %v1257 = vunpack.c.l.b16 %v889
    %v1258 = vunpack.c.h.b16 %v889
    %v1259 = vunpack.c.l.b16 %v890
    %v1260 = vunpack.c.h.b16 %v890
    %v1261 = vunpack.c.l.b16 %v891
    %v1262 = vunpack.c.h.b16 %v891
    %v1263 = vunpack.c.l.b16 %v892
    %v1264 = vunpack.c.h.b16 %v892
    %v1265 = vunpack.c.l.b16 %v893
    %v1266 = vunpack.c.h.b16 %v893
    %v1267 = vunpack.c.l.b16 %v894
    %v1268 = vunpack.c.h.b16 %v894
    %v1269 = vunpack.c.l.b16 %v895
    %v1270 = vunpack.c.h.b16 %v895
    %v1271 = vunpack.c.l.b16 %v896
    %v1272 = vunpack.c.h.b16 %v896
    %v1273 = vunpack.c.l.b16 %v897
    %v1274 = vunpack.c.h.b16 %v897
    %v1275 = vunpack.c.l.b16 %v898
    %v1276 = vunpack.c.h.b16 %v898
    %v1277 = vunpack.c.l.b16 %v899
    %v1278 = vunpack.c.h.b16 %v899
    %v1279 = vunpack.c.l.b16 %v900
    %v1280 = vunpack.c.h.b16 %v900
    %v1281 = vunpack.c.l.b16 %v901
    %v1282 = vunpack.c.h.b16 %v901
    %v1283 = vunpack.c.l.b16 %v902
    %v1284 = vunpack.c.h.b16 %v902
    %v1285 = vunpack.c.l.b16 %v903
    %v1286 = vunpack.c.h.b16 %v903
    %v1287 = vunpack.c.l.b16 %v904
    %v1288 = vunpack.c.h.b16 %v904
    %v1289 = vunpack.c.l.b16 %v905
    %v1290 = vunpack.c.h.b16 %v905
    %v1291 = vunpack.c.l.b16 %v906
    %v1292 = vunpack.c.h.b16 %v906
    %v1293 = vunpack.c.l.b16 %v907
    %v1294 = vunpack.c.h.b16 %v907
    %v1295 = vunpack.c.l.b16 %v908
    %v1296 = vunpack.c.h.b16 %v908
    %v1297 = vunpack.c.l.b16 %v909
    %v1298 = vunpack.c.h.b16 %v909
    %v1299 = vunpack.c.l.b16 %v910
    %v1300 = vunpack.c.h.b16 %v910
    %v1301 = vunpack.c.l.b16 %v911
    %v1302 = vunpack.c.h.b16 %v911
    %v1303 = vunpack.c.l.b16 %v912
    %v1304 = vunpack.c.h.b16 %v912
    %v1305 = vunpack.c.l.b16 %v913
    %v1306 = vunpack.c.h.b16 %v913
    %v1307 = vunpack.c.l.b16 %v914
    %v1308 = vunpack.c.h.b16 %v914
    %v1309 = vunpack.c.l.b16 %v915
    %v1310 = vunpack.c.h.b16 %v915
    %v1311 = vunpack.c.l.b16 %v916
    %v1312 = vunpack.c.h.b16 %v916
    %v1313 = vunpack.c.l.b16 %v917
    %v1314 = vunpack.c.h.b16 %v917
    %v1315 = vunpack.c.l.b16 %v918
    %v1316 = vunpack.c.h.b16 %v918
    %v1317 = vunpack.c.l.b16 %v919
    %v1318 = vunpack.c.h.b16 %v919
    %v1319 = vunpack.c.l.b16 %v920
    %v1320 = vunpack.c.h.b16 %v920
    %v1321 = vunpack.c.l.b16 %v921
    %v1322 = vunpack.c.h.b16 %v921
    %v1323 = vunpack.c.l.b16 %v922
    %v1324 = vunpack.c.h.b16 %v922
    %v1325 = vunpack.c.l.b16 %v923
    %v1326 = vunpack.c.h.b16 %v923
    %v1327 = vunpack.c.l.b16 %v924
    %v1328 = vunpack.c.h.b16 %v924
    %v1329 = vunpack.c.l.b16 %v925
    %v1330 = vunpack.c.h.b16 %v925
    %v1331 = vunpack.c.l.b16 %v926
    %v1332 = vunpack.c.h.b16 %v926
    %v1333 = vunpack.c.l.b16 %v927
    %v1334 = vunpack.c.h.b16 %v927
    %v1335 = vpack.c.b16 %v1083, %v1079
    %v1336 = vpack.c.b16 %v1084, %v1080
    %v1337 = vpack.c.b16 %v1085, %v1081
    %v1338 = vpack.c.b16 %v1086, %v1082
    %v1339 = vpack.c.b16 %v1091, %v1087
    %v1340 = vpack.c.b16 %v1092, %v1088
    %v1341 = vpack.c.b16 %v1093, %v1089
    %v1342 = vpack.c.b16 %v1094, %v1090
    %v1343 = vpack.c.b16 %v1099, %v1095
    %v1344 = vpack.c.b16 %v1100, %v1096
    %v1345 = vpack.c.b16 %v1101, %v1097
    %v1346 = vpack.c.b16 %v1102, %v1098
    %v1347 = vpack.c.b16 %v1107, %v1103
    %v1348 = vpack.c.b16 %v1108, %v1104
    %v1349 = vpack.c.b16 %v1109, %v1105
    %v1350 = vpack.c.b16 %v1110, %v1106
    %v1351 = vpack.c.b16 %v1115, %v1111
    %v1352 = vpack.c.b16 %v1116, %v1112
    %v1353 = vpack.c.b16 %v1117, %v1113
    %v1354 = vpack.c.b16 %v1118, %v1114
    %v1355 = vpack.c.b16 %v1123, %v1119
    %v1356 = vpack.c.b16 %v1124, %v1120
    %v1357 = vpack.c.b16 %v1125, %v1121
    %v1358 = vpack.c.b16 %v1126, %v1122
    %v1359 = vpack.c.b16 %v1131, %v1127
    %v1360 = vpack.c.b16 %v1132, %v1128
    %v1361 = vpack.c.b16 %v1133, %v1129
    %v1362 = vpack.c.b16 %v1134, %v1130
    %v1363 = vpack.c.b16 %v1139, %v1135
    %v1364 = vpack.c.b16 %v1140, %v1136
    %v1365 = vpack.c.b16 %v1141, %v1137
    %v1366 = vpack.c.b16 %v1142, %v1138
    %v1367 = vpack.c.b16 %v1147, %v1143
    %v1368 = vpack.c.b16 %v1148, %v1144
    %v1369 = vpack.c.b16 %v1149, %v1145
    %v1370 = vpack.c.b16 %v1150, %v1146
    %v1371 = vpack.c.b16 %v1155, %v1151
    %v1372 = vpack.c.b16 %v1156, %v1152
    %v1373 = vpack.c.b16 %v1157, %v1153
    %v1374 = vpack.c.b16 %v1158, %v1154
    %v1375 = vpack.c.b16 %v1163, %v1159
    %v1376 = vpack.c.b16 %v1164, %v1160
    %v1377 = vpack.c.b16 %v1165, %v1161
    %v1378 = vpack.c.b16 %v1166, %v1162
    %v1379 = vpack.c.b16 %v1171, %v1167
    %v1380 = vpack.c.b16 %v1172, %v1168
    %v1381 = vpack.c.b16 %v1173, %v1169
    %v1382 = vpack.c.b16 %v1174, %v1170
    %v1383 = vpack.c.b16 %v1179, %v1175
    %v1384 = vpack.c.b16 %v1180, %v1176
    %v1385 = vpack.c.b16 %v1181, %v1177
    %v1386 = vpack.c.b16 %v1182, %v1178
    %v1387 = vpack.c.b16 %v1187, %v1183
    %v1388 = vpack.c.b16 %v1188, %v1184
    %v1389 = vpack.c.b16 %v1189, %v1185
    %v1390 = vpack.c.b16 %v1190, %v1186
    %v1391 = vpack.c.b16 %v1195, %v1191
    %v1392 = vpack.c.b16 %v1196, %v1192
    %v1393 = vpack.c.b16 %v1197, %v1193
    %v1394 = vpack.c.b16 %v1198, %v1194
    %v1395 = vpack.c.b16 %v1203, %v1199
    %v1396 = vpack.c.b16 %v1204, %v1200
    %v1397 = vpack.c.b16 %v1205, %v1201
    %v1398 = vpack.c.b16 %v1206, %v1202
    %v1399 = vpack.c.b16 %v1211, %v1207
    %v1400 = vpack.c.b16 %v1212, %v1208
    %v1401 = vpack.c.b16 %v1213, %v1209
    %v1402 = vpack.c.b16 %v1214, %v1210
    %v1403 = vpack.c.b16 %v1219, %v1215
    %v1404 = vpack.c.b16 %v1220, %v1216
    %v1405 = vpack.c.b16 %v1221, %v1217
    %v1406 = vpack.c.b16 %v1222, %v1218
    %v1407 = vpack.c.b16 %v1227, %v1223
    %v1408 = vpack.c.b16 %v1228, %v1224
    %v1409 = vpack.c.b16 %v1229, %v1225
    %v1410 = vpack.c.b16 %v1230, %v1226
    %v1411 = vpack.c.b16 %v1235, %v1231
    %v1412 = vpack.c.b16 %v1236, %v1232
    %v1413 = vpack.c.b16 %v1237, %v1233
    %v1414 = vpack.c.b16 %v1238, %v1234
    %v1415 = vpack.c.b16 %v1243, %v1239
    %v1416 = vpack.c.b16 %v1244, %v1240
    %v1417 = vpack.c.b16 %v1245, %v1241
    %v1418 = vpack.c.b16 %v1246, %v1242
    %v1419 = vpack.c.b16 %v1251, %v1247
    %v1420 = vpack.c.b16 %v1252, %v1248
    %v1421 = vpack.c.b16 %v1253, %v1249
    %v1422 = vpack.c.b16 %v1254, %v1250
    %v1423 = vpack.c.b16 %v1259, %v1255
    %v1424 = vpack.c.b16 %v1260, %v1256
    %v1425 = vpack.c.b16 %v1261, %v1257
    %v1426 = vpack.c.b16 %v1262, %v1258
    %v1427 = vpack.c.b16 %v1267, %v1263
    %v1428 = vpack.c.b16 %v1268, %v1264
    %v1429 = vpack.c.b16 %v1269, %v1265
    %v1430 = vpack.c.b16 %v1270, %v1266
    %v1431 = vpack.c.b16 %v1275, %v1271
    %v1432 = vpack.c.b16 %v1276, %v1272
    %v1433 = vpack.c.b16 %v1277, %v1273
    %v1434 = vpack.c.b16 %v1278, %v1274
    %v1435 = vpack.c.b16 %v1283, %v1279
    %v1436 = vpack.c.b16 %v1284, %v1280
    %v1437 = vpack.c.b16 %v1285, %v1281
    %v1438 = vpack.c.b16 %v1286, %v1282
    %v1439 = vpack.c.b16 %v1291, %v1287
    %v1440 = vpack.c.b16 %v1292, %v1288
    %v1441 = vpack.c.b16 %v1293, %v1289
    %v1442 = vpack.c.b16 %v1294, %v1290
    %v1443 = vpack.c.b16 %v1299, %v1295
    %v1444 = vpack.c.b16 %v1300, %v1296
    %v1445 = vpack.c.b16 %v1301, %v1297
    %v1446 = vpack.c.b16 %v1302, %v1298
    %v1447 = vpack.c.b16 %v1307, %v1303
    %v1448 = vpack.c.b16 %v1308, %v1304
    %v1449 = vpack.c.b16 %v1309, %v1305
    %v1450 = vpack.c.b16 %v1310, %v1306
    %v1451 = vpack.c.b16 %v1315, %v1311
    %v1452 = vpack.c.b16 %v1316, %v1312
    %v1453 = vpack.c.b16 %v1317, %v1313
    %v1454 = vpack.c.b16 %v1318, %v1314
    %v1455 = vpack.c.b16 %v1323, %v1319
    %v1456 = vpack.c.b16 %v1324, %v1320
    %v1457 = vpack.c.b16 %v1325, %v1321
    %v1458 = vpack.c.b16 %v1326, %v1322
    %v1459 = vpack.c.b16 %v1331, %v1327
    %v1460 = vpack.c.b16 %v1332, %v1328
    %v1461 = vpack.c.b16 %v1333, %v1329
    %v1462 = vpack.c.b16 %v1334, %v1330
    %1591 = vmatprep.subr.bf16.mxu0 %v1336
    %1592 = vmatpush1.bf16.msra.mxu0 %v1335
    %1593 = vmatprep.subr.bf16.mxu0 %v1340
    %1594 = vmatpush1.bf16.msra.mxu0 %v1339
    %1595 = vmatprep.subr.bf16.mxu0 %v1344
    %1596 = vmatpush1.bf16.msra.mxu0 %v1343
    %1597 = vmatprep.subr.bf16.mxu0 %v1348
    %1598 = vmatpush1.bf16.msra.mxu0 %v1347
    %1599 = vmatprep.subr.bf16.mxu0 %v1352
    %1600 = vmatpush1.bf16.msra.mxu0 %v1351
    %1601 = vmatprep.subr.bf16.mxu0 %v1356
    %1602 = vmatpush1.bf16.msra.mxu0 %v1355
    %1603 = vmatprep.subr.bf16.mxu0 %v1360
    %1604 = vmatpush1.bf16.msra.mxu0 %v1359
    %1605 = vmatprep.subr.bf16.mxu0 %v1364
    %1606 = vmatpush1.bf16.msra.mxu0 %v1363
    %1607 = vmatprep.subr.bf16.mxu0 %v1368
    %1608 = vmatpush1.bf16.msra.mxu0 %v1367
    %1609 = vmatprep.subr.bf16.mxu0 %v1372
    %1610 = vmatpush1.bf16.msra.mxu0 %v1371
    %1611 = vmatprep.subr.bf16.mxu0 %v1376
    %1612 = vmatpush1.bf16.msra.mxu0 %v1375
    %1613 = vmatprep.subr.bf16.mxu0 %v1380
    %1614 = vmatpush1.bf16.msra.mxu0 %v1379
    %1615 = vmatprep.subr.bf16.mxu0 %v1384
    %1616 = vmatpush1.bf16.msra.mxu0 %v1383
    %1617 = vmatprep.subr.bf16.mxu0 %v1388
    %1618 = vmatpush1.bf16.msra.mxu0 %v1387
    %1619 = vmatprep.subr.bf16.mxu0 %v1392
    %1620 = vmatpush1.bf16.msra.mxu0 %v1391
    %1621 = vmatprep.subr.bf16.mxu0 %v1396
    %1622 = vmatpush1.bf16.msra.mxu0 %v1395
    %1623 = vmatprep.mubr.bf16.mxu0 %v797
    %1624 = vmatmul.mubr.bf16.gmra.mrb[0].mxu0 %v796
    %v1625 = vpop.f32.mrb[0].mxu0
    %v1626 = vadd.f32 %v934, %v1625
    %v1627 = vpop.f32.mrb[0].mxu0
    %v1628 = vadd.f32 %v938, %v1627
    %v1629 = vpop.f32.mrb[0].mxu0
    %v1630 = vpop.f32.mrb[0].mxu0
    %1631 = vdwg.mxu0
    %1632 = vmatprep.subr.bf16.mxu0 %v1400
    %1633 = vmatpush1.bf16.msra.mxu0 %v1399
    %1634 = vmatprep.subr.bf16.mxu0 %v1404
    %1635 = vmatpush1.bf16.msra.mxu0 %v1403
    %1636 = vmatprep.subr.bf16.mxu0 %v1408
    %1637 = vmatpush1.bf16.msra.mxu0 %v1407
    %1638 = vmatprep.subr.bf16.mxu0 %v1412
    %1639 = vmatpush1.bf16.msra.mxu0 %v1411
    %1640 = vmatprep.subr.bf16.mxu0 %v1416
    %1641 = vmatpush1.bf16.msra.mxu0 %v1415
    %1642 = vmatprep.subr.bf16.mxu0 %v1420
    %1643 = vmatpush1.bf16.msra.mxu0 %v1419
    %1644 = vmatprep.subr.bf16.mxu0 %v1424
    %1645 = vmatpush1.bf16.msra.mxu0 %v1423
    %1646 = vmatprep.subr.bf16.mxu0 %v1428
    %1647 = vmatpush1.bf16.msra.mxu0 %v1427
    %1648 = vmatprep.subr.bf16.mxu0 %v1432
    %1649 = vmatpush1.bf16.msra.mxu0 %v1431
    %1650 = vmatprep.subr.bf16.mxu0 %v1436
    %1651 = vmatpush1.bf16.msra.mxu0 %v1435
    %1652 = vmatprep.subr.bf16.mxu0 %v1440
    %1653 = vmatpush1.bf16.msra.mxu0 %v1439
    %1654 = vmatprep.subr.bf16.mxu0 %v1444
    %1655 = vmatpush1.bf16.msra.mxu0 %v1443
    %1656 = vmatprep.subr.bf16.mxu0 %v1448
    %1657 = vmatpush1.bf16.msra.mxu0 %v1447
    %1658 = vmatprep.subr.bf16.mxu0 %v1452
    %1659 = vmatpush1.bf16.msra.mxu0 %v1451
    %1660 = vmatprep.subr.bf16.mxu0 %v1456
    %1661 = vmatpush1.bf16.msra.mxu0 %v1455
    %1662 = vmatprep.subr.bf16.mxu0 %v1460
    %1663 = vmatpush1.bf16.msra.mxu0 %v1459
    %1664 = vmatprep.mubr.bf16.mxu0 %v799
    %1665 = vmatmul.mubr.bf16.gmra.mrb[0].mxu0 %v798
    %v1666 = vpop.f32.mrb[0].mxu0
    %v1667 = vadd.f32 %v1626, %v1666
    %v1668 = vpop.f32.mrb[0].mxu0
    %v1669 = vadd.f32 %v1628, %v1668
    %v1670 = vpop.f32.mrb[0].mxu0
    %v1671 = vpop.f32.mrb[0].mxu0
    %1672 = vdwg.mxu0
    %1673 = vmatprep.subr.bf16.mxu0 %v1338
    %1674 = vmatpush1.bf16.msra.mxu0 %v1337
    %1675 = vmatprep.subr.bf16.mxu0 %v1342
    %1676 = vmatpush1.bf16.msra.mxu0 %v1341
    %1677 = vmatprep.subr.bf16.mxu0 %v1346
    %1678 = vmatpush1.bf16.msra.mxu0 %v1345
    %1679 = vmatprep.subr.bf16.mxu0 %v1350
    %1680 = vmatpush1.bf16.msra.mxu0 %v1349
    %1681 = vmatprep.subr.bf16.mxu0 %v1354
    %1682 = vmatpush1.bf16.msra.mxu0 %v1353
    %1683 = vmatprep.subr.bf16.mxu0 %v1358
    %1684 = vmatpush1.bf16.msra.mxu0 %v1357
    %1685 = vmatprep.subr.bf16.mxu0 %v1362
    %1686 = vmatpush1.bf16.msra.mxu0 %v1361
    %1687 = vmatprep.subr.bf16.mxu0 %v1366
    %1688 = vmatpush1.bf16.msra.mxu0 %v1365
    %1689 = vmatprep.subr.bf16.mxu0 %v1370
    %1690 = vmatpush1.bf16.msra.mxu0 %v1369
    %1691 = vmatprep.subr.bf16.mxu0 %v1374
    %1692 = vmatpush1.bf16.msra.mxu0 %v1373
    %1693 = vmatprep.subr.bf16.mxu0 %v1378
    %1694 = vmatpush1.bf16.msra.mxu0 %v1377
    %1695 = vmatprep.subr.bf16.mxu0 %v1382
    %1696 = vmatpush1.bf16.msra.mxu0 %v1381
    %1697 = vmatprep.subr.bf16.mxu0 %v1386
    %1698 = vmatpush1.bf16.msra.mxu0 %v1385
    %1699 = vmatprep.subr.bf16.mxu0 %v1390
    %1700 = vmatpush1.bf16.msra.mxu0 %v1389
    %1701 = vmatprep.subr.bf16.mxu0 %v1394
    %1702 = vmatpush1.bf16.msra.mxu0 %v1393
    %1703 = vmatprep.subr.bf16.mxu0 %v1398
    %1704 = vmatpush1.bf16.msra.mxu0 %v1397
    %1705 = vmatprep.mubr.bf16.mxu0 %v797
    %1706 = vmatmul.mubr.bf16.gmra.mrb[0].mxu0 %v796
    %v1707 = vpop.f32.mrb[0].mxu0
    %v1708 = vadd.f32 %v942, %v1707
    %v1709 = vpop.f32.mrb[0].mxu0
    %v1710 = vadd.f32 %v946, %v1709
    %v1711 = vpop.f32.mrb[0].mxu0
    %v1712 = vpop.f32.mrb[0].mxu0
    %1713 = vdwg.mxu0
    %1714 = vmatprep.subr.bf16.mxu0 %v1402
    %1715 = vmatpush1.bf16.msra.mxu0 %v1401
    %1716 = vmatprep.subr.bf16.mxu0 %v1406
    %1717 = vmatpush1.bf16.msra.mxu0 %v1405
    %1718 = vmatprep.subr.bf16.mxu0 %v1410
    %1719 = vmatpush1.bf16.msra.mxu0 %v1409
    %1720 = vmatprep.subr.bf16.mxu0 %v1414
    %1721 = vmatpush1.bf16.msra.mxu0 %v1413
    %1722 = vmatprep.subr.bf16.mxu0 %v1418
    %1723 = vmatpush1.bf16.msra.mxu0 %v1417
    %1724 = vmatprep.subr.bf16.mxu0 %v1422
    %1725 = vmatpush1.bf16.msra.mxu0 %v1421
    %1726 = vmatprep.subr.bf16.mxu0 %v1426
    %1727 = vmatpush1.bf16.msra.mxu0 %v1425
    %1728 = vmatprep.subr.bf16.mxu0 %v1430
    %1729 = vmatpush1.bf16.msra.mxu0 %v1429
    %1730 = vmatprep.subr.bf16.mxu0 %v1434
    %1731 = vmatpush1.bf16.msra.mxu0 %v1433
    %1732 = vmatprep.subr.bf16.mxu0 %v1438
    %1733 = vmatpush1.bf16.msra.mxu0 %v1437
    %1734 = vmatprep.subr.bf16.mxu0 %v1442
    %1735 = vmatpush1.bf16.msra.mxu0 %v1441
    %1736 = vmatprep.subr.bf16.mxu0 %v1446
    %1737 = vmatpush1.bf16.msra.mxu0 %v1445
    %1738 = vmatprep.subr.bf16.mxu0 %v1450
    %1739 = vmatpush1.bf16.msra.mxu0 %v1449
    %1740 = vmatprep.subr.bf16.mxu0 %v1454
    %1741 = vmatpush1.bf16.msra.mxu0 %v1453
    %1742 = vmatprep.subr.bf16.mxu0 %v1458
    %1743 = vmatpush1.bf16.msra.mxu0 %v1457
    %1744 = vmatprep.subr.bf16.mxu0 %v1462
    %1745 = vmatpush1.bf16.msra.mxu0 %v1461
    %1746 = vmatprep.mubr.bf16.mxu0 %v799
    %1747 = vmatmul.mubr.bf16.gmra.mrb[0].mxu0 %v798
    %v1748 = vpop.f32.mrb[0].mxu0
    %v1749 = vadd.f32 %v1708, %v1748
    %v1750 = vpop.f32.mrb[0].mxu0
    %v1751 = vadd.f32 %v1710, %v1750
    %v1752 = vpop.f32.mrb[0].mxu0
    %v1753 = vpop.f32.mrb[0].mxu0
    %1754 = vdwg.mxu0
    %v1755 = vmax.f32 %v1667, 0.0
    %v1756 = vmax.f32 %v1669, 0.0
    %v1757 = vmax.f32 %v1749, 0.0
    %v1758 = vmax.f32 %v1751, 0.0
    %v1759 = vpack.c.bf16 %v1755, %v1755
    %v1760 = vpack.c.bf16 %v1756, %v1756
    %v1761 = vpack.c.bf16 %v1757, %v1757
    %v1762 = vpack.c.bf16 %v1758, %v1758
    %v1763 = vld [vmem:[#allocation16] sm:$0xff]
    %v1764 = vld [vmem:[#allocation16 + $0x8] sm:$0xff]
    %v1765 = vld [vmem:[#allocation16 + $0x10] sm:$0xff]
    %v1766 = vld [vmem:[#allocation16 + $0x18] sm:$0xff]
    %v1767 = vld [vmem:[#allocation16 + $0x20] sm:$0xff]
    %v1768 = vld [vmem:[#allocation16 + $0x28] sm:$0xff]
    %v1769 = vld [vmem:[#allocation16 + $0x30] sm:$0xff]
    %v1770 = vld [vmem:[#allocation16 + $0x38] sm:$0xff]
    %v1771 = vld [vmem:[#allocation16 + $0x40] sm:$0xff]
    %v1772 = vld [vmem:[#allocation16 + $0x48] sm:$0xff]
    %v1773 = vld [vmem:[#allocation16 + $0x50] sm:$0xff]
    %v1774 = vld [vmem:[#allocation16 + $0x58] sm:$0xff]
    %v1775 = vld [vmem:[#allocation16 + $0x60] sm:$0xff]
    %v1776 = vld [vmem:[#allocation16 + $0x68] sm:$0xff]
    %v1777 = vld [vmem:[#allocation16 + $0x70] sm:$0xff]
    %v1778 = vld [vmem:[#allocation16 + $0x78] sm:$0xff]
    %v1779 = vld [vmem:[#allocation16 + $0x80] sm:$0xff]
    %v1780 = vld [vmem:[#allocation16 + $0x88] sm:$0xff]
    %v1781 = vld [vmem:[#allocation16 + $0x90] sm:$0xff]
    %v1782 = vld [vmem:[#allocation16 + $0x98] sm:$0xff]
    %v1783 = vld [vmem:[#allocation16 + $0xa0] sm:$0xff]
    %v1784 = vld [vmem:[#allocation16 + $0xa8] sm:$0xff]
    %v1785 = vld [vmem:[#allocation16 + $0xb0] sm:$0xff]
    %v1786 = vld [vmem:[#allocation16 + $0xb8] sm:$0xff]
    %v1787 = vld [vmem:[#allocation16 + $0xc0] sm:$0xff]
    %v1788 = vld [vmem:[#allocation16 + $0xc8] sm:$0xff]
    %v1789 = vld [vmem:[#allocation16 + $0xd0] sm:$0xff]
    %v1790 = vld [vmem:[#allocation16 + $0xd8] sm:$0xff]
    %v1791 = vld [vmem:[#allocation16 + $0xe0] sm:$0xff]
    %v1792 = vld [vmem:[#allocation16 + $0xe8] sm:$0xff]
    %v1793 = vld [vmem:[#allocation16 + $0xf0] sm:$0xff]
    %v1794 = vld [vmem:[#allocation16 + $0xf8] sm:$0xff]
    %v1795 = vld [vmem:[#allocation16 + $0x100] sm:$0xff]
    %v1796 = vld [vmem:[#allocation16 + $0x108] sm:$0xff]
    %v1797 = vld [vmem:[#allocation16 + $0x110] sm:$0xff]
    %v1798 = vld [vmem:[#allocation16 + $0x118] sm:$0xff]
    %v1799 = vld [vmem:[#allocation16 + $0x120] sm:$0xff]
    %v1800 = vld [vmem:[#allocation16 + $0x128] sm:$0xff]
    %v1801 = vld [vmem:[#allocation16 + $0x130] sm:$0xff]
    %v1802 = vld [vmem:[#allocation16 + $0x138] sm:$0xff]
    %v1803 = vld [vmem:[#allocation16 + $0x140] sm:$0xff]
    %v1804 = vld [vmem:[#allocation16 + $0x148] sm:$0xff]
    %v1805 = vld [vmem:[#allocation16 + $0x150] sm:$0xff]
    %v1806 = vld [vmem:[#allocation16 + $0x158] sm:$0xff]
    %v1807 = vld [vmem:[#allocation16 + $0x160] sm:$0xff]
    %v1808 = vld [vmem:[#allocation16 + $0x168] sm:$0xff]
    %v1809 = vld [vmem:[#allocation16 + $0x170] sm:$0xff]
    %v1810 = vld [vmem:[#allocation16 + $0x178] sm:$0xff]
    %v1811 = vld [vmem:[#allocation16 + $0x180] sm:$0xff]
    %v1812 = vld [vmem:[#allocation16 + $0x188] sm:$0xff]
    %v1813 = vld [vmem:[#allocation16 + $0x190] sm:$0xff]
    %v1814 = vld [vmem:[#allocation16 + $0x198] sm:$0xff]
    %v1815 = vld [vmem:[#allocation16 + $0x1a0] sm:$0xff]
    %v1816 = vld [vmem:[#allocation16 + $0x1a8] sm:$0xff]
    %v1817 = vld [vmem:[#allocation16 + $0x1b0] sm:$0xff]
    %v1818 = vld [vmem:[#allocation16 + $0x1b8] sm:$0xff]
    %v1819 = vld [vmem:[#allocation16 + $0x1c0] sm:$0xff]
    %v1820 = vld [vmem:[#allocation16 + $0x1c8] sm:$0xff]
    %v1821 = vld [vmem:[#allocation16 + $0x1d0] sm:$0xff]
    %v1822 = vld [vmem:[#allocation16 + $0x1d8] sm:$0xff]
    %v1823 = vld [vmem:[#allocation16 + $0x1e0] sm:$0xff]
    %v1824 = vld [vmem:[#allocation16 + $0x1e8] sm:$0xff]
    %v1825 = vld [vmem:[#allocation16 + $0x1f0] sm:$0xff]
    %v1826 = vld [vmem:[#allocation16 + $0x1f8] sm:$0xff]
    %v1827 = vld [vmem:[#allocation16 + $0x200] sm:$0xff]
    %v1828 = vld [vmem:[#allocation16 + $0x208] sm:$0xff]
    %v1829 = vld [vmem:[#allocation16 + $0x210] sm:$0xff]
    %v1830 = vld [vmem:[#allocation16 + $0x218] sm:$0xff]
    %v1831 = vld [vmem:[#allocation16 + $0x220] sm:$0xff]
    %v1832 = vld [vmem:[#allocation16 + $0x228] sm:$0xff]
    %v1833 = vld [vmem:[#allocation16 + $0x230] sm:$0xff]
    %v1834 = vld [vmem:[#allocation16 + $0x238] sm:$0xff]
    %v1835 = vld [vmem:[#allocation16 + $0x240] sm:$0xff]
    %v1836 = vld [vmem:[#allocation16 + $0x248] sm:$0xff]
    %v1837 = vld [vmem:[#allocation16 + $0x250] sm:$0xff]
    %v1838 = vld [vmem:[#allocation16 + $0x258] sm:$0xff]
    %v1839 = vld [vmem:[#allocation16 + $0x260] sm:$0xff]
    %v1840 = vld [vmem:[#allocation16 + $0x268] sm:$0xff]
    %v1841 = vld [vmem:[#allocation16 + $0x270] sm:$0xff]
    %v1842 = vld [vmem:[#allocation16 + $0x278] sm:$0xff]
    %v1843 = vld [vmem:[#allocation16 + $0x280] sm:$0xff]
    %v1844 = vld [vmem:[#allocation16 + $0x288] sm:$0xff]
    %v1845 = vld [vmem:[#allocation16 + $0x290] sm:$0xff]
    %v1846 = vld [vmem:[#allocation16 + $0x298] sm:$0xff]
    %v1847 = vld [vmem:[#allocation16 + $0x2a0] sm:$0xff]
    %v1848 = vld [vmem:[#allocation16 + $0x2a8] sm:$0xff]
    %v1849 = vld [vmem:[#allocation16 + $0x2b0] sm:$0xff]
    %v1850 = vld [vmem:[#allocation16 + $0x2b8] sm:$0xff]
    %v1851 = vld [vmem:[#allocation16 + $0x2c0] sm:$0xff]
    %v1852 = vld [vmem:[#allocation16 + $0x2c8] sm:$0xff]
    %v1853 = vld [vmem:[#allocation16 + $0x2d0] sm:$0xff]
    %v1854 = vld [vmem:[#allocation16 + $0x2d8] sm:$0xff]
    %v1855 = vld [vmem:[#allocation16 + $0x2e0] sm:$0xff]
    %v1856 = vld [vmem:[#allocation16 + $0x2e8] sm:$0xff]
    %v1857 = vld [vmem:[#allocation16 + $0x2f0] sm:$0xff]
    %v1858 = vld [vmem:[#allocation16 + $0x2f8] sm:$0xff]
    %v1859 = vld [vmem:[#allocation16 + $0x300] sm:$0xff]
    %v1860 = vld [vmem:[#allocation16 + $0x308] sm:$0xff]
    %v1861 = vld [vmem:[#allocation16 + $0x310] sm:$0xff]
    %v1862 = vld [vmem:[#allocation16 + $0x318] sm:$0xff]
    %v1863 = vld [vmem:[#allocation16 + $0x320] sm:$0xff]
    %v1864 = vld [vmem:[#allocation16 + $0x328] sm:$0xff]
    %v1865 = vld [vmem:[#allocation16 + $0x330] sm:$0xff]
    %v1866 = vld [vmem:[#allocation16 + $0x338] sm:$0xff]
    %v1867 = vld [vmem:[#allocation16 + $0x340] sm:$0xff]
    %v1868 = vld [vmem:[#allocation16 + $0x348] sm:$0xff]
    %v1869 = vld [vmem:[#allocation16 + $0x350] sm:$0xff]
    %v1870 = vld [vmem:[#allocation16 + $0x358] sm:$0xff]
    %v1871 = vld [vmem:[#allocation16 + $0x360] sm:$0xff]
    %v1872 = vld [vmem:[#allocation16 + $0x368] sm:$0xff]
    %v1873 = vld [vmem:[#allocation16 + $0x370] sm:$0xff]
    %v1874 = vld [vmem:[#allocation16 + $0x378] sm:$0xff]
    %v1875 = vld [vmem:[#allocation16 + $0x380] sm:$0xff]
    %v1876 = vld [vmem:[#allocation16 + $0x388] sm:$0xff]
    %v1877 = vld [vmem:[#allocation16 + $0x390] sm:$0xff]
    %v1878 = vld [vmem:[#allocation16 + $0x398] sm:$0xff]
    %v1879 = vld [vmem:[#allocation16 + $0x3a0] sm:$0xff]
    %v1880 = vld [vmem:[#allocation16 + $0x3a8] sm:$0xff]
    %v1881 = vld [vmem:[#allocation16 + $0x3b0] sm:$0xff]
    %v1882 = vld [vmem:[#allocation16 + $0x3b8] sm:$0xff]
    %v1883 = vld [vmem:[#allocation16 + $0x3c0] sm:$0xff]
    %v1884 = vld [vmem:[#allocation16 + $0x3c8] sm:$0xff]
    %v1885 = vld [vmem:[#allocation16 + $0x3d0] sm:$0xff]
    %v1886 = vld [vmem:[#allocation16 + $0x3d8] sm:$0xff]
    %v1887 = vld [vmem:[#allocation16 + $0x3e0] sm:$0xff]
    %v1888 = vld [vmem:[#allocation16 + $0x3e8] sm:$0xff]
    %v1889 = vld [vmem:[#allocation16 + $0x3f0] sm:$0xff]
    %v1890 = vld [vmem:[#allocation16 + $0x3f8] sm:$0xff]
    %s1891 = scalar_lea.vmem [#allocation7], 2
    %v1892 = vld [vmem:[%s1891] ss:$8 sm:$0xf]
    %v1894 = vlaneseq
    %v1895 = vshrl.u32 %v1894, 7
    %v1896 = vsub.s32 0, %v1895
    %v1897 = vrot.slane %v1892, %v1896
    %v1898 = vlaneseq
    %v1899 = vshrl.u32 %v1898, 7
    %v1900 = vsub.s32 1, %v1899
    %v1901 = vrot.slane %v1892, %v1900
    %v1902 = vlaneseq
    %v1903 = vshrl.u32 %v1902, 7
    %v1904 = vsub.s32 2, %v1903
    %v1905 = vrot.slane %v1892, %v1904
    %v1906 = vlaneseq
    %v1907 = vshrl.u32 %v1906, 7
    %v1908 = vsub.s32 3, %v1907
    %v1909 = vrot.slane %v1892, %v1908
    %v2042 = vunpack.c.l.b16 %v1763
    %v2043 = vunpack.c.h.b16 %v1763
    %v2044 = vunpack.c.l.b16 %v1764
    %v2045 = vunpack.c.h.b16 %v1764
    %v2046 = vunpack.c.l.b16 %v1765
    %v2047 = vunpack.c.h.b16 %v1765
    %v2048 = vunpack.c.l.b16 %v1766
    %v2049 = vunpack.c.h.b16 %v1766
    %v2050 = vunpack.c.l.b16 %v1767
    %v2051 = vunpack.c.h.b16 %v1767
    %v2052 = vunpack.c.l.b16 %v1768
    %v2053 = vunpack.c.h.b16 %v1768
    %v2054 = vunpack.c.l.b16 %v1769
    %v2055 = vunpack.c.h.b16 %v1769
    %v2056 = vunpack.c.l.b16 %v1770
    %v2057 = vunpack.c.h.b16 %v1770
    %v2058 = vunpack.c.l.b16 %v1771
    %v2059 = vunpack.c.h.b16 %v1771
    %v2060 = vunpack.c.l.b16 %v1772
    %v2061 = vunpack.c.h.b16 %v1772
    %v2062 = vunpack.c.l.b16 %v1773
    %v2063 = vunpack.c.h.b16 %v1773
    %v2064 = vunpack.c.l.b16 %v1774
    %v2065 = vunpack.c.h.b16 %v1774
    %v2066 = vunpack.c.l.b16 %v1775
    %v2067 = vunpack.c.h.b16 %v1775
    %v2068 = vunpack.c.l.b16 %v1776
    %v2069 = vunpack.c.h.b16 %v1776
    %v2070 = vunpack.c.l.b16 %v1777
    %v2071 = vunpack.c.h.b16 %v1777
    %v2072 = vunpack.c.l.b16 %v1778
    %v2073 = vunpack.c.h.b16 %v1778
    %v2074 = vunpack.c.l.b16 %v1779
    %v2075 = vunpack.c.h.b16 %v1779
    %v2076 = vunpack.c.l.b16 %v1780
    %v2077 = vunpack.c.h.b16 %v1780
    %v2078 = vunpack.c.l.b16 %v1781
    %v2079 = vunpack.c.h.b16 %v1781
    %v2080 = vunpack.c.l.b16 %v1782
    %v2081 = vunpack.c.h.b16 %v1782
    %v2082 = vunpack.c.l.b16 %v1783
    %v2083 = vunpack.c.h.b16 %v1783
    %v2084 = vunpack.c.l.b16 %v1784
    %v2085 = vunpack.c.h.b16 %v1784
    %v2086 = vunpack.c.l.b16 %v1785
    %v2087 = vunpack.c.h.b16 %v1785
    %v2088 = vunpack.c.l.b16 %v1786
    %v2089 = vunpack.c.h.b16 %v1786
    %v2090 = vunpack.c.l.b16 %v1787
    %v2091 = vunpack.c.h.b16 %v1787
    %v2092 = vunpack.c.l.b16 %v1788
    %v2093 = vunpack.c.h.b16 %v1788
    %v2094 = vunpack.c.l.b16 %v1789
    %v2095 = vunpack.c.h.b16 %v1789
    %v2096 = vunpack.c.l.b16 %v1790
    %v2097 = vunpack.c.h.b16 %v1790
    %v2098 = vunpack.c.l.b16 %v1791
    %v2099 = vunpack.c.h.b16 %v1791
    %v2100 = vunpack.c.l.b16 %v1792
    %v2101 = vunpack.c.h.b16 %v1792
    %v2102 = vunpack.c.l.b16 %v1793
    %v2103 = vunpack.c.h.b16 %v1793
    %v2104 = vunpack.c.l.b16 %v1794
    %v2105 = vunpack.c.h.b16 %v1794
    %v2106 = vunpack.c.l.b16 %v1795
    %v2107 = vunpack.c.h.b16 %v1795
    %v2108 = vunpack.c.l.b16 %v1796
    %v2109 = vunpack.c.h.b16 %v1796
    %v2110 = vunpack.c.l.b16 %v1797
    %v2111 = vunpack.c.h.b16 %v1797
    %v2112 = vunpack.c.l.b16 %v1798
    %v2113 = vunpack.c.h.b16 %v1798
    %v2114 = vunpack.c.l.b16 %v1799
    %v2115 = vunpack.c.h.b16 %v1799
    %v2116 = vunpack.c.l.b16 %v1800
    %v2117 = vunpack.c.h.b16 %v1800
    %v2118 = vunpack.c.l.b16 %v1801
    %v2119 = vunpack.c.h.b16 %v1801
    %v2120 = vunpack.c.l.b16 %v1802
    %v2121 = vunpack.c.h.b16 %v1802
    %v2122 = vunpack.c.l.b16 %v1803
    %v2123 = vunpack.c.h.b16 %v1803
    %v2124 = vunpack.c.l.b16 %v1804
    %v2125 = vunpack.c.h.b16 %v1804
    %v2126 = vunpack.c.l.b16 %v1805
    %v2127 = vunpack.c.h.b16 %v1805
    %v2128 = vunpack.c.l.b16 %v1806
    %v2129 = vunpack.c.h.b16 %v1806
    %v2130 = vunpack.c.l.b16 %v1807
    %v2131 = vunpack.c.h.b16 %v1807
    %v2132 = vunpack.c.l.b16 %v1808
    %v2133 = vunpack.c.h.b16 %v1808
    %v2134 = vunpack.c.l.b16 %v1809
    %v2135 = vunpack.c.h.b16 %v1809
    %v2136 = vunpack.c.l.b16 %v1810
    %v2137 = vunpack.c.h.b16 %v1810
    %v2138 = vunpack.c.l.b16 %v1811
    %v2139 = vunpack.c.h.b16 %v1811
    %v2140 = vunpack.c.l.b16 %v1812
    %v2141 = vunpack.c.h.b16 %v1812
    %v2142 = vunpack.c.l.b16 %v1813
    %v2143 = vunpack.c.h.b16 %v1813
    %v2144 = vunpack.c.l.b16 %v1814
    %v2145 = vunpack.c.h.b16 %v1814
    %v2146 = vunpack.c.l.b16 %v1815
    %v2147 = vunpack.c.h.b16 %v1815
    %v2148 = vunpack.c.l.b16 %v1816
    %v2149 = vunpack.c.h.b16 %v1816
    %v2150 = vunpack.c.l.b16 %v1817
    %v2151 = vunpack.c.h.b16 %v1817
    %v2152 = vunpack.c.l.b16 %v1818
    %v2153 = vunpack.c.h.b16 %v1818
    %v2154 = vunpack.c.l.b16 %v1819
    %v2155 = vunpack.c.h.b16 %v1819
    %v2156 = vunpack.c.l.b16 %v1820
    %v2157 = vunpack.c.h.b16 %v1820
    %v2158 = vunpack.c.l.b16 %v1821
    %v2159 = vunpack.c.h.b16 %v1821
    %v2160 = vunpack.c.l.b16 %v1822
    %v2161 = vunpack.c.h.b16 %v1822
    %v2162 = vunpack.c.l.b16 %v1823
    %v2163 = vunpack.c.h.b16 %v1823
    %v2164 = vunpack.c.l.b16 %v1824
    %v2165 = vunpack.c.h.b16 %v1824
    %v2166 = vunpack.c.l.b16 %v1825
    %v2167 = vunpack.c.h.b16 %v1825
    %v2168 = vunpack.c.l.b16 %v1826
    %v2169 = vunpack.c.h.b16 %v1826
    %v2170 = vunpack.c.l.b16 %v1827
    %v2171 = vunpack.c.h.b16 %v1827
    %v2172 = vunpack.c.l.b16 %v1828
    %v2173 = vunpack.c.h.b16 %v1828
    %v2174 = vunpack.c.l.b16 %v1829
    %v2175 = vunpack.c.h.b16 %v1829
    %v2176 = vunpack.c.l.b16 %v1830
    %v2177 = vunpack.c.h.b16 %v1830
    %v2178 = vunpack.c.l.b16 %v1831
    %v2179 = vunpack.c.h.b16 %v1831
    %v2180 = vunpack.c.l.b16 %v1832
    %v2181 = vunpack.c.h.b16 %v1832
    %v2182 = vunpack.c.l.b16 %v1833
    %v2183 = vunpack.c.h.b16 %v1833
    %v2184 = vunpack.c.l.b16 %v1834
    %v2185 = vunpack.c.h.b16 %v1834
    %v2186 = vunpack.c.l.b16 %v1835
    %v2187 = vunpack.c.h.b16 %v1835
    %v2188 = vunpack.c.l.b16 %v1836
    %v2189 = vunpack.c.h.b16 %v1836
    %v2190 = vunpack.c.l.b16 %v1837
    %v2191 = vunpack.c.h.b16 %v1837
    %v2192 = vunpack.c.l.b16 %v1838
    %v2193 = vunpack.c.h.b16 %v1838
    %v2194 = vunpack.c.l.b16 %v1839
    %v2195 = vunpack.c.h.b16 %v1839
    %v2196 = vunpack.c.l.b16 %v1840
    %v2197 = vunpack.c.h.b16 %v1840
    %v2198 = vunpack.c.l.b16 %v1841
    %v2199 = vunpack.c.h.b16 %v1841
    %v2200 = vunpack.c.l.b16 %v1842
    %v2201 = vunpack.c.h.b16 %v1842
    %v2202 = vunpack.c.l.b16 %v1843
    %v2203 = vunpack.c.h.b16 %v1843
    %v2204 = vunpack.c.l.b16 %v1844
    %v2205 = vunpack.c.h.b16 %v1844
    %v2206 = vunpack.c.l.b16 %v1845
    %v2207 = vunpack.c.h.b16 %v1845
    %v2208 = vunpack.c.l.b16 %v1846
    %v2209 = vunpack.c.h.b16 %v1846
    %v2210 = vunpack.c.l.b16 %v1847
    %v2211 = vunpack.c.h.b16 %v1847
    %v2212 = vunpack.c.l.b16 %v1848
    %v2213 = vunpack.c.h.b16 %v1848
    %v2214 = vunpack.c.l.b16 %v1849
    %v2215 = vunpack.c.h.b16 %v1849
    %v2216 = vunpack.c.l.b16 %v1850
    %v2217 = vunpack.c.h.b16 %v1850
    %v2218 = vunpack.c.l.b16 %v1851
    %v2219 = vunpack.c.h.b16 %v1851
    %v2220 = vunpack.c.l.b16 %v1852
    %v2221 = vunpack.c.h.b16 %v1852
    %v2222 = vunpack.c.l.b16 %v1853
    %v2223 = vunpack.c.h.b16 %v1853
    %v2224 = vunpack.c.l.b16 %v1854
    %v2225 = vunpack.c.h.b16 %v1854
    %v2226 = vunpack.c.l.b16 %v1855
    %v2227 = vunpack.c.h.b16 %v1855
    %v2228 = vunpack.c.l.b16 %v1856
    %v2229 = vunpack.c.h.b16 %v1856
    %v2230 = vunpack.c.l.b16 %v1857
    %v2231 = vunpack.c.h.b16 %v1857
    %v2232 = vunpack.c.l.b16 %v1858
    %v2233 = vunpack.c.h.b16 %v1858
    %v2234 = vunpack.c.l.b16 %v1859
    %v2235 = vunpack.c.h.b16 %v1859
    %v2236 = vunpack.c.l.b16 %v1860
    %v2237 = vunpack.c.h.b16 %v1860
    %v2238 = vunpack.c.l.b16 %v1861
    %v2239 = vunpack.c.h.b16 %v1861
    %v2240 = vunpack.c.l.b16 %v1862
    %v2241 = vunpack.c.h.b16 %v1862
    %v2242 = vunpack.c.l.b16 %v1863
    %v2243 = vunpack.c.h.b16 %v1863
    %v2244 = vunpack.c.l.b16 %v1864
    %v2245 = vunpack.c.h.b16 %v1864
    %v2246 = vunpack.c.l.b16 %v1865
    %v2247 = vunpack.c.h.b16 %v1865
    %v2248 = vunpack.c.l.b16 %v1866
    %v2249 = vunpack.c.h.b16 %v1866
    %v2250 = vunpack.c.l.b16 %v1867
    %v2251 = vunpack.c.h.b16 %v1867
    %v2252 = vunpack.c.l.b16 %v1868
    %v2253 = vunpack.c.h.b16 %v1868
    %v2254 = vunpack.c.l.b16 %v1869
    %v2255 = vunpack.c.h.b16 %v1869
    %v2256 = vunpack.c.l.b16 %v1870
    %v2257 = vunpack.c.h.b16 %v1870
    %v2258 = vunpack.c.l.b16 %v1871
    %v2259 = vunpack.c.h.b16 %v1871
    %v2260 = vunpack.c.l.b16 %v1872
    %v2261 = vunpack.c.h.b16 %v1872
    %v2262 = vunpack.c.l.b16 %v1873
    %v2263 = vunpack.c.h.b16 %v1873
    %v2264 = vunpack.c.l.b16 %v1874
    %v2265 = vunpack.c.h.b16 %v1874
    %v2266 = vunpack.c.l.b16 %v1875
    %v2267 = vunpack.c.h.b16 %v1875
    %v2268 = vunpack.c.l.b16 %v1876
    %v2269 = vunpack.c.h.b16 %v1876
    %v2270 = vunpack.c.l.b16 %v1877
    %v2271 = vunpack.c.h.b16 %v1877
    %v2272 = vunpack.c.l.b16 %v1878
    %v2273 = vunpack.c.h.b16 %v1878
    %v2274 = vunpack.c.l.b16 %v1879
    %v2275 = vunpack.c.h.b16 %v1879
    %v2276 = vunpack.c.l.b16 %v1880
    %v2277 = vunpack.c.h.b16 %v1880
    %v2278 = vunpack.c.l.b16 %v1881
    %v2279 = vunpack.c.h.b16 %v1881
    %v2280 = vunpack.c.l.b16 %v1882
    %v2281 = vunpack.c.h.b16 %v1882
    %v2282 = vunpack.c.l.b16 %v1883
    %v2283 = vunpack.c.h.b16 %v1883
    %v2284 = vunpack.c.l.b16 %v1884
    %v2285 = vunpack.c.h.b16 %v1884
    %v2286 = vunpack.c.l.b16 %v1885
    %v2287 = vunpack.c.h.b16 %v1885
    %v2288 = vunpack.c.l.b16 %v1886
    %v2289 = vunpack.c.h.b16 %v1886
    %v2290 = vunpack.c.l.b16 %v1887
    %v2291 = vunpack.c.h.b16 %v1887
    %v2292 = vunpack.c.l.b16 %v1888
    %v2293 = vunpack.c.h.b16 %v1888
    %v2294 = vunpack.c.l.b16 %v1889
    %v2295 = vunpack.c.h.b16 %v1889
    %v2296 = vunpack.c.l.b16 %v1890
    %v2297 = vunpack.c.h.b16 %v1890
    %v2298 = vpack.c.b16 %v2046, %v2042
    %v2299 = vpack.c.b16 %v2047, %v2043
    %v2300 = vpack.c.b16 %v2048, %v2044
    %v2301 = vpack.c.b16 %v2049, %v2045
    %v2302 = vpack.c.b16 %v2054, %v2050
    %v2303 = vpack.c.b16 %v2055, %v2051
    %v2304 = vpack.c.b16 %v2056, %v2052
    %v2305 = vpack.c.b16 %v2057, %v2053
    %v2306 = vpack.c.b16 %v2062, %v2058
    %v2307 = vpack.c.b16 %v2063, %v2059
    %v2308 = vpack.c.b16 %v2064, %v2060
    %v2309 = vpack.c.b16 %v2065, %v2061
    %v2310 = vpack.c.b16 %v2070, %v2066
    %v2311 = vpack.c.b16 %v2071, %v2067
    %v2312 = vpack.c.b16 %v2072, %v2068
    %v2313 = vpack.c.b16 %v2073, %v2069
    %v2314 = vpack.c.b16 %v2078, %v2074
    %v2315 = vpack.c.b16 %v2079, %v2075
    %v2316 = vpack.c.b16 %v2080, %v2076
    %v2317 = vpack.c.b16 %v2081, %v2077
    %v2318 = vpack.c.b16 %v2086, %v2082
    %v2319 = vpack.c.b16 %v2087, %v2083
    %v2320 = vpack.c.b16 %v2088, %v2084
    %v2321 = vpack.c.b16 %v2089, %v2085
    %v2322 = vpack.c.b16 %v2094, %v2090
    %v2323 = vpack.c.b16 %v2095, %v2091
    %v2324 = vpack.c.b16 %v2096, %v2092
    %v2325 = vpack.c.b16 %v2097, %v2093
    %v2326 = vpack.c.b16 %v2102, %v2098
    %v2327 = vpack.c.b16 %v2103, %v2099
    %v2328 = vpack.c.b16 %v2104, %v2100
    %v2329 = vpack.c.b16 %v2105, %v2101
    %v2330 = vpack.c.b16 %v2110, %v2106
    %v2331 = vpack.c.b16 %v2111, %v2107
    %v2332 = vpack.c.b16 %v2112, %v2108
    %v2333 = vpack.c.b16 %v2113, %v2109
    %v2334 = vpack.c.b16 %v2118, %v2114
    %v2335 = vpack.c.b16 %v2119, %v2115
    %v2336 = vpack.c.b16 %v2120, %v2116
    %v2337 = vpack.c.b16 %v2121, %v2117
    %v2338 = vpack.c.b16 %v2126, %v2122
    %v2339 = vpack.c.b16 %v2127, %v2123
    %v2340 = vpack.c.b16 %v2128, %v2124
    %v2341 = vpack.c.b16 %v2129, %v2125
    %v2342 = vpack.c.b16 %v2134, %v2130
    %v2343 = vpack.c.b16 %v2135, %v2131
    %v2344 = vpack.c.b16 %v2136, %v2132
    %v2345 = vpack.c.b16 %v2137, %v2133
    %v2346 = vpack.c.b16 %v2142, %v2138
    %v2347 = vpack.c.b16 %v2143, %v2139
    %v2348 = vpack.c.b16 %v2144, %v2140
    %v2349 = vpack.c.b16 %v2145, %v2141
    %v2350 = vpack.c.b16 %v2150, %v2146
    %v2351 = vpack.c.b16 %v2151, %v2147
    %v2352 = vpack.c.b16 %v2152, %v2148
    %v2353 = vpack.c.b16 %v2153, %v2149
    %v2354 = vpack.c.b16 %v2158, %v2154
    %v2355 = vpack.c.b16 %v2159, %v2155
    %v2356 = vpack.c.b16 %v2160, %v2156
    %v2357 = vpack.c.b16 %v2161, %v2157
    %v2358 = vpack.c.b16 %v2166, %v2162
    %v2359 = vpack.c.b16 %v2167, %v2163
    %v2360 = vpack.c.b16 %v2168, %v2164
    %v2361 = vpack.c.b16 %v2169, %v2165
    %v2362 = vpack.c.b16 %v2174, %v2170
    %v2363 = vpack.c.b16 %v2175, %v2171
    %v2364 = vpack.c.b16 %v2176, %v2172
    %v2365 = vpack.c.b16 %v2177, %v2173
    %v2366 = vpack.c.b16 %v2182, %v2178
    %v2367 = vpack.c.b16 %v2183, %v2179
    %v2368 = vpack.c.b16 %v2184, %v2180
    %v2369 = vpack.c.b16 %v2185, %v2181
    %v2370 = vpack.c.b16 %v2190, %v2186
    %v2371 = vpack.c.b16 %v2191, %v2187
    %v2372 = vpack.c.b16 %v2192, %v2188
    %v2373 = vpack.c.b16 %v2193, %v2189
    %v2374 = vpack.c.b16 %v2198, %v2194
    %v2375 = vpack.c.b16 %v2199, %v2195
    %v2376 = vpack.c.b16 %v2200, %v2196
    %v2377 = vpack.c.b16 %v2201, %v2197
    %v2378 = vpack.c.b16 %v2206, %v2202
    %v2379 = vpack.c.b16 %v2207, %v2203
    %v2380 = vpack.c.b16 %v2208, %v2204
    %v2381 = vpack.c.b16 %v2209, %v2205
    %v2382 = vpack.c.b16 %v2214, %v2210
    %v2383 = vpack.c.b16 %v2215, %v2211
    %v2384 = vpack.c.b16 %v2216, %v2212
    %v2385 = vpack.c.b16 %v2217, %v2213
    %v2386 = vpack.c.b16 %v2222, %v2218
    %v2387 = vpack.c.b16 %v2223, %v2219
    %v2388 = vpack.c.b16 %v2224, %v2220
    %v2389 = vpack.c.b16 %v2225, %v2221
    %v2390 = vpack.c.b16 %v2230, %v2226
    %v2391 = vpack.c.b16 %v2231, %v2227
    %v2392 = vpack.c.b16 %v2232, %v2228
    %v2393 = vpack.c.b16 %v2233, %v2229
    %v2394 = vpack.c.b16 %v2238, %v2234
    %v2395 = vpack.c.b16 %v2239, %v2235
    %v2396 = vpack.c.b16 %v2240, %v2236
    %v2397 = vpack.c.b16 %v2241, %v2237
    %v2398 = vpack.c.b16 %v2246, %v2242
    %v2399 = vpack.c.b16 %v2247, %v2243
    %v2400 = vpack.c.b16 %v2248, %v2244
    %v2401 = vpack.c.b16 %v2249, %v2245
    %v2402 = vpack.c.b16 %v2254, %v2250
    %v2403 = vpack.c.b16 %v2255, %v2251
    %v2404 = vpack.c.b16 %v2256, %v2252
    %v2405 = vpack.c.b16 %v2257, %v2253
    %v2406 = vpack.c.b16 %v2262, %v2258
    %v2407 = vpack.c.b16 %v2263, %v2259
    %v2408 = vpack.c.b16 %v2264, %v2260
    %v2409 = vpack.c.b16 %v2265, %v2261
    %v2410 = vpack.c.b16 %v2270, %v2266
    %v2411 = vpack.c.b16 %v2271, %v2267
    %v2412 = vpack.c.b16 %v2272, %v2268
    %v2413 = vpack.c.b16 %v2273, %v2269
    %v2414 = vpack.c.b16 %v2278, %v2274
    %v2415 = vpack.c.b16 %v2279, %v2275
    %v2416 = vpack.c.b16 %v2280, %v2276
    %v2417 = vpack.c.b16 %v2281, %v2277
    %v2418 = vpack.c.b16 %v2286, %v2282
    %v2419 = vpack.c.b16 %v2287, %v2283
    %v2420 = vpack.c.b16 %v2288, %v2284
    %v2421 = vpack.c.b16 %v2289, %v2285
    %v2422 = vpack.c.b16 %v2294, %v2290
    %v2423 = vpack.c.b16 %v2295, %v2291
    %v2424 = vpack.c.b16 %v2296, %v2292
    %v2425 = vpack.c.b16 %v2297, %v2293
    %2554 = vmatprep.subr.bf16.mxu0 %v2299
    %2555 = vmatpush1.bf16.msra.mxu0 %v2298
    %2556 = vmatprep.subr.bf16.mxu0 %v2303
    %2557 = vmatpush1.bf16.msra.mxu0 %v2302
    %2558 = vmatprep.subr.bf16.mxu0 %v2307
    %2559 = vmatpush1.bf16.msra.mxu0 %v2306
    %2560 = vmatprep.subr.bf16.mxu0 %v2311
    %2561 = vmatpush1.bf16.msra.mxu0 %v2310
    %2562 = vmatprep.subr.bf16.mxu0 %v2315
    %2563 = vmatpush1.bf16.msra.mxu0 %v2314
    %2564 = vmatprep.subr.bf16.mxu0 %v2319
    %2565 = vmatpush1.bf16.msra.mxu0 %v2318
    %2566 = vmatprep.subr.bf16.mxu0 %v2323
    %2567 = vmatpush1.bf16.msra.mxu0 %v2322
    %2568 = vmatprep.subr.bf16.mxu0 %v2327
    %2569 = vmatpush1.bf16.msra.mxu0 %v2326
    %2570 = vmatprep.subr.bf16.mxu0 %v2331
    %2571 = vmatpush1.bf16.msra.mxu0 %v2330
    %2572 = vmatprep.subr.bf16.mxu0 %v2335
    %2573 = vmatpush1.bf16.msra.mxu0 %v2334
    %2574 = vmatprep.subr.bf16.mxu0 %v2339
    %2575 = vmatpush1.bf16.msra.mxu0 %v2338
    %2576 = vmatprep.subr.bf16.mxu0 %v2343
    %2577 = vmatpush1.bf16.msra.mxu0 %v2342
    %2578 = vmatprep.subr.bf16.mxu0 %v2347
    %2579 = vmatpush1.bf16.msra.mxu0 %v2346
    %2580 = vmatprep.subr.bf16.mxu0 %v2351
    %2581 = vmatpush1.bf16.msra.mxu0 %v2350
    %2582 = vmatprep.subr.bf16.mxu0 %v2355
    %2583 = vmatpush1.bf16.msra.mxu0 %v2354
    %2584 = vmatprep.subr.bf16.mxu0 %v2359
    %2585 = vmatpush1.bf16.msra.mxu0 %v2358
    %2586 = vmatprep.mubr.bf16.mxu0 %v1760
    %2587 = vmatmul.mubr.bf16.gmra.mrb[0].mxu0 %v1759
    %v2588 = vpop.f32.mrb[0].mxu0
    %v2589 = vadd.f32 %v1897, %v2588
    %v2590 = vpop.f32.mrb[0].mxu0
    %v2591 = vadd.f32 %v1901, %v2590
    %v2592 = vpop.f32.mrb[0].mxu0
    %v2593 = vpop.f32.mrb[0].mxu0
    %2594 = vdwg.mxu0
    %2595 = vmatprep.subr.bf16.mxu0 %v2363
    %2596 = vmatpush1.bf16.msra.mxu0 %v2362
    %2597 = vmatprep.subr.bf16.mxu0 %v2367
    %2598 = vmatpush1.bf16.msra.mxu0 %v2366
    %2599 = vmatprep.subr.bf16.mxu0 %v2371
    %2600 = vmatpush1.bf16.msra.mxu0 %v2370
    %2601 = vmatprep.subr.bf16.mxu0 %v2375
    %2602 = vmatpush1.bf16.msra.mxu0 %v2374
    %2603 = vmatprep.subr.bf16.mxu0 %v2379
    %2604 = vmatpush1.bf16.msra.mxu0 %v2378
    %2605 = vmatprep.subr.bf16.mxu0 %v2383
    %2606 = vmatpush1.bf16.msra.mxu0 %v2382
    %2607 = vmatprep.subr.bf16.mxu0 %v2387
    %2608 = vmatpush1.bf16.msra.mxu0 %v2386
    %2609 = vmatprep.subr.bf16.mxu0 %v2391
    %2610 = vmatpush1.bf16.msra.mxu0 %v2390
    %2611 = vmatprep.subr.bf16.mxu0 %v2395
    %2612 = vmatpush1.bf16.msra.mxu0 %v2394
    %2613 = vmatprep.subr.bf16.mxu0 %v2399
    %2614 = vmatpush1.bf16.msra.mxu0 %v2398
    %2615 = vmatprep.subr.bf16.mxu0 %v2403
    %2616 = vmatpush1.bf16.msra.mxu0 %v2402
    %2617 = vmatprep.subr.bf16.mxu0 %v2407
    %2618 = vmatpush1.bf16.msra.mxu0 %v2406
    %2619 = vmatprep.subr.bf16.mxu0 %v2411
    %2620 = vmatpush1.bf16.msra.mxu0 %v2410
    %2621 = vmatprep.subr.bf16.mxu0 %v2415
    %2622 = vmatpush1.bf16.msra.mxu0 %v2414
    %2623 = vmatprep.subr.bf16.mxu0 %v2419
    %2624 = vmatpush1.bf16.msra.mxu0 %v2418
    %2625 = vmatprep.subr.bf16.mxu0 %v2423
    %2626 = vmatpush1.bf16.msra.mxu0 %v2422
    %2627 = vmatprep.mubr.bf16.mxu0 %v1762
    %2628 = vmatmul.mubr.bf16.gmra.mrb[0].mxu0 %v1761
    %v2629 = vpop.f32.mrb[0].mxu0
    %v2630 = vadd.f32 %v2589, %v2629
    %v2631 = vpop.f32.mrb[0].mxu0
    %v2632 = vadd.f32 %v2591, %v2631
    %v2633 = vpop.f32.mrb[0].mxu0
    %v2634 = vpop.f32.mrb[0].mxu0
    %2635 = vdwg.mxu0
    %2636 = vmatprep.subr.bf16.mxu0 %v2301
    %2637 = vmatpush1.bf16.msra.mxu0 %v2300
    %2638 = vmatprep.subr.bf16.mxu0 %v2305
    %2639 = vmatpush1.bf16.msra.mxu0 %v2304
    %2640 = vmatprep.subr.bf16.mxu0 %v2309
    %2641 = vmatpush1.bf16.msra.mxu0 %v2308
    %2642 = vmatprep.subr.bf16.mxu0 %v2313
    %2643 = vmatpush1.bf16.msra.mxu0 %v2312
    %2644 = vmatprep.subr.bf16.mxu0 %v2317
    %2645 = vmatpush1.bf16.msra.mxu0 %v2316
    %2646 = vmatprep.subr.bf16.mxu0 %v2321
    %2647 = vmatpush1.bf16.msra.mxu0 %v2320
    %2648 = vmatprep.subr.bf16.mxu0 %v2325
    %2649 = vmatpush1.bf16.msra.mxu0 %v2324
    %2650 = vmatprep.subr.bf16.mxu0 %v2329
    %2651 = vmatpush1.bf16.msra.mxu0 %v2328
    %2652 = vmatprep.subr.bf16.mxu0 %v2333
    %2653 = vmatpush1.bf16.msra.mxu0 %v2332
    %2654 = vmatprep.subr.bf16.mxu0 %v2337
    %2655 = vmatpush1.bf16.msra.mxu0 %v2336
    %2656 = vmatprep.subr.bf16.mxu0 %v2341
    %2657 = vmatpush1.bf16.msra.mxu0 %v2340
    %2658 = vmatprep.subr.bf16.mxu0 %v2345
    %2659 = vmatpush1.bf16.msra.mxu0 %v2344
    %2660 = vmatprep.subr.bf16.mxu0 %v2349
    %2661 = vmatpush1.bf16.msra.mxu0 %v2348
    %2662 = vmatprep.subr.bf16.mxu0 %v2353
    %2663 = vmatpush1.bf16.msra.mxu0 %v2352
    %2664 = vmatprep.subr.bf16.mxu0 %v2357
    %2665 = vmatpush1.bf16.msra.mxu0 %v2356
    %2666 = vmatprep.subr.bf16.mxu0 %v2361
    %2667 = vmatpush1.bf16.msra.mxu0 %v2360
    %2668 = vmatprep.mubr.bf16.mxu0 %v1760
    %2669 = vmatmul.mubr.bf16.gmra.mrb[0].mxu0 %v1759
    %v2670 = vpop.f32.mrb[0].mxu0
    %v2671 = vadd.f32 %v1905, %v2670
    %v2672 = vpop.f32.mrb[0].mxu0
    %v2673 = vadd.f32 %v1909, %v2672
    %v2674 = vpop.f32.mrb[0].mxu0
    %v2675 = vpop.f32.mrb[0].mxu0
    %2676 = vdwg.mxu0
    %2677 = vmatprep.subr.bf16.mxu0 %v2365
    %2678 = vmatpush1.bf16.msra.mxu0 %v2364
    %2679 = vmatprep.subr.bf16.mxu0 %v2369
    %2680 = vmatpush1.bf16.msra.mxu0 %v2368
    %2681 = vmatprep.subr.bf16.mxu0 %v2373
    %2682 = vmatpush1.bf16.msra.mxu0 %v2372
    %2683 = vmatprep.subr.bf16.mxu0 %v2377
    %2684 = vmatpush1.bf16.msra.mxu0 %v2376
    %2685 = vmatprep.subr.bf16.mxu0 %v2381
    %2686 = vmatpush1.bf16.msra.mxu0 %v2380
    %2687 = vmatprep.subr.bf16.mxu0 %v2385
    %2688 = vmatpush1.bf16.msra.mxu0 %v2384
    %2689 = vmatprep.subr.bf16.mxu0 %v2389
    %2690 = vmatpush1.bf16.msra.mxu0 %v2388
    %2691 = vmatprep.subr.bf16.mxu0 %v2393
    %2692 = vmatpush1.bf16.msra.mxu0 %v2392
    %2693 = vmatprep.subr.bf16.mxu0 %v2397
    %2694 = vmatpush1.bf16.msra.mxu0 %v2396
    %2695 = vmatprep.subr.bf16.mxu0 %v2401
    %2696 = vmatpush1.bf16.msra.mxu0 %v2400
    %2697 = vmatprep.subr.bf16.mxu0 %v2405
    %2698 = vmatpush1.bf16.msra.mxu0 %v2404
    %2699 = vmatprep.subr.bf16.mxu0 %v2409
    %2700 = vmatpush1.bf16.msra.mxu0 %v2408
    %2701 = vmatprep.subr.bf16.mxu0 %v2413
    %2702 = vmatpush1.bf16.msra.mxu0 %v2412
    %2703 = vmatprep.subr.bf16.mxu0 %v2417
    %2704 = vmatpush1.bf16.msra.mxu0 %v2416
    %2705 = vmatprep.subr.bf16.mxu0 %v2421
    %2706 = vmatpush1.bf16.msra.mxu0 %v2420
    %2707 = vmatprep.subr.bf16.mxu0 %v2425
    %2708 = vmatpush1.bf16.msra.mxu0 %v2424
    %2709 = vmatprep.mubr.bf16.mxu0 %v1762
    %2710 = vmatmul.mubr.bf16.gmra.mrb[0].mxu0 %v1761
    %v2711 = vpop.f32.mrb[0].mxu0
    %v2712 = vadd.f32 %v2671, %v2711
    %v2713 = vpop.f32.mrb[0].mxu0
    %v2714 = vadd.f32 %v2673, %v2713
    %v2715 = vpop.f32.mrb[0].mxu0
    %v2716 = vpop.f32.mrb[0].mxu0
    %2717 = vdwg.mxu0
    %v2718 = vmax.f32 %v2630, 0.0
    %v2719 = vmax.f32 %v2632, 0.0
    %v2720 = vmax.f32 %v2712, 0.0
    %v2721 = vmax.f32 %v2714, 0.0
    %v2726 = vcombine.low %v2718, %v2719
    %v2727 = vcombine.low %v2720, %v2721
    %v2729 = vunpack.c.l.s4 1983009808
    %v2730 = vunpack.c.0.s8 %v2729
    %v2731 = vlaneseq
    %v2732 = vshrl.u32 %v2731, 7
    %v2733 = vsub.s32 %v2730, %v2732
    %v2734 = vrot.slane %v2726, %v2733
    %v2736 = vunpack.c.l.s4 1983009808
    %v2737 = vunpack.c.0.s8 %v2736
    %v2738 = vlaneseq
    %v2739 = vshrl.u32 %v2738, 7
    %v2740 = vsub.s32 %v2737, %v2739
    %v2741 = vrot.slane %v2727, %v2740
    %v2742 = vcombine.low %v2734, %v2741
    %2744 = vst [vmem:[#allocation17] sm:$0xff] %v2742
    // Predicated region
    $region74: #{tpu_custom_call.1} parent=1 // pred_check
      _
    $region75: #{tpu_custom_call.1} parent=1 // pred_check_branch
      %2746 = sbr.rel (0) target = $region77
    $region76: #{tpu_custom_call.1} parent=1 // pred_region
      %s2748 = ssub.s32 128, 128
      %2749 = vsyncadd [#allocation4], %s2748
      %s2751 = sshll.u32 [#allocation17], 4
      %s2752 = int_to_ptr.vmem [resolvable:$true] %s2751
      %2754 = dma.vmem_to_hbm [thread:$0]  %s2752, 128, %s9, [#allocation4]
    $region77: #{tpu_custom_call.1} parent=1 // pred_fallthru
      _
    // Predicated region
    $region78: #{tpu_custom_call.1} parent=1 // pred_check
      _
    $region79: #{tpu_custom_call.1} parent=1 // pred_check_branch
      %2756 = sbr.rel (0) target = $region81
    $region80: #{tpu_custom_call.1} parent=1 // pred_region
      %2757 = dma.done [#allocation4], 128
    $region81: #{tpu_custom_call.1} parent=1 // pred_fallthru
      _
    %2758 = vsyncpa [#allocation3], 1
    %2759 = vsyncpa [#allocation6], 1
    %2760 = vsyncpa [#allocation9], 1
    %2761 = vsyncpa [#allocation12], 1
    %2762 = vsyncpa [#allocation15], 1
    %2763 = vsyncpa [#allocation4], 1

</llo_original>
